<compile_context>
chip_gen: v7x
topology: tpu7x:2x2x1
jax: 0.10.0
libtpu: 0.0.40
codegen_flags: <defaults>
</compile_context>

<pallas_src>
import numpy as np

import jax
import jax.numpy as jnp
from jax import lax
from jax.experimental import pallas as pl
from jax.experimental.pallas import tpu as pltpu

# ----------------------------------------------------------------------------
# Static sizes
# ----------------------------------------------------------------------------
_HP = 14                 # pooled spatial size (28 / 2)
_KW = 6 * 32             # conv GEMM K: 6 row-shift slabs x 32 padded columns = 192
_F = _HP * 20            # per-row pooled features: 14 (w') * 20 (c) = 280
_NO = 16                 # FC output dim padded 10 -> 16 sublanes


def _build_toeplitz_selector():
    # S[p, s, w_in, dy, dx, w'] = 1  iff  s == ph + dy  and  w_in == 2*w' + pw + dx,
    # where p = 2*ph + pw enumerates the four 2x2 max-pool taps.
    S = np.zeros((4, 6, 32, 5, 5, _HP), dtype=np.float32)
    for ph in range(2):
        for pw in range(2):
            p = 2 * ph + pw
            for dy in range(5):
                for dx in range(5):
                    for wp in range(_HP):
                        S[p, ph + dy, 2 * wp + pw + dx, dy, dx, wp] = 1.0
    return S


_TSEL = _build_toeplitz_selector()      # static numpy constant, folded into the jit


def _pick_tb(n):
    # Largest batch tile such that the grid still has >= 2 steps when the batch allows
    # (v7x has 2 TensorCores). TB=128 gives 14*128 = 1792 GEMM rows (multiple of 256).
    for tb in (128, 64, 32, 16, 8):
        if n >= 2 * tb:
            return tb
    return 8


# ----------------------------------------------------------------------------
# Fused kernel: conv (4 Toeplitz GEMMs) + bias + ReLU + 2x2 max-pool + FC + log_softmax
#   xs_ref : (14*tb, 192) bf16   rows = (h', n),  cols = (row-shift s) x (w_in)
#   tw_ref : (4, 192, 280) bf16  one Toeplitz conv weight per pool tap p = 2*ph + pw
#   cb_ref : (1, 280) f32        conv bias tiled over w'
#   fw_ref : (14, 16, 280) f32   FC weight regrouped to (h', out_padded, (w', c))
#   fb_ref : (1, 16) f32
#   o_ref  : (tb, 10) f32
# ----------------------------------------------------------------------------
def _make_kernel(tb):
    def fused_kernel(xs_ref, tw_ref, cb_ref, fw_ref, fb_ref, o_ref):
        x = xs_ref[...]                                            # (rows, 192) bf16

        # Conv as four Toeplitz GEMMs, one per 2x2 pool tap; the elementwise max over
        # taps IS the max-pool.  Incremental max keeps a single (rows, 280) f32 live.
        acc = jnp.dot(x, tw_ref[0], preferred_element_type=jnp.float32)
        for p in range(1, 4):
            acc = jnp.maximum(
                acc, jnp.dot(x, tw_ref[p], preferred_element_type=jnp.float32))

        # Bias is identical across the four taps and ReLU is monotone, so
        # max-then-bias-then-relu == pool(relu(conv + bias)).
        pooled = jnp.maximum(acc + cb_ref[...], 0.0)               # (rows, 280)

        # FC: rows are (h', n) -> leading-dims-only reshape, one batched dot_general
        # over h' (contraction on the 280 lane dim of both operands), then sum over h'.
        pooled3 = pooled.reshape(_HP, tb, _F)                      # (14, tb, 280)
        fc = lax.dot_general(
            pooled3, fw_ref[...],
            dimension_numbers=(((2,), (2,)), ((0,), (0,))),
            preferred_element_type=jnp.float32)                    # (14, tb, 16)
        logits = jnp.sum(fc, axis=0) + fb_ref[...]                 # (tb, 16)

        # log_softmax over the 10 real classes (columns 10..15 are padding).
        z = logits[:, :10]
        z = z - jnp.max(z, axis=-1, keepdims=True)
        o_ref[...] = z - jnp.log(jnp.sum(jnp.exp(z), axis=-1, keepdims=True))

    return fused_kernel


# ----------------------------------------------------------------------------
# Full forward pass (layout/weight prep in JAX glue, all compute in one pallas_call)
# ----------------------------------------------------------------------------
@jax.jit
def one_conv_downsample(x, conv_w, conv_b, fc_w, fc_b):
    # x: (N, 1, 28, 28) float32 (NCHW, as in PyTorch)
    N = x.shape[0]
    tb = _pick_tb(N)
    rows = _HP * tb
    n_tiles = -(-N // tb)
    Np = n_tiles * tb

    # ---- input slabs --------------------------------------------------------
    # Pad batch to a tile multiple and spatial dims by 2 (the conv's padding=2); bf16.
    xpad = jnp.pad(x[:, 0], ((0, Np - N), (2, 2), (2, 2))).astype(jnp.bfloat16)  # (Np,32,32)
    # Row-shift slabs: slabs[n, h', s, w] = xpad[n, 2*h' + s, w],  s in [0, 6).
    slabs = jnp.stack([xpad[:, s:s + 28:2, :] for s in range(6)], axis=2)        # (Np,14,6,32)
    # GEMM rows ordered (tile, h', n_local) so the kernel-side reshapes touch leading
    # dims only (tb is a multiple of 8 sublanes).
    xs = (slabs.reshape(n_tiles, tb, _HP, 6, 32)
               .transpose(0, 2, 1, 3, 4)
               .reshape(n_tiles * rows, _KW))                                    # (n_tiles*rows, 192)

    # ---- weights ------------------------------------------------------------
    # Toeplitz conv weight, one K=192 slab per pool tap p = 2*ph + pw:
    #   tw[p, 32*s + w_in, 20*w' + c] = conv_w[c, 0, s-ph, w_in-2*w'-pw]   (0 elsewhere)
    cw = conv_w.reshape(20, 5, 5)
    tw = jnp.einsum('psiyxw,cyx->psiwc', jnp.asarray(_TSEL), cw)     # (4, 6, 32, 14, 20)
    tw = tw.reshape(4, _KW, _F).astype(jnp.bfloat16)                 # (4, 192, 280)

    cb = jnp.tile(conv_b, _HP).reshape(1, _F)                        # (1, 280): 20*w'+c -> b[c]

    # FC weight: PyTorch flatten index is c*196 + h'*14 + w'; regroup to (h', out, (w',c))
    # with out padded 10 -> 16 so the 280-long contraction sits on the lane dim.
    fw = (fc_w.reshape(10, 20, _HP, _HP)
              .transpose(2, 0, 3, 1)                                 # (h', o, w', c)
              .reshape(_HP, 10, _F))
    fw = jnp.pad(fw, ((0, 0), (0, _NO - 10), (0, 0)))                # (14, 16, 280)
    fb = jnp.pad(fc_b, (0, _NO - 10)).reshape(1, _NO)                # (1, 16)

    resident = dict(pipeline_mode=pl.Buffered(1))   # constant index_map: fetch once
    out = pl.pallas_call(
        _make_kernel(tb),
        out_shape=jax.ShapeDtypeStruct((Np, 10), jnp.float32),
        grid=(n_tiles,),
        in_specs=[
            pl.BlockSpec((rows, _KW), lambda i: (i, 0)),             # per-tile image slabs
            pl.BlockSpec((4, _KW, _F), lambda i: (0, 0, 0), **resident),   # conv weight
            pl.BlockSpec((1, _F), lambda i: (0, 0), **resident),           # conv bias
            pl.BlockSpec((_HP, _NO, _F), lambda i: (0, 0, 0), **resident), # FC weight
            pl.BlockSpec((1, _NO), lambda i: (0, 0), **resident),          # FC bias
        ],
        out_specs=pl.BlockSpec((tb, 10), lambda i: (i, 0)),
        compiler_params=pltpu.CompilerParams(
            dimension_semantics=("parallel",),       # batch tiles independent (megacore)
            vmem_limit_bytes=48 * 1024 * 1024,       # ~10-15 MB used at tb=128; headroom
        ),
    )(xs, tw, cb, fw, fb)

    return out[:N]


# ----------------------------------------------------------------------------
# Pure-JAX reference (PyTorch NCHW semantics) for verification
# ----------------------------------------------------------------------------
def reference(x, conv_w, conv_b, fc_w, fc_b):
    conv = lax.conv_general_dilated(
        x, conv_w,
        window_strides=(1, 1),
        padding=((2, 2), (2, 2)),
        dimension_numbers=("NCHW", "OIHW", "NCHW"),
        precision=lax.Precision.HIGHEST,
    ) + conv_b.reshape(1, -1, 1, 1)
    conv = jnp.maximum(conv, 0.0)
    pooled = lax.reduce_window(
        conv, -jnp.inf, lax.max, (1, 1, 2, 2), (1, 1, 2, 2), "VALID"
    )  # (N, 20, 14, 14)
    flat = pooled.reshape(x.shape[0], -1)  # NCHW flatten
    logits = flat @ fc_w.T + fc_b
    return jax.nn.log_softmax(logits, axis=1)


if __name__ == "__main__":
    key = jax.random.PRNGKey(0)
    kx, kw1, kb1, kw2, kb2 = jax.random.split(key, 5)

    N = 2
    x = jax.random.normal(kx, (N, 1, 28, 28), dtype=jnp.float32)

    # deterministic synthetic parameters (shapes from the module __init__)
    conv_w = 0.1 * jax.random.normal(kw1, (20, 1, 5, 5), dtype=jnp.float32)
    conv_b = 0.1 * jax.random.normal(kb1, (20,), dtype=jnp.float32)
    fc_w = 0.02 * jax.random.normal(kw2, (10, 14 * 14 * 20), dtype=jnp.float32)
    fc_b = 0.02 * jax.random.normal(kb2, (10,), dtype=jnp.float32)

    out = jax.block_until_ready(one_conv_downsample(x, conv_w, conv_b, fc_w, fc_b))
    ref = reference(x, conv_w, conv_b, fc_w, fc_b)

    assert out.shape == (N, 10), out.shape
    # Kernel stores the conv operands in bf16 and runs the MXU at default precision
    # (f32 accumulate), so allow a few bf16 ULPs vs the f32-HIGHEST reference.
    err = float(jnp.max(jnp.abs(out - ref)))
    assert err < 5e-2, f"mismatch vs reference: max abs diff {err}"

    print("KERNEL_OK")
</pallas_src>

<mosaic_0001>
module attributes {stable_mosaic.version = 11 : i64} {
  func.func @fused_kernel(%arg0: i32, %arg1: memref<112x192xbf16, #tpu.memory_space<vmem>>, %arg2: memref<4x192x280xbf16, #tpu.memory_space<vmem>>, %arg3: memref<1x280xf32, #tpu.memory_space<vmem>>, %arg4: memref<14x16x280xf32, #tpu.memory_space<vmem>>, %arg5: memref<1x16xf32, #tpu.memory_space<vmem>>, %arg6: memref<8x10xf32, #tpu.memory_space<vmem>>) attributes {dimension_semantics = [#tpu.dimension_semantics<parallel>], iteration_bounds = array<i64: 1>, scalar_prefetch = 0 : i64, scratch_operands = 0 : i64, tpu.core_type = #tpu.core_type<tc>, window_params = [{transform_indices = @transform_0, window_bounds = array<i64: 112, 192>}, {pipeline_mode = #tpu.pipeline_mode<synchronous>, transform_indices = @transform_1, window_bounds = array<i64: 4, 192, 280>}, {pipeline_mode = #tpu.pipeline_mode<synchronous>, transform_indices = @transform_2, window_bounds = array<i64: 1, 280>}, {pipeline_mode = #tpu.pipeline_mode<synchronous>, transform_indices = @transform_3, window_bounds = array<i64: 14, 16, 280>}, {pipeline_mode = #tpu.pipeline_mode<synchronous>, transform_indices = @transform_4, window_bounds = array<i64: 1, 16>}, {transform_indices = @transform_5, window_bounds = array<i64: 8, 10>}]} {
    %c0 = arith.constant 0 : index
    %c0_0 = arith.constant 0 : index
    %0 = vector.load %arg1[%c0, %c0_0] : memref<112x192xbf16, #tpu.memory_space<vmem>>, vector<112x192xbf16>
    %c0_1 = arith.constant 0 : index
    %c0_2 = arith.constant 0 : index
    %c0_3 = arith.constant 0 : index
    %1 = vector.load %arg2[%c0_1, %c0_2, %c0_3] : memref<4x192x280xbf16, #tpu.memory_space<vmem>>, vector<1x192x280xbf16>
    %2 = vector.shape_cast %1 : vector<1x192x280xbf16> to vector<192x280xbf16>
    %cst = arith.constant dense<0.000000e+00> : vector<112x280xf32>
    %3 = tpu.matmul %0, %2, %cst {dimension_numbers = #tpu.dot_dimension_numbers<[1], [0], [0], [1], [0, 0, 1, 1], [], []>} : vector<112x192xbf16>, vector<192x280xbf16>, vector<112x280xf32> -> vector<112x280xf32>
    %c1 = arith.constant 1 : index
    %c0_4 = arith.constant 0 : index
    %c0_5 = arith.constant 0 : index
    %4 = vector.load %arg2[%c1, %c0_4, %c0_5] : memref<4x192x280xbf16, #tpu.memory_space<vmem>>, vector<1x192x280xbf16>
    %5 = vector.shape_cast %4 : vector<1x192x280xbf16> to vector<192x280xbf16>
    %cst_6 = arith.constant dense<0.000000e+00> : vector<112x280xf32>
    %6 = tpu.matmul %0, %5, %cst_6 {dimension_numbers = #tpu.dot_dimension_numbers<[1], [0], [0], [1], [0, 0, 1, 1], [], []>} : vector<112x192xbf16>, vector<192x280xbf16>, vector<112x280xf32> -> vector<112x280xf32>
    %7 = arith.maximumf %3, %6 : vector<112x280xf32>
    %c2 = arith.constant 2 : index
    %c0_7 = arith.constant 0 : index
    %c0_8 = arith.constant 0 : index
    %8 = vector.load %arg2[%c2, %c0_7, %c0_8] : memref<4x192x280xbf16, #tpu.memory_space<vmem>>, vector<1x192x280xbf16>
    %9 = vector.shape_cast %8 : vector<1x192x280xbf16> to vector<192x280xbf16>
    %cst_9 = arith.constant dense<0.000000e+00> : vector<112x280xf32>
    %10 = tpu.matmul %0, %9, %cst_9 {dimension_numbers = #tpu.dot_dimension_numbers<[1], [0], [0], [1], [0, 0, 1, 1], [], []>} : vector<112x192xbf16>, vector<192x280xbf16>, vector<112x280xf32> -> vector<112x280xf32>
    %11 = arith.maximumf %7, %10 : vector<112x280xf32>
    %c3 = arith.constant 3 : index
    %c0_10 = arith.constant 0 : index
    %c0_11 = arith.constant 0 : index
    %12 = vector.load %arg2[%c3, %c0_10, %c0_11] : memref<4x192x280xbf16, #tpu.memory_space<vmem>>, vector<1x192x280xbf16>
    %13 = vector.shape_cast %12 : vector<1x192x280xbf16> to vector<192x280xbf16>
    %cst_12 = arith.constant dense<0.000000e+00> : vector<112x280xf32>
    %14 = tpu.matmul %0, %13, %cst_12 {dimension_numbers = #tpu.dot_dimension_numbers<[1], [0], [0], [1], [0, 0, 1, 1], [], []>} : vector<112x192xbf16>, vector<192x280xbf16>, vector<112x280xf32> -> vector<112x280xf32>
    %15 = arith.maximumf %11, %14 : vector<112x280xf32>
    %c0_13 = arith.constant 0 : index
    %c0_14 = arith.constant 0 : index
    %16 = vector.load %arg3[%c0_13, %c0_14] : memref<1x280xf32, #tpu.memory_space<vmem>>, vector<1x280xf32>
    %17 = vector.broadcast %16 : vector<1x280xf32> to vector<112x280xf32>
    %18 = arith.addf %15, %17 : vector<112x280xf32>
    %cst_15 = arith.constant 0.000000e+00 : f32
    %19 = vector.broadcast %cst_15 : f32 to vector<112x280xf32>
    %20 = arith.maximumf %18, %19 : vector<112x280xf32>
    %21 = vector.shape_cast %20 : vector<112x280xf32> to vector<14x8x280xf32>
    %c0_16 = arith.constant 0 : index
    %c0_17 = arith.constant 0 : index
    %c0_18 = arith.constant 0 : index
    %22 = vector.load %arg4[%c0_16, %c0_17, %c0_18] : memref<14x16x280xf32, #tpu.memory_space<vmem>>, vector<14x16x280xf32>
    %cst_19 = arith.constant dense<0.000000e+00> : vector<14x8x16xf32>
    %23 = tpu.matmul %21, %22, %cst_19 {dimension_numbers = #tpu.dot_dimension_numbers<[2], [2], [1], [1], [0, 0, 0, 1, 1, 1], [0], [0]>} : vector<14x8x280xf32>, vector<14x16x280xf32>, vector<14x8x16xf32> -> vector<14x8x16xf32>
    %cst_20 = arith.constant dense<0.000000e+00> : vector<8x16xf32>
    %24 = vector.multi_reduction <add>, %23, %cst_20 [0] : vector<14x8x16xf32> to vector<8x16xf32>
    %c0_21 = arith.constant 0 : index
    %c0_22 = arith.constant 0 : index
    %25 = vector.load %arg5[%c0_21, %c0_22] : memref<1x16xf32, #tpu.memory_space<vmem>>, vector<1x16xf32>
    %26 = vector.broadcast %25 : vector<1x16xf32> to vector<8x16xf32>
    %27 = arith.addf %24, %26 : vector<8x16xf32>
    %28 = vector.extract_strided_slice %27 {offsets = [0, 0], sizes = [8, 10], strides = [1, 1]} : vector<8x16xf32> to vector<8x10xf32>
    %cst_23 = arith.constant dense<0xFF800000> : vector<8xf32>
    %29 = vector.multi_reduction <maximumf>, %28, %cst_23 [1] : vector<8x10xf32> to vector<8xf32>
    %30 = vector.shape_cast %29 : vector<8xf32> to vector<8x1xf32>
    %31 = vector.broadcast %30 : vector<8x1xf32> to vector<8x10xf32>
    %32 = arith.subf %28, %31 : vector<8x10xf32>
    %33 = math.exp %32 : vector<8x10xf32>
    %cst_24 = arith.constant dense<0.000000e+00> : vector<8xf32>
    %34 = vector.multi_reduction <add>, %33, %cst_24 [1] : vector<8x10xf32> to vector<8xf32>
    %35 = vector.shape_cast %34 : vector<8xf32> to vector<8x1xf32>
    %36 = math.log %35 : vector<8x1xf32>
    %37 = vector.broadcast %36 : vector<8x1xf32> to vector<8x10xf32>
    %38 = arith.subf %32, %37 : vector<8x10xf32>
    %c0_25 = arith.constant 0 : index
    %c0_26 = arith.constant 0 : index
    %39 = vector.load %arg6[%c0_25, %c0_26] : memref<8x10xf32, #tpu.memory_space<vmem>>, vector<8x10xf32>
    tpu.vector_store %arg6[%c0_25, %c0_26], %38 {strides = array<i32>} : memref<8x10xf32, #tpu.memory_space<vmem>>, vector<8x10xf32>,
    return
  }
  func.func @transform_0(%arg0: i32) -> (i32, i32) {
    %c0_i32 = arith.constant 0 : i32
    %c0_i32_0 = arith.constant 0 : i32
    return %arg0, %c0_i32 : i32, i32
  }
  func.func @transform_1(%arg0: i32) -> (i32, i32, i32) {
    %c0_i32 = arith.constant 0 : i32
    %c0_i32_0 = arith.constant 0 : i32
    %c0_i32_1 = arith.constant 0 : i32
    %c0_i32_2 = arith.constant 0 : i32
    return %c0_i32, %c0_i32_0, %c0_i32_1 : i32, i32, i32
  }
  func.func @transform_2(%arg0: i32) -> (i32, i32) {
    %c0_i32 = arith.constant 0 : i32
    %c0_i32_0 = arith.constant 0 : i32
    %c0_i32_1 = arith.constant 0 : i32
    return %c0_i32, %c0_i32_0 : i32, i32
  }
  func.func @transform_3(%arg0: i32) -> (i32, i32, i32) {
    %c0_i32 = arith.constant 0 : i32
    %c0_i32_0 = arith.constant 0 : i32
    %c0_i32_1 = arith.constant 0 : i32
    %c0_i32_2 = arith.constant 0 : i32
    return %c0_i32, %c0_i32_0, %c0_i32_1 : i32, i32, i32
  }
  func.func @transform_4(%arg0: i32) -> (i32, i32) {
    %c0_i32 = arith.constant 0 : i32
    %c0_i32_0 = arith.constant 0 : i32
    %c0_i32_1 = arith.constant 0 : i32
    return %c0_i32, %c0_i32_0 : i32, i32
  }
  func.func @transform_5(%arg0: i32) -> (i32, i32) {
    %c0_i32 = arith.constant 0 : i32
    %c0_i32_0 = arith.constant 0 : i32
    return %arg0, %c0_i32 : i32, i32
  }
}

</mosaic_0001>

<llo_original>
// kernel: tile.8
$region0: #{tile.8}
  #allocation0 [shape = 's32[1]{0}', space=sflag, size = 0x4, scoped, tag = 'scoped memory for tile.8']
  %s0 = inlined_call_operand.vmem [shape: f32[20], index: 0, kind: input, shape index: {}]
  %s1 = inlined_call_operand.vmem [shape: f32[14,20], index: 1, kind: output, shape index: {}]
  // Predicated region
  $region2: #{tile.8} parent=0 // pred_check
    _
  $region3: #{tile.8} parent=0 // pred_check_branch
    %3 = sbr.rel (0) target = $region5
  $region4: #{tile.8} parent=0 // pred_region
    _
  $region5: #{tile.8} parent=0 // pred_fallthru
    _
  %v4 = vld [vmem:[%s0] ss:$0 sm:$0xff]
  %5 = vst [vmem:[%s1] sm:$0xff] %v4
  %s6 = scalar_lea.vmem %s1, 8
  %7 = vst [vmem:[%s6] sm:$0xff] %v4

// kernel: tile.9
$region0: #{tile.9}
  %s0 = inlined_call_operand.vmem [shape: f32[14,20], index: 0, kind: input, shape index: {}]
  %s1 = inlined_call_operand.vmem [shape: f32[1,280], index: 1, kind: output, shape index: {}]
  $region1: #{tile.9} parent=0
    #allocation0 [shape = 'u8[12288]{0}', space=vmem, size = 0x3000, scoped, tag = 'scoped mem for output reshape']
    %v2 = vld [vmem:[%s0] sm:$0x1]
    %vm3 = vcmask 162816
    %4 = vst.msk [vmem:[#allocation0] sm:$0x1] %vm3, %v2
    %s5 = scalar_lea.vmem %s0, 6
    %v6 = vld [vmem:[%s5] sm:$0x1]
    %s7 = scalar_lea.vmem %s0, 6
    %v8 = vld [vmem:[%s7] sm:$0x1]
    %vm9 = vcmask 64512
    %v10 = vsel %vm9, %v8, %v6
    %11 = vrot.lane.b32.xlu0 %v10, 120
    %v12 = vpop.permute.xlu0 %11
    %vm13 = vcmask 97280
    %s14 = scalar_lea.vmem [#allocation0], 8
    %15 = vst.msk [vmem:[%s14] sm:$0x1] %vm13, %v12
    %vm16 = vcmask 1048512
    %17 = vst.msk [vmem:[#allocation0] sm:$0x1] %vm16, %v12
    %s18 = scalar_lea.vmem %s0, 12
    %v19 = vld [vmem:[%s18] sm:$0x1]
    %s20 = scalar_lea.vmem %s0, 12
    %v21 = vld [vmem:[%s20] sm:$0x1]
    %vm22 = vcmask 130048
    %v23 = vsel %vm22, %v21, %v19
    %24 = vrot.lane.b32.xlu0 %v23, 112
    %v25 = vpop.permute.xlu0 %24
    %vm26 = vcmask 31744
    %s27 = scalar_lea.vmem [#allocation0], 16
    %28 = vst.msk [vmem:[%s27] sm:$0x1] %vm26, %v25
    %vm29 = vcmask 1048448
    %s30 = scalar_lea.vmem [#allocation0], 8
    %31 = vst.msk [vmem:[%s30] sm:$0x1] %vm29, %v25
    %s32 = scalar_lea.vmem %s0, 5
    %v33 = vld [vmem:[%s32] sm:$0x1]
    %34 = vrot.lane.b32.xlu0 %v33, 100
    %v35 = vpop.permute.xlu0 %34
    %vm36 = vcmask 982816
    %37 = vst.msk [vmem:[#allocation0] sm:$0x1] %vm36, %v35
    %s38 = scalar_lea.vmem %s0, 11
    %v39 = vld [vmem:[%s38] sm:$0x1]
    %40 = vrot.lane.b32.xlu0 %v39, 92
    %v41 = vpop.permute.xlu0 %40
    %vm42 = vcmask 917216
    %s43 = scalar_lea.vmem [#allocation0], 8
    %44 = vst.msk [vmem:[%s43] sm:$0x1] %vm42, %v41
    %s45 = scalar_lea.vmem %s0, 4
    %v46 = vld [vmem:[%s45] sm:$0x1]
    %47 = vrot.lane.b32.xlu0 %v46, 80
    %v48 = vpop.permute.xlu0 %47
    %vm49 = vcmask 818816
    %50 = vst.msk [vmem:[#allocation0] sm:$0x1] %vm49, %v48
    %s51 = scalar_lea.vmem %s0, 10
    %v52 = vld [vmem:[%s51] sm:$0x1]
    %53 = vrot.lane.b32.xlu0 %v52, 72
    %v54 = vpop.permute.xlu0 %53
    %vm55 = vcmask 753216
    %s56 = scalar_lea.vmem [#allocation0], 8
    %57 = vst.msk [vmem:[%s56] sm:$0x1] %vm55, %v54
    %s58 = scalar_lea.vmem %s0, 3
    %v59 = vld [vmem:[%s58] sm:$0x1]
    %60 = vrot.lane.b32.xlu0 %v59, 60
    %v61 = vpop.permute.xlu0 %60
    %vm62 = vcmask 654816
    %63 = vst.msk [vmem:[#allocation0] sm:$0x1] %vm62, %v61
    %s64 = scalar_lea.vmem %s0, 9
    %v65 = vld [vmem:[%s64] sm:$0x1]
    %66 = vrot.lane.b32.xlu0 %v65, 52
    %v67 = vpop.permute.xlu0 %66
    %vm68 = vcmask 589216
    %s69 = scalar_lea.vmem [#allocation0], 8
    %70 = vst.msk [vmem:[%s69] sm:$0x1] %vm68, %v67
    %s71 = scalar_lea.vmem %s0, 2
    %v72 = vld [vmem:[%s71] sm:$0x1]
    %73 = vrot.lane.b32.xlu0 %v72, 40
    %v74 = vpop.permute.xlu0 %73
    %vm75 = vcmask 490816
    %76 = vst.msk [vmem:[#allocation0] sm:$0x1] %vm75, %v74
    %s77 = scalar_lea.vmem %s0, 8
    %v78 = vld [vmem:[%s77] sm:$0x1]
    %79 = vrot.lane.b32.xlu0 %v78, 32
    %v80 = vpop.permute.xlu0 %79
    %vm81 = vcmask 425216
    %s82 = scalar_lea.vmem [#allocation0], 8
    %83 = vst.msk [vmem:[%s82] sm:$0x1] %vm81, %v80
    %s84 = scalar_lea.vmem %s0, 1
    %v85 = vld [vmem:[%s84] sm:$0x1]
    %86 = vrot.lane.b32.xlu0 %v85, 20
    %v87 = vpop.permute.xlu0 %86
    %vm88 = vcmask 326816
    %89 = vst.msk [vmem:[#allocation0] sm:$0x1] %vm88, %v87
    %s90 = scalar_lea.vmem %s0, 7
    %v91 = vld [vmem:[%s90] sm:$0x1]
    %92 = vrot.lane.b32.xlu0 %v91, 12
    %v93 = vpop.permute.xlu0 %92
    %vm94 = vcmask 261216
    %s95 = scalar_lea.vmem [#allocation0], 8
    %96 = vst.msk [vmem:[%s95] sm:$0x1] %vm94, %v93
    %s97 = scalar_lea.vmem %s0, 13
    %v98 = vld [vmem:[%s97] sm:$0x1]
    %99 = vrot.lane.b32.xlu0 %v98, 4
    %v100 = vpop.permute.xlu0 %99
    %vm101 = vcmask 195616
    %s102 = scalar_lea.vmem [#allocation0], 16
    %103 = vst.msk [vmem:[%s102] sm:$0x1] %vm101, %v100
    %s105 = sshllo.u32 0, 1
    %v107 = vld [vmem:[#allocation0] sm:%s105]
    %s108 = sshllo.u32 0, 1
    %109 = vst [vmem:[%s1] sm:%s108] %v107
    %s110 = scalar_lea.vmem [#allocation0], 8
    %v111 = vld [vmem:[%s110] sm:%s105]
    %s112 = sshllo.u32 0, 1
    %s113 = scalar_lea.vmem %s1, 1
    %114 = vst [vmem:[%s113] sm:%s112] %v111
    %s115 = scalar_lea.vmem [#allocation0], 16
    %v116 = vld [vmem:[%s115] sm:%s105]
    %s117 = sshllo.u32 0, 1
    %s118 = smul.addr 1, 2
    %s119 = scalar_lea.vmem %s1, %s118
    %120 = vst [vmem:[%s119] sm:%s117] %v116

// kernel: one_conv_downsample.1
$region0: #{one_conv_downsample.1}
  #allocation0 [shape = 'u32[]', space=smem, size = 0x4, offset = 0x4, fixed_abs, tag = 'smem constant byte address 0x4 - core index']
  #allocation1 [shape = 'u32[144,128]{1,0:T(1,128)}', space=vmem, size = 0x12000, scoped, tag = 'internal scratch']
  %s0 = inlined_call_operand.vmem [shape: bf16[112,192], index: 0, kind: input, shape index: {}]
  %s1 = inlined_call_operand.vmem [shape: bf16[4,192,280], index: 1, kind: input, shape index: {}]
  %s2 = inlined_call_operand.vmem [shape: f32[1,280], index: 2, kind: input, shape index: {}]
  %s3 = inlined_call_operand.vmem [shape: f32[14,16,280], index: 3, kind: input, shape index: {}]
  %s4 = inlined_call_operand.vmem [shape: f32[1,16], index: 4, kind: input, shape index: {}]
  %s5 = inlined_call_operand.vmem [shape: f32[8,10], index: 5, kind: output, shape index: {}]
  %s6 = sld [smem:[#allocation0]]
  $region30: #{one_conv_downsample.1} parent=0
    _
  %s8 = ssub.s32 1, %s6
  %s9 = scalar_select 0, %s8, %s6
  // Predicated region
  $region2: #{one_conv_downsample.1} parent=0 // pred_check
    _
  $region3: #{one_conv_downsample.1} parent=0 // pred_check_branch
    %11 = sbr.rel (0) target = $region5
  $region4: #{one_conv_downsample.1} parent=0 // pred_region
    _
  $region5: #{one_conv_downsample.1} parent=0 // pred_fallthru
    _
  // Predicated region
  $region6: #{one_conv_downsample.1} parent=0 // pred_check
    _
  $region7: #{one_conv_downsample.1} parent=0 // pred_check_branch
    %13 = sbr.rel (0) target = $region9
  $region8: #{one_conv_downsample.1} parent=0 // pred_region
    _
  $region9: #{one_conv_downsample.1} parent=0 // pred_fallthru
    _
  // Predicated region
  $region10: #{one_conv_downsample.1} parent=0 // pred_check
    _
  $region11: #{one_conv_downsample.1} parent=0 // pred_check_branch
    %15 = sbr.rel (0) target = $region13
  $region12: #{one_conv_downsample.1} parent=0 // pred_region
    _
  $region13: #{one_conv_downsample.1} parent=0 // pred_fallthru
    _
  // Predicated region
  $region14: #{one_conv_downsample.1} parent=0 // pred_check
    _
  $region15: #{one_conv_downsample.1} parent=0 // pred_check_branch
    %17 = sbr.rel (0) target = $region17
  $region16: #{one_conv_downsample.1} parent=0 // pred_region
    _
  $region17: #{one_conv_downsample.1} parent=0 // pred_fallthru
    _
  // Predicated region
  $region18: #{one_conv_downsample.1} parent=0 // pred_check
    _
  $region19: #{one_conv_downsample.1} parent=0 // pred_check_branch
    %19 = sbr.rel (0) target = $region21
  $region20: #{one_conv_downsample.1} parent=0 // pred_region
    _
  $region21: #{one_conv_downsample.1} parent=0 // pred_fallthru
    _
  %v21 = vld [vmem:[%s0] sm:$0xff]
  %v22 = vld [vmem:[%s0 + $0x8] sm:$0xff]
  %v23 = vld [vmem:[%s0 + $0x10] sm:$0xff]
  %v24 = vld [vmem:[%s0 + $0x18] sm:$0xff]
  %v25 = vld [vmem:[%s0 + $0x20] sm:$0xff]
  %v26 = vld [vmem:[%s0 + $0x28] sm:$0xff]
  %v27 = vld [vmem:[%s0 + $0x30] sm:$0xff]
  %v28 = vld [vmem:[%s0 + $0x38] sm:$0xff]
  %v29 = vld [vmem:[%s0 + $0x40] sm:$0xff]
  %v30 = vld [vmem:[%s0 + $0x48] sm:$0xff]
  %v31 = vld [vmem:[%s0 + $0x50] sm:$0xff]
  %v32 = vld [vmem:[%s0 + $0x58] sm:$0xff]
  %v33 = vld [vmem:[%s0 + $0x60] sm:$0xff]
  %v34 = vld [vmem:[%s0 + $0x68] sm:$0xff]
  %v35 = vld [vmem:[%s1] sm:$0xff]
  %v36 = vld [vmem:[%s1 + $0x8] sm:$0xf]
  %v37 = vld [vmem:[%s1 + $0xc] sm:$0xff]
  %v38 = vld [vmem:[%s1 + $0x14] sm:$0xf]
  %v39 = vld [vmem:[%s1 + $0x18] sm:$0xff]
  %v40 = vld [vmem:[%s1 + $0x20] sm:$0xf]
  %v41 = vld [vmem:[%s1 + $0x24] sm:$0xff]
  %v42 = vld [vmem:[%s1 + $0x2c] sm:$0xf]
  %v43 = vld [vmem:[%s1 + $0x30] sm:$0xff]
  %v44 = vld [vmem:[%s1 + $0x38] sm:$0xf]
  %v45 = vld [vmem:[%s1 + $0x3c] sm:$0xff]
  %v46 = vld [vmem:[%s1 + $0x44] sm:$0xf]
  %v47 = vld [vmem:[%s1 + $0x48] sm:$0xff]
  %v48 = vld [vmem:[%s1 + $0x50] sm:$0xf]
  %v49 = vld [vmem:[%s1 + $0x54] sm:$0xff]
  %v50 = vld [vmem:[%s1 + $0x5c] sm:$0xf]
  %v51 = vld [vmem:[%s1 + $0x60] sm:$0xff]
  %v52 = vld [vmem:[%s1 + $0x68] sm:$0xf]
  %v53 = vld [vmem:[%s1 + $0x6c] sm:$0xff]
  %v54 = vld [vmem:[%s1 + $0x74] sm:$0xf]
  %v55 = vld [vmem:[%s1 + $0x78] sm:$0xff]
  %v56 = vld [vmem:[%s1 + $0x80] sm:$0xf]
  %v57 = vld [vmem:[%s1 + $0x84] sm:$0xff]
  %v58 = vld [vmem:[%s1 + $0x8c] sm:$0xf]
  %v59 = vld [vmem:[%s1 + $0x90] sm:$0xff]
  %v60 = vld [vmem:[%s1 + $0x98] sm:$0xf]
  %v61 = vld [vmem:[%s1 + $0x9c] sm:$0xff]
  %v62 = vld [vmem:[%s1 + $0xa4] sm:$0xf]
  %v63 = vld [vmem:[%s1 + $0xa8] sm:$0xff]
  %v64 = vld [vmem:[%s1 + $0xb0] sm:$0xf]
  %v65 = vld [vmem:[%s1 + $0xb4] sm:$0xff]
  %v66 = vld [vmem:[%s1 + $0xbc] sm:$0xf]
  %v67 = vld [vmem:[%s1 + $0xc0] sm:$0xff]
  %v68 = vld [vmem:[%s1 + $0xc8] sm:$0xf]
  %v69 = vld [vmem:[%s1 + $0xcc] sm:$0xff]
  %v70 = vld [vmem:[%s1 + $0xd4] sm:$0xf]
  %v71 = vld [vmem:[%s1 + $0xd8] sm:$0xff]
  %v72 = vld [vmem:[%s1 + $0xe0] sm:$0xf]
  %v73 = vld [vmem:[%s1 + $0xe4] sm:$0xff]
  %v74 = vld [vmem:[%s1 + $0xec] sm:$0xf]
  %v75 = vld [vmem:[%s1 + $0xf0] sm:$0xff]
  %v76 = vld [vmem:[%s1 + $0xf8] sm:$0xf]
  %v77 = vld [vmem:[%s1 + $0xfc] sm:$0xff]
  %v78 = vld [vmem:[%s1 + $0x104] sm:$0xf]
  %v79 = vld [vmem:[%s1 + $0x108] sm:$0xff]
  %v80 = vld [vmem:[%s1 + $0x110] sm:$0xf]
  %v81 = vld [vmem:[%s1 + $0x114] sm:$0xff]
  %v82 = vld [vmem:[%s1 + $0x11c] sm:$0xf]
  %v97 = vunpack.c.l.b16 %v21
  %v98 = vunpack.c.h.b16 %v21
  %v99 = vunpack.c.l.b16 %v22
  %v100 = vunpack.c.h.b16 %v22
  %v101 = vunpack.c.l.b16 %v23
  %v102 = vunpack.c.h.b16 %v23
  %v103 = vunpack.c.l.b16 %v24
  %v104 = vunpack.c.h.b16 %v24
  %v105 = vunpack.c.l.b16 %v25
  %v106 = vunpack.c.h.b16 %v25
  %v107 = vunpack.c.l.b16 %v26
  %v108 = vunpack.c.h.b16 %v26
  %v109 = vunpack.c.l.b16 %v27
  %v110 = vunpack.c.h.b16 %v27
  %v111 = vunpack.c.l.b16 %v28
  %v112 = vunpack.c.h.b16 %v28
  %v113 = vunpack.c.l.b16 %v29
  %v114 = vunpack.c.h.b16 %v29
  %v115 = vunpack.c.l.b16 %v30
  %v116 = vunpack.c.h.b16 %v30
  %v117 = vunpack.c.l.b16 %v31
  %v118 = vunpack.c.h.b16 %v31
  %v119 = vunpack.c.l.b16 %v32
  %v120 = vunpack.c.h.b16 %v32
  %v121 = vunpack.c.l.b16 %v33
  %v122 = vunpack.c.h.b16 %v33
  %v123 = vunpack.c.l.b16 %v34
  %v124 = vunpack.c.h.b16 %v34
  %v125 = vpack.c.b16 %v99, %v97
  %v126 = vpack.c.b16 %v100, %v98
  %v127 = vpack.c.b16 %v103, %v101
  %v128 = vpack.c.b16 %v104, %v102
  %v129 = vpack.c.b16 %v107, %v105
  %v130 = vpack.c.b16 %v108, %v106
  %v131 = vpack.c.b16 %v111, %v109
  %v132 = vpack.c.b16 %v112, %v110
  %v133 = vpack.c.b16 %v115, %v113
  %v134 = vpack.c.b16 %v116, %v114
  %v135 = vpack.c.b16 %v119, %v117
  %v136 = vpack.c.b16 %v120, %v118
  %v137 = vpack.c.b16 %v123, %v121
  %v138 = vpack.c.b16 %v124, %v122
  %v194 = vunpack.c.l.b16 %v35
  %v195 = vunpack.c.h.b16 %v35
  %v196 = vunpack.c.l.b16 %v36
  %v197 = vunpack.c.l.b16 %v37
  %v198 = vunpack.c.h.b16 %v37
  %v199 = vunpack.c.l.b16 %v38
  %v200 = vunpack.c.l.b16 %v39
  %v201 = vunpack.c.h.b16 %v39
  %v202 = vunpack.c.l.b16 %v40
  %v203 = vunpack.c.l.b16 %v41
  %v204 = vunpack.c.h.b16 %v41
  %v205 = vunpack.c.l.b16 %v42
  %v206 = vunpack.c.l.b16 %v43
  %v207 = vunpack.c.h.b16 %v43
  %v208 = vunpack.c.l.b16 %v44
  %v209 = vunpack.c.l.b16 %v45
  %v210 = vunpack.c.h.b16 %v45
  %v211 = vunpack.c.l.b16 %v46
  %v212 = vunpack.c.l.b16 %v47
  %v213 = vunpack.c.h.b16 %v47
  %v214 = vunpack.c.l.b16 %v48
  %v215 = vunpack.c.l.b16 %v49
  %v216 = vunpack.c.h.b16 %v49
  %v217 = vunpack.c.l.b16 %v50
  %v218 = vunpack.c.l.b16 %v51
  %v219 = vunpack.c.h.b16 %v51
  %v220 = vunpack.c.l.b16 %v52
  %v221 = vunpack.c.l.b16 %v53
  %v222 = vunpack.c.h.b16 %v53
  %v223 = vunpack.c.l.b16 %v54
  %v224 = vunpack.c.l.b16 %v55
  %v225 = vunpack.c.h.b16 %v55
  %v226 = vunpack.c.l.b16 %v56
  %v227 = vunpack.c.l.b16 %v57
  %v228 = vunpack.c.h.b16 %v57
  %v229 = vunpack.c.l.b16 %v58
  %v230 = vunpack.c.l.b16 %v59
  %v231 = vunpack.c.h.b16 %v59
  %v232 = vunpack.c.l.b16 %v60
  %v233 = vunpack.c.l.b16 %v61
  %v234 = vunpack.c.h.b16 %v61
  %v235 = vunpack.c.l.b16 %v62
  %v236 = vunpack.c.l.b16 %v63
  %v237 = vunpack.c.h.b16 %v63
  %v238 = vunpack.c.l.b16 %v64
  %v239 = vunpack.c.l.b16 %v65
  %v240 = vunpack.c.h.b16 %v65
  %v241 = vunpack.c.l.b16 %v66
  %v242 = vunpack.c.l.b16 %v67
  %v243 = vunpack.c.h.b16 %v67
  %v244 = vunpack.c.l.b16 %v68
  %v245 = vunpack.c.l.b16 %v69
  %v246 = vunpack.c.h.b16 %v69
  %v247 = vunpack.c.l.b16 %v70
  %v248 = vunpack.c.l.b16 %v71
  %v249 = vunpack.c.h.b16 %v71
  %v250 = vunpack.c.l.b16 %v72
  %v251 = vunpack.c.l.b16 %v73
  %v252 = vunpack.c.h.b16 %v73
  %v253 = vunpack.c.l.b16 %v74
  %v254 = vunpack.c.l.b16 %v75
  %v255 = vunpack.c.h.b16 %v75
  %v256 = vunpack.c.l.b16 %v76
  %v257 = vunpack.c.l.b16 %v77
  %v258 = vunpack.c.h.b16 %v77
  %v259 = vunpack.c.l.b16 %v78
  %v260 = vunpack.c.l.b16 %v79
  %v261 = vunpack.c.h.b16 %v79
  %v262 = vunpack.c.l.b16 %v80
  %v263 = vunpack.c.l.b16 %v81
  %v264 = vunpack.c.h.b16 %v81
  %v265 = vunpack.c.l.b16 %v82
  %v266 = vpack.c.b16 %v197, %v194
  %v267 = vpack.c.b16 %v198, %v195
  %v268 = vpack.c.b16 %v199, %v196
  %v269 = vpack.c.b16 %v203, %v200
  %v270 = vpack.c.b16 %v204, %v201
  %v271 = vpack.c.b16 %v205, %v202
  %v272 = vpack.c.b16 %v209, %v206
  %v273 = vpack.c.b16 %v210, %v207
  %v274 = vpack.c.b16 %v211, %v208
  %v275 = vpack.c.b16 %v215, %v212
  %v276 = vpack.c.b16 %v216, %v213
  %v277 = vpack.c.b16 %v217, %v214
  %v278 = vpack.c.b16 %v221, %v218
  %v279 = vpack.c.b16 %v222, %v219
  %v280 = vpack.c.b16 %v223, %v220
  %v281 = vpack.c.b16 %v227, %v224
  %v282 = vpack.c.b16 %v228, %v225
  %v283 = vpack.c.b16 %v229, %v226
  %v284 = vpack.c.b16 %v233, %v230
  %v285 = vpack.c.b16 %v234, %v231
  %v286 = vpack.c.b16 %v235, %v232
  %v287 = vpack.c.b16 %v239, %v236
  %v288 = vpack.c.b16 %v240, %v237
  %v289 = vpack.c.b16 %v241, %v238
  %v290 = vpack.c.b16 %v245, %v242
  %v291 = vpack.c.b16 %v246, %v243
  %v292 = vpack.c.b16 %v247, %v244
  %v293 = vpack.c.b16 %v251, %v248
  %v294 = vpack.c.b16 %v252, %v249
  %v295 = vpack.c.b16 %v253, %v250
  %v296 = vpack.c.b16 %v257, %v254
  %v297 = vpack.c.b16 %v258, %v255
  %v298 = vpack.c.b16 %v259, %v256
  %v299 = vpack.c.b16 %v263, %v260
  %v300 = vpack.c.b16 %v264, %v261
  %v301 = vpack.c.b16 %v265, %v262
  %vm338 = vcmask 523264
  %v340 = vsel %vm338, %v126, 0
  %v343 = vsel %vm338, %v128, 0
  %v346 = vsel %vm338, %v130, 0
  %v349 = vsel %vm338, %v132, 0
  %v352 = vsel %vm338, %v134, 0
  %v355 = vsel %vm338, %v136, 0
  %v358 = vsel %vm338, %v138, 0
  %360 = vmatprep.subr.bf16.mxu0 %v267
  %361 = vmatpush1.bf16.msra.mxu0 %v266
  %362 = vmatprep.subr.bf16.mxu0 %v270
  %363 = vmatpush1.bf16.msra.mxu0 %v269
  %364 = vmatprep.subr.bf16.mxu0 %v273
  %365 = vmatpush1.bf16.msra.mxu0 %v272
  %366 = vmatprep.subr.bf16.mxu0 %v276
  %367 = vmatpush1.bf16.msra.mxu0 %v275
  %368 = vmatprep.subr.bf16.mxu0 %v279
  %369 = vmatpush1.bf16.msra.mxu0 %v278
  %370 = vmatprep.subr.bf16.mxu0 %v282
  %371 = vmatpush1.bf16.msra.mxu0 %v281
  %372 = vmatprep.subr.bf16.mxu0 %v285
  %373 = vmatpush1.bf16.msra.mxu0 %v284
  %374 = vmatprep.subr.bf16.mxu0 %v288
  %375 = vmatpush1.bf16.msra.mxu0 %v287
  %376 = vmatprep.subr.bf16.mxu0 %v291
  %377 = vmatpush1.bf16.msra.mxu0 %v290
  %378 = vmatprep.subr.bf16.mxu0 %v294
  %379 = vmatpush1.bf16.msra.mxu0 %v293
  %380 = vmatprep.subr.bf16.mxu0 %v297
  %381 = vmatpush1.bf16.msra.mxu0 %v296
  %382 = vmatprep.subr.bf16.mxu0 %v300
  %383 = vmatpush1.bf16.msra.mxu0 %v299
  %384 = vmatprep.subr.bf16.mxu0 0
  %385 = vmatpush1.bf16.msra.mxu0 0
  %386 = vmatprep.subr.bf16.mxu0 0
  %387 = vmatpush1.bf16.msra.mxu0 0
  %388 = vmatprep.subr.bf16.mxu0 0
  %389 = vmatpush1.bf16.msra.mxu0 0
  %390 = vmatprep.subr.bf16.mxu0 0
  %391 = vmatpush1.bf16.msra.mxu0 0
  %392 = vmatprep.mubr.bf16.mxu0 %v340
  %393 = vmatmul.mubr.bf16.gmra.mrb[0].mxu0 %v125
  %v394 = vpop.f32.mrb[0].mxu0
  %v395 = vadd.f32 0.0, %v394
  %v396 = vpop.f32.mrb[0].mxu0
  %v397 = vadd.f32 0.0, %v396
  %v398 = vpop.f32.mrb[0].mxu0
  %v399 = vadd.f32 0.0, %v398
  %v400 = vpop.f32.mrb[0].mxu0
  %v401 = vadd.f32 0.0, %v400
  %402 = vmatprep.mubr.bf16.mxu0 %v343
  %403 = vmatmul.mubr.bf16.gmra.mrb[0].mxu0 %v127
  %v404 = vpop.f32.mrb[0].mxu0
  %v405 = vadd.f32 0.0, %v404
  %v406 = vpop.f32.mrb[0].mxu0
  %v407 = vadd.f32 0.0, %v406
  %v408 = vpop.f32.mrb[0].mxu0
  %v409 = vadd.f32 0.0, %v408
  %v410 = vpop.f32.mrb[0].mxu0
  %v411 = vadd.f32 0.0, %v410
  %412 = vmatprep.mubr.bf16.mxu0 %v346
  %413 = vmatmul.mubr.bf16.gmra.mrb[0].mxu0 %v129
  %v414 = vpop.f32.mrb[0].mxu0
  %v415 = vadd.f32 0.0, %v414
  %v416 = vpop.f32.mrb[0].mxu0
  %v417 = vadd.f32 0.0, %v416
  %v418 = vpop.f32.mrb[0].mxu0
  %v419 = vadd.f32 0.0, %v418
  %v420 = vpop.f32.mrb[0].mxu0
  %v421 = vadd.f32 0.0, %v420
  %422 = vmatprep.mubr.bf16.mxu0 %v349
  %423 = vmatmul.mubr.bf16.gmra.mrb[0].mxu0 %v131
  %v424 = vpop.f32.mrb[0].mxu0
  %v425 = vadd.f32 0.0, %v424
  %v426 = vpop.f32.mrb[0].mxu0
  %v427 = vadd.f32 0.0, %v426
  %v428 = vpop.f32.mrb[0].mxu0
  %v429 = vadd.f32 0.0, %v428
  %v430 = vpop.f32.mrb[0].mxu0
  %v431 = vadd.f32 0.0, %v430
  %432 = vmatprep.mubr.bf16.mxu0 %v352
  %433 = vmatmul.mubr.bf16.gmra.mrb[0].mxu0 %v133
  %v434 = vpop.f32.mrb[0].mxu0
  %v435 = vadd.f32 0.0, %v434
  %v436 = vpop.f32.mrb[0].mxu0
  %v437 = vadd.f32 0.0, %v436
  %v438 = vpop.f32.mrb[0].mxu0
  %v439 = vadd.f32 0.0, %v438
  %v440 = vpop.f32.mrb[0].mxu0
  %v441 = vadd.f32 0.0, %v440
  %442 = vmatprep.mubr.bf16.mxu0 %v355
  %443 = vmatmul.mubr.bf16.gmra.mrb[0].mxu0 %v135
  %v444 = vpop.f32.mrb[0].mxu0
  %v445 = vadd.f32 0.0, %v444
  %v446 = vpop.f32.mrb[0].mxu0
  %v447 = vadd.f32 0.0, %v446
  %v448 = vpop.f32.mrb[0].mxu0
  %v449 = vadd.f32 0.0, %v448
  %v450 = vpop.f32.mrb[0].mxu0
  %v451 = vadd.f32 0.0, %v450
  %452 = vmatprep.mubr.bf16.mxu0 %v358
  %453 = vmatmul.mubr.bf16.gmra.mrb[0].mxu0 %v137
  %v454 = vpop.f32.mrb[0].mxu0
  %v455 = vadd.f32 0.0, %v454
  %v456 = vpop.f32.mrb[0].mxu0
  %v457 = vadd.f32 0.0, %v456
  %v458 = vpop.f32.mrb[0].mxu0
  %v459 = vadd.f32 0.0, %v458
  %v460 = vpop.f32.mrb[0].mxu0
  %v461 = vadd.f32 0.0, %v460
  %462 = vdwg.mxu0
  %463 = vmatprep.subr.bf16.mxu0 0
  %464 = vmatpush1.bf16.msra.mxu0 %v268
  %465 = vmatprep.subr.bf16.mxu0 0
  %466 = vmatpush1.bf16.msra.mxu0 %v271
  %467 = vmatprep.subr.bf16.mxu0 0
  %468 = vmatpush1.bf16.msra.mxu0 %v274
  %469 = vmatprep.subr.bf16.mxu0 0
  %470 = vmatpush1.bf16.msra.mxu0 %v277
  %471 = vmatprep.subr.bf16.mxu0 0
  %472 = vmatpush1.bf16.msra.mxu0 %v280
  %473 = vmatprep.subr.bf16.mxu0 0
  %474 = vmatpush1.bf16.msra.mxu0 %v283
  %475 = vmatprep.subr.bf16.mxu0 0
  %476 = vmatpush1.bf16.msra.mxu0 %v286
  %477 = vmatprep.subr.bf16.mxu0 0
  %478 = vmatpush1.bf16.msra.mxu0 %v289
  %479 = vmatprep.subr.bf16.mxu0 0
  %480 = vmatpush1.bf16.msra.mxu0 %v292
  %481 = vmatprep.subr.bf16.mxu0 0
  %482 = vmatpush1.bf16.msra.mxu0 %v295
  %483 = vmatprep.subr.bf16.mxu0 0
  %484 = vmatpush1.bf16.msra.mxu0 %v298
  %485 = vmatprep.subr.bf16.mxu0 0
  %486 = vmatpush1.bf16.msra.mxu0 %v301
  %487 = vmatprep.subr.bf16.mxu0 0
  %488 = vmatpush1.bf16.msra.mxu0 0
  %489 = vmatprep.subr.bf16.mxu0 0
  %490 = vmatpush1.bf16.msra.mxu0 0
  %491 = vmatprep.subr.bf16.mxu0 0
  %492 = vmatpush1.bf16.msra.mxu0 0
  %493 = vmatprep.subr.bf16.mxu0 0
  %494 = vmatpush1.bf16.msra.mxu0 0
  %495 = vmatprep.mubr.bf16.mxu0 %v340
  %496 = vmatmul.mubr.bf16.gmra.mrb[0].mxu0 %v125
  %v497 = vpop.f32.mrb[0].mxu0
  %v498 = vadd.f32 0.0, %v497
  %v499 = vpop.f32.mrb[0].mxu0
  %v500 = vpop.f32.mrb[0].mxu0
  %v501 = vadd.f32 0.0, %v500
  %v502 = vpop.f32.mrb[0].mxu0
  %503 = vmatprep.mubr.bf16.mxu0 %v343
  %504 = vmatmul.mubr.bf16.gmra.mrb[0].mxu0 %v127
  %v505 = vpop.f32.mrb[0].mxu0
  %v506 = vadd.f32 0.0, %v505
  %v507 = vpop.f32.mrb[0].mxu0
  %v508 = vpop.f32.mrb[0].mxu0
  %v509 = vadd.f32 0.0, %v508
  %v510 = vpop.f32.mrb[0].mxu0
  %511 = vmatprep.mubr.bf16.mxu0 %v346
  %512 = vmatmul.mubr.bf16.gmra.mrb[0].mxu0 %v129
  %v513 = vpop.f32.mrb[0].mxu0
  %v514 = vadd.f32 0.0, %v513
  %v515 = vpop.f32.mrb[0].mxu0
  %v516 = vpop.f32.mrb[0].mxu0
  %v517 = vadd.f32 0.0, %v516
  %v518 = vpop.f32.mrb[0].mxu0
  %519 = vmatprep.mubr.bf16.mxu0 %v349
  %520 = vmatmul.mubr.bf16.gmra.mrb[0].mxu0 %v131
  %v521 = vpop.f32.mrb[0].mxu0
  %v522 = vadd.f32 0.0, %v521
  %v523 = vpop.f32.mrb[0].mxu0
  %v524 = vpop.f32.mrb[0].mxu0
  %v525 = vadd.f32 0.0, %v524
  %v526 = vpop.f32.mrb[0].mxu0
  %527 = vmatprep.mubr.bf16.mxu0 %v352
  %528 = vmatmul.mubr.bf16.gmra.mrb[0].mxu0 %v133
  %v529 = vpop.f32.mrb[0].mxu0
  %v530 = vadd.f32 0.0, %v529
  %v531 = vpop.f32.mrb[0].mxu0
  %v532 = vpop.f32.mrb[0].mxu0
  %v533 = vadd.f32 0.0, %v532
  %v534 = vpop.f32.mrb[0].mxu0
  %535 = vmatprep.mubr.bf16.mxu0 %v355
  %536 = vmatmul.mubr.bf16.gmra.mrb[0].mxu0 %v135
  %v537 = vpop.f32.mrb[0].mxu0
  %v538 = vadd.f32 0.0, %v537
  %v539 = vpop.f32.mrb[0].mxu0
  %v540 = vpop.f32.mrb[0].mxu0
  %v541 = vadd.f32 0.0, %v540
  %v542 = vpop.f32.mrb[0].mxu0
  %543 = vmatprep.mubr.bf16.mxu0 %v358
  %544 = vmatmul.mubr.bf16.gmra.mrb[0].mxu0 %v137
  %v545 = vpop.f32.mrb[0].mxu0
  %v546 = vadd.f32 0.0, %v545
  %v547 = vpop.f32.mrb[0].mxu0
  %v548 = vpop.f32.mrb[0].mxu0
  %v549 = vadd.f32 0.0, %v548
  %v550 = vpop.f32.mrb[0].mxu0
  %551 = vdwg.mxu0
  %s552 = scalar_lea.vmem %s1, 288
  %v553 = vld [vmem:[%s552] sm:$0xff]
  %v554 = vld [vmem:[%s552 + $0x8] sm:$0xf]
  %v555 = vld [vmem:[%s552 + $0xc] sm:$0xff]
  %v556 = vld [vmem:[%s552 + $0x14] sm:$0xf]
  %v557 = vld [vmem:[%s552 + $0x18] sm:$0xff]
  %v558 = vld [vmem:[%s552 + $0x20] sm:$0xf]
  %v559 = vld [vmem:[%s552 + $0x24] sm:$0xff]
  %v560 = vld [vmem:[%s552 + $0x2c] sm:$0xf]
  %v561 = vld [vmem:[%s552 + $0x30] sm:$0xff]
  %v562 = vld [vmem:[%s552 + $0x38] sm:$0xf]
  %v563 = vld [vmem:[%s552 + $0x3c] sm:$0xff]
  %v564 = vld [vmem:[%s552 + $0x44] sm:$0xf]
  %v565 = vld [vmem:[%s552 + $0x48] sm:$0xff]
  %v566 = vld [vmem:[%s552 + $0x50] sm:$0xf]
  %v567 = vld [vmem:[%s552 + $0x54] sm:$0xff]
  %v568 = vld [vmem:[%s552 + $0x5c] sm:$0xf]
  %v569 = vld [vmem:[%s552 + $0x60] sm:$0xff]
  %v570 = vld [vmem:[%s552 + $0x68] sm:$0xf]
  %v571 = vld [vmem:[%s552 + $0x6c] sm:$0xff]
  %v572 = vld [vmem:[%s552 + $0x74] sm:$0xf]
  %v573 = vld [vmem:[%s552 + $0x78] sm:$0xff]
  %v574 = vld [vmem:[%s552 + $0x80] sm:$0xf]
  %v575 = vld [vmem:[%s552 + $0x84] sm:$0xff]
  %v576 = vld [vmem:[%s552 + $0x8c] sm:$0xf]
  %v577 = vld [vmem:[%s552 + $0x90] sm:$0xff]
  %v578 = vld [vmem:[%s552 + $0x98] sm:$0xf]
  %v579 = vld [vmem:[%s552 + $0x9c] sm:$0xff]
  %v580 = vld [vmem:[%s552 + $0xa4] sm:$0xf]
  %v581 = vld [vmem:[%s552 + $0xa8] sm:$0xff]
  %v582 = vld [vmem:[%s552 + $0xb0] sm:$0xf]
  %v583 = vld [vmem:[%s552 + $0xb4] sm:$0xff]
  %v584 = vld [vmem:[%s552 + $0xbc] sm:$0xf]
  %v585 = vld [vmem:[%s552 + $0xc0] sm:$0xff]
  %v586 = vld [vmem:[%s552 + $0xc8] sm:$0xf]
  %v587 = vld [vmem:[%s552 + $0xcc] sm:$0xff]
  %v588 = vld [vmem:[%s552 + $0xd4] sm:$0xf]
  %v589 = vld [vmem:[%s552 + $0xd8] sm:$0xff]
  %v590 = vld [vmem:[%s552 + $0xe0] sm:$0xf]
  %v591 = vld [vmem:[%s552 + $0xe4] sm:$0xff]
  %v592 = vld [vmem:[%s552 + $0xec] sm:$0xf]
  %v593 = vld [vmem:[%s552 + $0xf0] sm:$0xff]
  %v594 = vld [vmem:[%s552 + $0xf8] sm:$0xf]
  %v595 = vld [vmem:[%s552 + $0xfc] sm:$0xff]
  %v596 = vld [vmem:[%s552 + $0x104] sm:$0xf]
  %v597 = vld [vmem:[%s552 + $0x108] sm:$0xff]
  %v598 = vld [vmem:[%s552 + $0x110] sm:$0xf]
  %v599 = vld [vmem:[%s552 + $0x114] sm:$0xff]
  %v600 = vld [vmem:[%s552 + $0x11c] sm:$0xf]
  %v649 = vunpack.c.l.b16 %v553
  %v650 = vunpack.c.h.b16 %v553
  %v651 = vunpack.c.l.b16 %v554
  %v652 = vunpack.c.l.b16 %v555
  %v653 = vunpack.c.h.b16 %v555
  %v654 = vunpack.c.l.b16 %v556
  %v655 = vunpack.c.l.b16 %v557
  %v656 = vunpack.c.h.b16 %v557
  %v657 = vunpack.c.l.b16 %v558
  %v658 = vunpack.c.l.b16 %v559
  %v659 = vunpack.c.h.b16 %v559
  %v660 = vunpack.c.l.b16 %v560
  %v661 = vunpack.c.l.b16 %v561
  %v662 = vunpack.c.h.b16 %v561
  %v663 = vunpack.c.l.b16 %v562
  %v664 = vunpack.c.l.b16 %v563
  %v665 = vunpack.c.h.b16 %v563
  %v666 = vunpack.c.l.b16 %v564
  %v667 = vunpack.c.l.b16 %v565
  %v668 = vunpack.c.h.b16 %v565
  %v669 = vunpack.c.l.b16 %v566
  %v670 = vunpack.c.l.b16 %v567
  %v671 = vunpack.c.h.b16 %v567
  %v672 = vunpack.c.l.b16 %v568
  %v673 = vunpack.c.l.b16 %v569
  %v674 = vunpack.c.h.b16 %v569
  %v675 = vunpack.c.l.b16 %v570
  %v676 = vunpack.c.l.b16 %v571
  %v677 = vunpack.c.h.b16 %v571
  %v678 = vunpack.c.l.b16 %v572
  %v679 = vunpack.c.l.b16 %v573
  %v680 = vunpack.c.h.b16 %v573
  %v681 = vunpack.c.l.b16 %v574
  %v682 = vunpack.c.l.b16 %v575
  %v683 = vunpack.c.h.b16 %v575
  %v684 = vunpack.c.l.b16 %v576
  %v685 = vunpack.c.l.b16 %v577
  %v686 = vunpack.c.h.b16 %v577
  %v687 = vunpack.c.l.b16 %v578
  %v688 = vunpack.c.l.b16 %v579
  %v689 = vunpack.c.h.b16 %v579
  %v690 = vunpack.c.l.b16 %v580
  %v691 = vunpack.c.l.b16 %v581
  %v692 = vunpack.c.h.b16 %v581
  %v693 = vunpack.c.l.b16 %v582
  %v694 = vunpack.c.l.b16 %v583
  %v695 = vunpack.c.h.b16 %v583
  %v696 = vunpack.c.l.b16 %v584
  %v697 = vunpack.c.l.b16 %v585
  %v698 = vunpack.c.h.b16 %v585
  %v699 = vunpack.c.l.b16 %v586
  %v700 = vunpack.c.l.b16 %v587
  %v701 = vunpack.c.h.b16 %v587
  %v702 = vunpack.c.l.b16 %v588
  %v703 = vunpack.c.l.b16 %v589
  %v704 = vunpack.c.h.b16 %v589
  %v705 = vunpack.c.l.b16 %v590
  %v706 = vunpack.c.l.b16 %v591
  %v707 = vunpack.c.h.b16 %v591
  %v708 = vunpack.c.l.b16 %v592
  %v709 = vunpack.c.l.b16 %v593
  %v710 = vunpack.c.h.b16 %v593
  %v711 = vunpack.c.l.b16 %v594
  %v712 = vunpack.c.l.b16 %v595
  %v713 = vunpack.c.h.b16 %v595
  %v714 = vunpack.c.l.b16 %v596
  %v715 = vunpack.c.l.b16 %v597
  %v716 = vunpack.c.h.b16 %v597
  %v717 = vunpack.c.l.b16 %v598
  %v718 = vunpack.c.l.b16 %v599
  %v719 = vunpack.c.h.b16 %v599
  %v720 = vunpack.c.l.b16 %v600
  %v721 = vpack.c.b16 %v652, %v649
  %v722 = vpack.c.b16 %v653, %v650
  %v723 = vpack.c.b16 %v654, %v651
  %v724 = vpack.c.b16 %v658, %v655
  %v725 = vpack.c.b16 %v659, %v656
  %v726 = vpack.c.b16 %v660, %v657
  %v727 = vpack.c.b16 %v664, %v661
  %v728 = vpack.c.b16 %v665, %v662
  %v729 = vpack.c.b16 %v666, %v663
  %v730 = vpack.c.b16 %v670, %v667
  %v731 = vpack.c.b16 %v671, %v668
  %v732 = vpack.c.b16 %v672, %v669
  %v733 = vpack.c.b16 %v676, %v673
  %v734 = vpack.c.b16 %v677, %v674
  %v735 = vpack.c.b16 %v678, %v675
  %v736 = vpack.c.b16 %v682, %v679
  %v737 = vpack.c.b16 %v683, %v680
  %v738 = vpack.c.b16 %v684, %v681
  %v739 = vpack.c.b16 %v688, %v685
  %v740 = vpack.c.b16 %v689, %v686
  %v741 = vpack.c.b16 %v690, %v687
  %v742 = vpack.c.b16 %v694, %v691
  %v743 = vpack.c.b16 %v695, %v692
  %v744 = vpack.c.b16 %v696, %v693
  %v745 = vpack.c.b16 %v700, %v697
  %v746 = vpack.c.b16 %v701, %v698
  %v747 = vpack.c.b16 %v702, %v699
  %v748 = vpack.c.b16 %v706, %v703
  %v749 = vpack.c.b16 %v707, %v704
  %v750 = vpack.c.b16 %v708, %v705
  %v751 = vpack.c.b16 %v712, %v709
  %v752 = vpack.c.b16 %v713, %v710
  %v753 = vpack.c.b16 %v714, %v711
  %v754 = vpack.c.b16 %v718, %v715
  %v755 = vpack.c.b16 %v719, %v716
  %v756 = vpack.c.b16 %v720, %v717
  %793 = vmatprep.subr.bf16.mxu0 %v722
  %794 = vmatpush1.bf16.msra.mxu0 %v721
  %795 = vmatprep.subr.bf16.mxu0 %v725
  %796 = vmatpush1.bf16.msra.mxu0 %v724
  %797 = vmatprep.subr.bf16.mxu0 %v728
  %798 = vmatpush1.bf16.msra.mxu0 %v727
  %799 = vmatprep.subr.bf16.mxu0 %v731
  %800 = vmatpush1.bf16.msra.mxu0 %v730
  %801 = vmatprep.subr.bf16.mxu0 %v734
  %802 = vmatpush1.bf16.msra.mxu0 %v733
  %803 = vmatprep.subr.bf16.mxu0 %v737
  %804 = vmatpush1.bf16.msra.mxu0 %v736
  %805 = vmatprep.subr.bf16.mxu0 %v740
  %806 = vmatpush1.bf16.msra.mxu0 %v739
  %807 = vmatprep.subr.bf16.mxu0 %v743
  %808 = vmatpush1.bf16.msra.mxu0 %v742
  %809 = vmatprep.subr.bf16.mxu0 %v746
  %810 = vmatpush1.bf16.msra.mxu0 %v745
  %811 = vmatprep.subr.bf16.mxu0 %v749
  %812 = vmatpush1.bf16.msra.mxu0 %v748
  %813 = vmatprep.subr.bf16.mxu0 %v752
  %814 = vmatpush1.bf16.msra.mxu0 %v751
  %815 = vmatprep.subr.bf16.mxu0 %v755
  %816 = vmatpush1.bf16.msra.mxu0 %v754
  %817 = vmatprep.subr.bf16.mxu0 0
  %818 = vmatpush1.bf16.msra.mxu0 0
  %819 = vmatprep.subr.bf16.mxu0 0
  %820 = vmatpush1.bf16.msra.mxu0 0
  %821 = vmatprep.subr.bf16.mxu0 0
  %822 = vmatpush1.bf16.msra.mxu0 0
  %823 = vmatprep.subr.bf16.mxu0 0
  %824 = vmatpush1.bf16.msra.mxu0 0
  %825 = vmatprep.mubr.bf16.mxu0 %v340
  %826 = vmatmul.mubr.bf16.gmra.mrb[0].mxu0 %v125
  %v827 = vpop.f32.mrb[0].mxu0
  %v828 = vadd.f32 0.0, %v827
  %v829 = vpop.f32.mrb[0].mxu0
  %v830 = vadd.f32 0.0, %v829
  %v831 = vpop.f32.mrb[0].mxu0
  %v832 = vadd.f32 0.0, %v831
  %v833 = vpop.f32.mrb[0].mxu0
  %v834 = vadd.f32 0.0, %v833
  %835 = vmatprep.mubr.bf16.mxu0 %v343
  %836 = vmatmul.mubr.bf16.gmra.mrb[0].mxu0 %v127
  %v837 = vpop.f32.mrb[0].mxu0
  %v838 = vadd.f32 0.0, %v837
  %v839 = vpop.f32.mrb[0].mxu0
  %v840 = vadd.f32 0.0, %v839
  %v841 = vpop.f32.mrb[0].mxu0
  %v842 = vadd.f32 0.0, %v841
  %v843 = vpop.f32.mrb[0].mxu0
  %v844 = vadd.f32 0.0, %v843
  %845 = vmatprep.mubr.bf16.mxu0 %v346
  %846 = vmatmul.mubr.bf16.gmra.mrb[0].mxu0 %v129
  %v847 = vpop.f32.mrb[0].mxu0
  %v848 = vadd.f32 0.0, %v847
  %v849 = vpop.f32.mrb[0].mxu0
  %v850 = vadd.f32 0.0, %v849
  %v851 = vpop.f32.mrb[0].mxu0
  %v852 = vadd.f32 0.0, %v851
  %v853 = vpop.f32.mrb[0].mxu0
  %v854 = vadd.f32 0.0, %v853
  %855 = vmatprep.mubr.bf16.mxu0 %v349
  %856 = vmatmul.mubr.bf16.gmra.mrb[0].mxu0 %v131
  %v857 = vpop.f32.mrb[0].mxu0
  %v858 = vadd.f32 0.0, %v857
  %v859 = vpop.f32.mrb[0].mxu0
  %v860 = vadd.f32 0.0, %v859
  %v861 = vpop.f32.mrb[0].mxu0
  %v862 = vadd.f32 0.0, %v861
  %v863 = vpop.f32.mrb[0].mxu0
  %v864 = vadd.f32 0.0, %v863
  %865 = vmatprep.mubr.bf16.mxu0 %v352
  %866 = vmatmul.mubr.bf16.gmra.mrb[0].mxu0 %v133
  %v867 = vpop.f32.mrb[0].mxu0
  %v868 = vadd.f32 0.0, %v867
  %v869 = vpop.f32.mrb[0].mxu0
  %v870 = vadd.f32 0.0, %v869
  %v871 = vpop.f32.mrb[0].mxu0
  %v872 = vadd.f32 0.0, %v871
  %v873 = vpop.f32.mrb[0].mxu0
  %v874 = vadd.f32 0.0, %v873
  %875 = vmatprep.mubr.bf16.mxu0 %v355
  %876 = vmatmul.mubr.bf16.gmra.mrb[0].mxu0 %v135
  %v877 = vpop.f32.mrb[0].mxu0
  %v878 = vadd.f32 0.0, %v877
  %v879 = vpop.f32.mrb[0].mxu0
  %v880 = vadd.f32 0.0, %v879
  %v881 = vpop.f32.mrb[0].mxu0
  %v882 = vadd.f32 0.0, %v881
  %v883 = vpop.f32.mrb[0].mxu0
  %v884 = vadd.f32 0.0, %v883
  %885 = vmatprep.mubr.bf16.mxu0 %v358
  %886 = vmatmul.mubr.bf16.gmra.mrb[0].mxu0 %v137
  %v887 = vpop.f32.mrb[0].mxu0
  %v888 = vadd.f32 0.0, %v887
  %v889 = vpop.f32.mrb[0].mxu0
  %v890 = vadd.f32 0.0, %v889
  %v891 = vpop.f32.mrb[0].mxu0
  %v892 = vadd.f32 0.0, %v891
  %v893 = vpop.f32.mrb[0].mxu0
  %v894 = vadd.f32 0.0, %v893
  %895 = vdwg.mxu0
  %896 = vmatprep.subr.bf16.mxu0 0
  %897 = vmatpush1.bf16.msra.mxu0 %v723
  %898 = vmatprep.subr.bf16.mxu0 0
  %899 = vmatpush1.bf16.msra.mxu0 %v726
  %900 = vmatprep.subr.bf16.mxu0 0
  %901 = vmatpush1.bf16.msra.mxu0 %v729
  %902 = vmatprep.subr.bf16.mxu0 0
  %903 = vmatpush1.bf16.msra.mxu0 %v732
  %904 = vmatprep.subr.bf16.mxu0 0
  %905 = vmatpush1.bf16.msra.mxu0 %v735
  %906 = vmatprep.subr.bf16.mxu0 0
  %907 = vmatpush1.bf16.msra.mxu0 %v738
  %908 = vmatprep.subr.bf16.mxu0 0
  %909 = vmatpush1.bf16.msra.mxu0 %v741
  %910 = vmatprep.subr.bf16.mxu0 0
  %911 = vmatpush1.bf16.msra.mxu0 %v744
  %912 = vmatprep.subr.bf16.mxu0 0
  %913 = vmatpush1.bf16.msra.mxu0 %v747
  %914 = vmatprep.subr.bf16.mxu0 0
  %915 = vmatpush1.bf16.msra.mxu0 %v750
  %916 = vmatprep.subr.bf16.mxu0 0
  %917 = vmatpush1.bf16.msra.mxu0 %v753
  %918 = vmatprep.subr.bf16.mxu0 0
  %919 = vmatpush1.bf16.msra.mxu0 %v756
  %920 = vmatprep.subr.bf16.mxu0 0
  %921 = vmatpush1.bf16.msra.mxu0 0
  %922 = vmatprep.subr.bf16.mxu0 0
  %923 = vmatpush1.bf16.msra.mxu0 0
  %924 = vmatprep.subr.bf16.mxu0 0
  %925 = vmatpush1.bf16.msra.mxu0 0
  %926 = vmatprep.subr.bf16.mxu0 0
  %927 = vmatpush1.bf16.msra.mxu0 0
  %928 = vmatprep.mubr.bf16.mxu0 %v340
  %929 = vmatmul.mubr.bf16.gmra.mrb[0].mxu0 %v125
  %v930 = vpop.f32.mrb[0].mxu0
  %v931 = vadd.f32 0.0, %v930
  %v932 = vpop.f32.mrb[0].mxu0
  %v933 = vpop.f32.mrb[0].mxu0
  %v934 = vadd.f32 0.0, %v933
  %v935 = vpop.f32.mrb[0].mxu0
  %936 = vmatprep.mubr.bf16.mxu0 %v343
  %937 = vmatmul.mubr.bf16.gmra.mrb[0].mxu0 %v127
  %v938 = vpop.f32.mrb[0].mxu0
  %v939 = vadd.f32 0.0, %v938
  %v940 = vpop.f32.mrb[0].mxu0
  %v941 = vpop.f32.mrb[0].mxu0
  %v942 = vadd.f32 0.0, %v941
  %v943 = vpop.f32.mrb[0].mxu0
  %944 = vmatprep.mubr.bf16.mxu0 %v346
  %945 = vmatmul.mubr.bf16.gmra.mrb[0].mxu0 %v129
  %v946 = vpop.f32.mrb[0].mxu0
  %v947 = vadd.f32 0.0, %v946
  %v948 = vpop.f32.mrb[0].mxu0
  %v949 = vpop.f32.mrb[0].mxu0
  %v950 = vadd.f32 0.0, %v949
  %v951 = vpop.f32.mrb[0].mxu0
  %952 = vmatprep.mubr.bf16.mxu0 %v349
  %953 = vmatmul.mubr.bf16.gmra.mrb[0].mxu0 %v131
  %v954 = vpop.f32.mrb[0].mxu0
  %v955 = vadd.f32 0.0, %v954
  %v956 = vpop.f32.mrb[0].mxu0
  %v957 = vpop.f32.mrb[0].mxu0
  %v958 = vadd.f32 0.0, %v957
  %v959 = vpop.f32.mrb[0].mxu0
  %960 = vmatprep.mubr.bf16.mxu0 %v352
  %961 = vmatmul.mubr.bf16.gmra.mrb[0].mxu0 %v133
  %v962 = vpop.f32.mrb[0].mxu0
  %v963 = vadd.f32 0.0, %v962
  %v964 = vpop.f32.mrb[0].mxu0
  %v965 = vpop.f32.mrb[0].mxu0
  %v966 = vadd.f32 0.0, %v965
  %v967 = vpop.f32.mrb[0].mxu0
  %968 = vmatprep.mubr.bf16.mxu0 %v355
  %969 = vmatmul.mubr.bf16.gmra.mrb[0].mxu0 %v135
  %v970 = vpop.f32.mrb[0].mxu0
  %v971 = vadd.f32 0.0, %v970
  %v972 = vpop.f32.mrb[0].mxu0
  %v973 = vpop.f32.mrb[0].mxu0
  %v974 = vadd.f32 0.0, %v973
  %v975 = vpop.f32.mrb[0].mxu0
  %976 = vmatprep.mubr.bf16.mxu0 %v358
  %977 = vmatmul.mubr.bf16.gmra.mrb[0].mxu0 %v137
  %v978 = vpop.f32.mrb[0].mxu0
  %v979 = vadd.f32 0.0, %v978
  %v980 = vpop.f32.mrb[0].mxu0
  %v981 = vpop.f32.mrb[0].mxu0
  %v982 = vadd.f32 0.0, %v981
  %v983 = vpop.f32.mrb[0].mxu0
  %984 = vdwg.mxu0
  %v985 = vmax.f32 %v395, %v828
  %v986 = vmax.f32 %v397, %v830
  %v987 = vmax.f32 %v498, %v931
  %v988 = vmax.f32 %v399, %v832
  %v989 = vmax.f32 %v401, %v834
  %v990 = vmax.f32 %v501, %v934
  %v991 = vmax.f32 %v405, %v838
  %v992 = vmax.f32 %v407, %v840
  %v993 = vmax.f32 %v506, %v939
  %v994 = vmax.f32 %v409, %v842
  %v995 = vmax.f32 %v411, %v844
  %v996 = vmax.f32 %v509, %v942
  %v997 = vmax.f32 %v415, %v848
  %v998 = vmax.f32 %v417, %v850
  %v999 = vmax.f32 %v514, %v947
  %v1000 = vmax.f32 %v419, %v852
  %v1001 = vmax.f32 %v421, %v854
  %v1002 = vmax.f32 %v517, %v950
  %v1003 = vmax.f32 %v425, %v858
  %v1004 = vmax.f32 %v427, %v860
  %v1005 = vmax.f32 %v522, %v955
  %v1006 = vmax.f32 %v429, %v862
  %v1007 = vmax.f32 %v431, %v864
  %v1008 = vmax.f32 %v525, %v958
  %v1009 = vmax.f32 %v435, %v868
  %v1010 = vmax.f32 %v437, %v870
  %v1011 = vmax.f32 %v530, %v963
  %v1012 = vmax.f32 %v439, %v872
  %v1013 = vmax.f32 %v441, %v874
  %v1014 = vmax.f32 %v533, %v966
  %v1015 = vmax.f32 %v445, %v878
  %v1016 = vmax.f32 %v447, %v880
  %v1017 = vmax.f32 %v538, %v971
  %v1018 = vmax.f32 %v449, %v882
  %v1019 = vmax.f32 %v451, %v884
  %v1020 = vmax.f32 %v541, %v974
  %v1021 = vmax.f32 %v455, %v888
  %v1022 = vmax.f32 %v457, %v890
  %v1023 = vmax.f32 %v546, %v979
  %v1024 = vmax.f32 %v459, %v892
  %v1025 = vmax.f32 %v461, %v894
  %v1026 = vmax.f32 %v549, %v982
  %s1027 = scalar_lea.vmem %s1, 576
  %v1028 = vld [vmem:[%s1027] sm:$0xff]
  %v1029 = vld [vmem:[%s1027 + $0x8] sm:$0xf]
  %v1030 = vld [vmem:[%s1027 + $0xc] sm:$0xff]
  %v1031 = vld [vmem:[%s1027 + $0x14] sm:$0xf]
  %v1032 = vld [vmem:[%s1027 + $0x18] sm:$0xff]
  %v1033 = vld [vmem:[%s1027 + $0x20] sm:$0xf]
  %v1034 = vld [vmem:[%s1027 + $0x24] sm:$0xff]
  %v1035 = vld [vmem:[%s1027 + $0x2c] sm:$0xf]
  %v1036 = vld [vmem:[%s1027 + $0x30] sm:$0xff]
  %v1037 = vld [vmem:[%s1027 + $0x38] sm:$0xf]
  %v1038 = vld [vmem:[%s1027 + $0x3c] sm:$0xff]
  %v1039 = vld [vmem:[%s1027 + $0x44] sm:$0xf]
  %v1040 = vld [vmem:[%s1027 + $0x48] sm:$0xff]
  %v1041 = vld [vmem:[%s1027 + $0x50] sm:$0xf]
  %v1042 = vld [vmem:[%s1027 + $0x54] sm:$0xff]
  %v1043 = vld [vmem:[%s1027 + $0x5c] sm:$0xf]
  %v1044 = vld [vmem:[%s1027 + $0x60] sm:$0xff]
  %v1045 = vld [vmem:[%s1027 + $0x68] sm:$0xf]
  %v1046 = vld [vmem:[%s1027 + $0x6c] sm:$0xff]
  %v1047 = vld [vmem:[%s1027 + $0x74] sm:$0xf]
  %v1048 = vld [vmem:[%s1027 + $0x78] sm:$0xff]
  %v1049 = vld [vmem:[%s1027 + $0x80] sm:$0xf]
  %v1050 = vld [vmem:[%s1027 + $0x84] sm:$0xff]
  %v1051 = vld [vmem:[%s1027 + $0x8c] sm:$0xf]
  %v1052 = vld [vmem:[%s1027 + $0x90] sm:$0xff]
  %v1053 = vld [vmem:[%s1027 + $0x98] sm:$0xf]
  %v1054 = vld [vmem:[%s1027 + $0x9c] sm:$0xff]
  %v1055 = vld [vmem:[%s1027 + $0xa4] sm:$0xf]
  %v1056 = vld [vmem:[%s1027 + $0xa8] sm:$0xff]
  %v1057 = vld [vmem:[%s1027 + $0xb0] sm:$0xf]
  %v1058 = vld [vmem:[%s1027 + $0xb4] sm:$0xff]
  %v1059 = vld [vmem:[%s1027 + $0xbc] sm:$0xf]
  %v1060 = vld [vmem:[%s1027 + $0xc0] sm:$0xff]
  %v1061 = vld [vmem:[%s1027 + $0xc8] sm:$0xf]
  %v1062 = vld [vmem:[%s1027 + $0xcc] sm:$0xff]
  %v1063 = vld [vmem:[%s1027 + $0xd4] sm:$0xf]
  %v1064 = vld [vmem:[%s1027 + $0xd8] sm:$0xff]
  %v1065 = vld [vmem:[%s1027 + $0xe0] sm:$0xf]
  %v1066 = vld [vmem:[%s1027 + $0xe4] sm:$0xff]
  %v1067 = vld [vmem:[%s1027 + $0xec] sm:$0xf]
  %v1068 = vld [vmem:[%s1027 + $0xf0] sm:$0xff]
  %v1069 = vld [vmem:[%s1027 + $0xf8] sm:$0xf]
  %v1070 = vld [vmem:[%s1027 + $0xfc] sm:$0xff]
  %v1071 = vld [vmem:[%s1027 + $0x104] sm:$0xf]
  %v1072 = vld [vmem:[%s1027 + $0x108] sm:$0xff]
  %v1073 = vld [vmem:[%s1027 + $0x110] sm:$0xf]
  %v1074 = vld [vmem:[%s1027 + $0x114] sm:$0xff]
  %v1075 = vld [vmem:[%s1027 + $0x11c] sm:$0xf]
  %v1124 = vunpack.c.l.b16 %v1028
  %v1125 = vunpack.c.h.b16 %v1028
  %v1126 = vunpack.c.l.b16 %v1029
  %v1127 = vunpack.c.l.b16 %v1030
  %v1128 = vunpack.c.h.b16 %v1030
  %v1129 = vunpack.c.l.b16 %v1031
  %v1130 = vunpack.c.l.b16 %v1032
  %v1131 = vunpack.c.h.b16 %v1032
  %v1132 = vunpack.c.l.b16 %v1033
  %v1133 = vunpack.c.l.b16 %v1034
  %v1134 = vunpack.c.h.b16 %v1034
  %v1135 = vunpack.c.l.b16 %v1035
  %v1136 = vunpack.c.l.b16 %v1036
  %v1137 = vunpack.c.h.b16 %v1036
  %v1138 = vunpack.c.l.b16 %v1037
  %v1139 = vunpack.c.l.b16 %v1038
  %v1140 = vunpack.c.h.b16 %v1038
  %v1141 = vunpack.c.l.b16 %v1039
  %v1142 = vunpack.c.l.b16 %v1040
  %v1143 = vunpack.c.h.b16 %v1040
  %v1144 = vunpack.c.l.b16 %v1041
  %v1145 = vunpack.c.l.b16 %v1042
  %v1146 = vunpack.c.h.b16 %v1042
  %v1147 = vunpack.c.l.b16 %v1043
  %v1148 = vunpack.c.l.b16 %v1044
  %v1149 = vunpack.c.h.b16 %v1044
  %v1150 = vunpack.c.l.b16 %v1045
  %v1151 = vunpack.c.l.b16 %v1046
  %v1152 = vunpack.c.h.b16 %v1046
  %v1153 = vunpack.c.l.b16 %v1047
  %v1154 = vunpack.c.l.b16 %v1048
  %v1155 = vunpack.c.h.b16 %v1048
  %v1156 = vunpack.c.l.b16 %v1049
  %v1157 = vunpack.c.l.b16 %v1050
  %v1158 = vunpack.c.h.b16 %v1050
  %v1159 = vunpack.c.l.b16 %v1051
  %v1160 = vunpack.c.l.b16 %v1052
  %v1161 = vunpack.c.h.b16 %v1052
  %v1162 = vunpack.c.l.b16 %v1053
  %v1163 = vunpack.c.l.b16 %v1054
  %v1164 = vunpack.c.h.b16 %v1054
  %v1165 = vunpack.c.l.b16 %v1055
  %v1166 = vunpack.c.l.b16 %v1056
  %v1167 = vunpack.c.h.b16 %v1056
  %v1168 = vunpack.c.l.b16 %v1057
  %v1169 = vunpack.c.l.b16 %v1058
  %v1170 = vunpack.c.h.b16 %v1058
  %v1171 = vunpack.c.l.b16 %v1059
  %v1172 = vunpack.c.l.b16 %v1060
  %v1173 = vunpack.c.h.b16 %v1060
  %v1174 = vunpack.c.l.b16 %v1061
  %v1175 = vunpack.c.l.b16 %v1062
  %v1176 = vunpack.c.h.b16 %v1062
  %v1177 = vunpack.c.l.b16 %v1063
  %v1178 = vunpack.c.l.b16 %v1064
  %v1179 = vunpack.c.h.b16 %v1064
  %v1180 = vunpack.c.l.b16 %v1065
  %v1181 = vunpack.c.l.b16 %v1066
  %v1182 = vunpack.c.h.b16 %v1066
  %v1183 = vunpack.c.l.b16 %v1067
  %v1184 = vunpack.c.l.b16 %v1068
  %v1185 = vunpack.c.h.b16 %v1068
  %v1186 = vunpack.c.l.b16 %v1069
  %v1187 = vunpack.c.l.b16 %v1070
  %v1188 = vunpack.c.h.b16 %v1070
  %v1189 = vunpack.c.l.b16 %v1071
  %v1190 = vunpack.c.l.b16 %v1072
  %v1191 = vunpack.c.h.b16 %v1072
  %v1192 = vunpack.c.l.b16 %v1073
  %v1193 = vunpack.c.l.b16 %v1074
  %v1194 = vunpack.c.h.b16 %v1074
  %v1195 = vunpack.c.l.b16 %v1075
  %v1196 = vpack.c.b16 %v1127, %v1124
  %v1197 = vpack.c.b16 %v1128, %v1125
  %v1198 = vpack.c.b16 %v1129, %v1126
  %v1199 = vpack.c.b16 %v1133, %v1130
  %v1200 = vpack.c.b16 %v1134, %v1131
  %v1201 = vpack.c.b16 %v1135, %v1132
  %v1202 = vpack.c.b16 %v1139, %v1136
  %v1203 = vpack.c.b16 %v1140, %v1137
  %v1204 = vpack.c.b16 %v1141, %v1138
  %v1205 = vpack.c.b16 %v1145, %v1142
  %v1206 = vpack.c.b16 %v1146, %v1143
  %v1207 = vpack.c.b16 %v1147, %v1144
  %v1208 = vpack.c.b16 %v1151, %v1148
  %v1209 = vpack.c.b16 %v1152, %v1149
  %v1210 = vpack.c.b16 %v1153, %v1150
  %v1211 = vpack.c.b16 %v1157, %v1154
  %v1212 = vpack.c.b16 %v1158, %v1155
  %v1213 = vpack.c.b16 %v1159, %v1156
  %v1214 = vpack.c.b16 %v1163, %v1160
  %v1215 = vpack.c.b16 %v1164, %v1161
  %v1216 = vpack.c.b16 %v1165, %v1162
  %v1217 = vpack.c.b16 %v1169, %v1166
  %v1218 = vpack.c.b16 %v1170, %v1167
  %v1219 = vpack.c.b16 %v1171, %v1168
  %v1220 = vpack.c.b16 %v1175, %v1172
  %v1221 = vpack.c.b16 %v1176, %v1173
  %v1222 = vpack.c.b16 %v1177, %v1174
  %v1223 = vpack.c.b16 %v1181, %v1178
  %v1224 = vpack.c.b16 %v1182, %v1179
  %v1225 = vpack.c.b16 %v1183, %v1180
  %v1226 = vpack.c.b16 %v1187, %v1184
  %v1227 = vpack.c.b16 %v1188, %v1185
  %v1228 = vpack.c.b16 %v1189, %v1186
  %v1229 = vpack.c.b16 %v1193, %v1190
  %v1230 = vpack.c.b16 %v1194, %v1191
  %v1231 = vpack.c.b16 %v1195, %v1192
  %1268 = vmatprep.subr.bf16.mxu0 %v1197
  %1269 = vmatpush1.bf16.msra.mxu0 %v1196
  %1270 = vmatprep.subr.bf16.mxu0 %v1200
  %1271 = vmatpush1.bf16.msra.mxu0 %v1199
  %1272 = vmatprep.subr.bf16.mxu0 %v1203
  %1273 = vmatpush1.bf16.msra.mxu0 %v1202
  %1274 = vmatprep.subr.bf16.mxu0 %v1206
  %1275 = vmatpush1.bf16.msra.mxu0 %v1205
  %1276 = vmatprep.subr.bf16.mxu0 %v1209
  %1277 = vmatpush1.bf16.msra.mxu0 %v1208
  %1278 = vmatprep.subr.bf16.mxu0 %v1212
  %1279 = vmatpush1.bf16.msra.mxu0 %v1211
  %1280 = vmatprep.subr.bf16.mxu0 %v1215
  %1281 = vmatpush1.bf16.msra.mxu0 %v1214
  %1282 = vmatprep.subr.bf16.mxu0 %v1218
  %1283 = vmatpush1.bf16.msra.mxu0 %v1217
  %1284 = vmatprep.subr.bf16.mxu0 %v1221
  %1285 = vmatpush1.bf16.msra.mxu0 %v1220
  %1286 = vmatprep.subr.bf16.mxu0 %v1224
  %1287 = vmatpush1.bf16.msra.mxu0 %v1223
  %1288 = vmatprep.subr.bf16.mxu0 %v1227
  %1289 = vmatpush1.bf16.msra.mxu0 %v1226
  %1290 = vmatprep.subr.bf16.mxu0 %v1230
  %1291 = vmatpush1.bf16.msra.mxu0 %v1229
  %1292 = vmatprep.subr.bf16.mxu0 0
  %1293 = vmatpush1.bf16.msra.mxu0 0
  %1294 = vmatprep.subr.bf16.mxu0 0
  %1295 = vmatpush1.bf16.msra.mxu0 0
  %1296 = vmatprep.subr.bf16.mxu0 0
  %1297 = vmatpush1.bf16.msra.mxu0 0
  %1298 = vmatprep.subr.bf16.mxu0 0
  %1299 = vmatpush1.bf16.msra.mxu0 0
  %1300 = vmatprep.mubr.bf16.mxu0 %v340
  %1301 = vmatmul.mubr.bf16.gmra.mrb[0].mxu0 %v125
  %v1302 = vpop.f32.mrb[0].mxu0
  %v1303 = vadd.f32 0.0, %v1302
  %v1304 = vpop.f32.mrb[0].mxu0
  %v1305 = vadd.f32 0.0, %v1304
  %v1306 = vpop.f32.mrb[0].mxu0
  %v1307 = vadd.f32 0.0, %v1306
  %v1308 = vpop.f32.mrb[0].mxu0
  %v1309 = vadd.f32 0.0, %v1308
  %1310 = vmatprep.mubr.bf16.mxu0 %v343
  %1311 = vmatmul.mubr.bf16.gmra.mrb[0].mxu0 %v127
  %v1312 = vpop.f32.mrb[0].mxu0
  %v1313 = vadd.f32 0.0, %v1312
  %v1314 = vpop.f32.mrb[0].mxu0
  %v1315 = vadd.f32 0.0, %v1314
  %v1316 = vpop.f32.mrb[0].mxu0
  %v1317 = vadd.f32 0.0, %v1316
  %v1318 = vpop.f32.mrb[0].mxu0
  %v1319 = vadd.f32 0.0, %v1318
  %1320 = vmatprep.mubr.bf16.mxu0 %v346
  %1321 = vmatmul.mubr.bf16.gmra.mrb[0].mxu0 %v129
  %v1322 = vpop.f32.mrb[0].mxu0
  %v1323 = vadd.f32 0.0, %v1322
  %v1324 = vpop.f32.mrb[0].mxu0
  %v1325 = vadd.f32 0.0, %v1324
  %v1326 = vpop.f32.mrb[0].mxu0
  %v1327 = vadd.f32 0.0, %v1326
  %v1328 = vpop.f32.mrb[0].mxu0
  %v1329 = vadd.f32 0.0, %v1328
  %1330 = vmatprep.mubr.bf16.mxu0 %v349
  %1331 = vmatmul.mubr.bf16.gmra.mrb[0].mxu0 %v131
  %v1332 = vpop.f32.mrb[0].mxu0
  %v1333 = vadd.f32 0.0, %v1332
  %v1334 = vpop.f32.mrb[0].mxu0
  %v1335 = vadd.f32 0.0, %v1334
  %v1336 = vpop.f32.mrb[0].mxu0
  %v1337 = vadd.f32 0.0, %v1336
  %v1338 = vpop.f32.mrb[0].mxu0
  %v1339 = vadd.f32 0.0, %v1338
  %1340 = vmatprep.mubr.bf16.mxu0 %v352
  %1341 = vmatmul.mubr.bf16.gmra.mrb[0].mxu0 %v133
  %v1342 = vpop.f32.mrb[0].mxu0
  %v1343 = vadd.f32 0.0, %v1342
  %v1344 = vpop.f32.mrb[0].mxu0
  %v1345 = vadd.f32 0.0, %v1344
  %v1346 = vpop.f32.mrb[0].mxu0
  %v1347 = vadd.f32 0.0, %v1346
  %v1348 = vpop.f32.mrb[0].mxu0
  %v1349 = vadd.f32 0.0, %v1348
  %1350 = vmatprep.mubr.bf16.mxu0 %v355
  %1351 = vmatmul.mubr.bf16.gmra.mrb[0].mxu0 %v135
  %v1352 = vpop.f32.mrb[0].mxu0
  %v1353 = vadd.f32 0.0, %v1352
  %v1354 = vpop.f32.mrb[0].mxu0
  %v1355 = vadd.f32 0.0, %v1354
  %v1356 = vpop.f32.mrb[0].mxu0
  %v1357 = vadd.f32 0.0, %v1356
  %v1358 = vpop.f32.mrb[0].mxu0
  %v1359 = vadd.f32 0.0, %v1358
  %1360 = vmatprep.mubr.bf16.mxu0 %v358
  %1361 = vmatmul.mubr.bf16.gmra.mrb[0].mxu0 %v137
  %v1362 = vpop.f32.mrb[0].mxu0
  %v1363 = vadd.f32 0.0, %v1362
  %v1364 = vpop.f32.mrb[0].mxu0
  %v1365 = vadd.f32 0.0, %v1364
  %v1366 = vpop.f32.mrb[0].mxu0
  %v1367 = vadd.f32 0.0, %v1366
  %v1368 = vpop.f32.mrb[0].mxu0
  %v1369 = vadd.f32 0.0, %v1368
  %1370 = vdwg.mxu0
  %1371 = vmatprep.subr.bf16.mxu0 0
  %1372 = vmatpush1.bf16.msra.mxu0 %v1198
  %1373 = vmatprep.subr.bf16.mxu0 0
  %1374 = vmatpush1.bf16.msra.mxu0 %v1201
  %1375 = vmatprep.subr.bf16.mxu0 0
  %1376 = vmatpush1.bf16.msra.mxu0 %v1204
  %1377 = vmatprep.subr.bf16.mxu0 0
  %1378 = vmatpush1.bf16.msra.mxu0 %v1207
  %1379 = vmatprep.subr.bf16.mxu0 0
  %1380 = vmatpush1.bf16.msra.mxu0 %v1210
  %1381 = vmatprep.subr.bf16.mxu0 0
  %1382 = vmatpush1.bf16.msra.mxu0 %v1213
  %1383 = vmatprep.subr.bf16.mxu0 0
  %1384 = vmatpush1.bf16.msra.mxu0 %v1216
  %1385 = vmatprep.subr.bf16.mxu0 0
  %1386 = vmatpush1.bf16.msra.mxu0 %v1219
  %1387 = vmatprep.subr.bf16.mxu0 0
  %1388 = vmatpush1.bf16.msra.mxu0 %v1222
  %1389 = vmatprep.subr.bf16.mxu0 0
  %1390 = vmatpush1.bf16.msra.mxu0 %v1225
  %1391 = vmatprep.subr.bf16.mxu0 0
  %1392 = vmatpush1.bf16.msra.mxu0 %v1228
  %1393 = vmatprep.subr.bf16.mxu0 0
  %1394 = vmatpush1.bf16.msra.mxu0 %v1231
  %1395 = vmatprep.subr.bf16.mxu0 0
  %1396 = vmatpush1.bf16.msra.mxu0 0
  %1397 = vmatprep.subr.bf16.mxu0 0
  %1398 = vmatpush1.bf16.msra.mxu0 0
  %1399 = vmatprep.subr.bf16.mxu0 0
  %1400 = vmatpush1.bf16.msra.mxu0 0
  %1401 = vmatprep.subr.bf16.mxu0 0
  %1402 = vmatpush1.bf16.msra.mxu0 0
  %1403 = vmatprep.mubr.bf16.mxu0 %v340
  %1404 = vmatmul.mubr.bf16.gmra.mrb[0].mxu0 %v125
  %v1405 = vpop.f32.mrb[0].mxu0
  %v1406 = vadd.f32 0.0, %v1405
  %v1407 = vpop.f32.mrb[0].mxu0
  %v1408 = vpop.f32.mrb[0].mxu0
  %v1409 = vadd.f32 0.0, %v1408
  %v1410 = vpop.f32.mrb[0].mxu0
  %1411 = vmatprep.mubr.bf16.mxu0 %v343
  %1412 = vmatmul.mubr.bf16.gmra.mrb[0].mxu0 %v127
  %v1413 = vpop.f32.mrb[0].mxu0
  %v1414 = vadd.f32 0.0, %v1413
  %v1415 = vpop.f32.mrb[0].mxu0
  %v1416 = vpop.f32.mrb[0].mxu0
  %v1417 = vadd.f32 0.0, %v1416
  %v1418 = vpop.f32.mrb[0].mxu0
  %1419 = vmatprep.mubr.bf16.mxu0 %v346
  %1420 = vmatmul.mubr.bf16.gmra.mrb[0].mxu0 %v129
  %v1421 = vpop.f32.mrb[0].mxu0
  %v1422 = vadd.f32 0.0, %v1421
  %v1423 = vpop.f32.mrb[0].mxu0
  %v1424 = vpop.f32.mrb[0].mxu0
  %v1425 = vadd.f32 0.0, %v1424
  %v1426 = vpop.f32.mrb[0].mxu0
  %1427 = vmatprep.mubr.bf16.mxu0 %v349
  %1428 = vmatmul.mubr.bf16.gmra.mrb[0].mxu0 %v131
  %v1429 = vpop.f32.mrb[0].mxu0
  %v1430 = vadd.f32 0.0, %v1429
  %v1431 = vpop.f32.mrb[0].mxu0
  %v1432 = vpop.f32.mrb[0].mxu0
  %v1433 = vadd.f32 0.0, %v1432
  %v1434 = vpop.f32.mrb[0].mxu0
  %1435 = vmatprep.mubr.bf16.mxu0 %v352
  %1436 = vmatmul.mubr.bf16.gmra.mrb[0].mxu0 %v133
  %v1437 = vpop.f32.mrb[0].mxu0
  %v1438 = vadd.f32 0.0, %v1437
  %v1439 = vpop.f32.mrb[0].mxu0
  %v1440 = vpop.f32.mrb[0].mxu0
  %v1441 = vadd.f32 0.0, %v1440
  %v1442 = vpop.f32.mrb[0].mxu0
  %1443 = vmatprep.mubr.bf16.mxu0 %v355
  %1444 = vmatmul.mubr.bf16.gmra.mrb[0].mxu0 %v135
  %v1445 = vpop.f32.mrb[0].mxu0
  %v1446 = vadd.f32 0.0, %v1445
  %v1447 = vpop.f32.mrb[0].mxu0
  %v1448 = vpop.f32.mrb[0].mxu0
  %v1449 = vadd.f32 0.0, %v1448
  %v1450 = vpop.f32.mrb[0].mxu0
  %1451 = vmatprep.mubr.bf16.mxu0 %v358
  %1452 = vmatmul.mubr.bf16.gmra.mrb[0].mxu0 %v137
  %v1453 = vpop.f32.mrb[0].mxu0
  %v1454 = vadd.f32 0.0, %v1453
  %v1455 = vpop.f32.mrb[0].mxu0
  %v1456 = vpop.f32.mrb[0].mxu0
  %v1457 = vadd.f32 0.0, %v1456
  %v1458 = vpop.f32.mrb[0].mxu0
  %1459 = vdwg.mxu0
  %v1460 = vmax.f32 %v985, %v1303
  %v1461 = vmax.f32 %v986, %v1305
  %v1462 = vmax.f32 %v987, %v1406
  %v1463 = vmax.f32 %v988, %v1307
  %v1464 = vmax.f32 %v989, %v1309
  %v1465 = vmax.f32 %v990, %v1409
  %v1466 = vmax.f32 %v991, %v1313
  %v1467 = vmax.f32 %v992, %v1315
  %v1468 = vmax.f32 %v993, %v1414
  %v1469 = vmax.f32 %v994, %v1317
  %v1470 = vmax.f32 %v995, %v1319
  %v1471 = vmax.f32 %v996, %v1417
  %v1472 = vmax.f32 %v997, %v1323
  %v1473 = vmax.f32 %v998, %v1325
  %v1474 = vmax.f32 %v999, %v1422
  %v1475 = vmax.f32 %v1000, %v1327
  %v1476 = vmax.f32 %v1001, %v1329
  %v1477 = vmax.f32 %v1002, %v1425
  %v1478 = vmax.f32 %v1003, %v1333
  %v1479 = vmax.f32 %v1004, %v1335
  %v1480 = vmax.f32 %v1005, %v1430
  %v1481 = vmax.f32 %v1006, %v1337
  %v1482 = vmax.f32 %v1007, %v1339
  %v1483 = vmax.f32 %v1008, %v1433
  %v1484 = vmax.f32 %v1009, %v1343
  %v1485 = vmax.f32 %v1010, %v1345
  %v1486 = vmax.f32 %v1011, %v1438
  %v1487 = vmax.f32 %v1012, %v1347
  %v1488 = vmax.f32 %v1013, %v1349
  %v1489 = vmax.f32 %v1014, %v1441
  %v1490 = vmax.f32 %v1015, %v1353
  %v1491 = vmax.f32 %v1016, %v1355
  %v1492 = vmax.f32 %v1017, %v1446
  %v1493 = vmax.f32 %v1018, %v1357
  %v1494 = vmax.f32 %v1019, %v1359
  %v1495 = vmax.f32 %v1020, %v1449
  %v1496 = vmax.f32 %v1021, %v1363
  %v1497 = vmax.f32 %v1022, %v1365
  %v1498 = vmax.f32 %v1023, %v1454
  %v1499 = vmax.f32 %v1024, %v1367
  %v1500 = vmax.f32 %v1025, %v1369
  %v1501 = vmax.f32 %v1026, %v1457
  %s1502 = scalar_lea.vmem %s1, 864
  %v1503 = vld [vmem:[%s1502] sm:$0xff]
  %v1504 = vld [vmem:[%s1502 + $0x8] sm:$0xf]
  %v1505 = vld [vmem:[%s1502 + $0xc] sm:$0xff]
  %v1506 = vld [vmem:[%s1502 + $0x14] sm:$0xf]
  %v1507 = vld [vmem:[%s1502 + $0x18] sm:$0xff]
  %v1508 = vld [vmem:[%s1502 + $0x20] sm:$0xf]
  %v1509 = vld [vmem:[%s1502 + $0x24] sm:$0xff]
  %v1510 = vld [vmem:[%s1502 + $0x2c] sm:$0xf]
  %v1511 = vld [vmem:[%s1502 + $0x30] sm:$0xff]
  %v1512 = vld [vmem:[%s1502 + $0x38] sm:$0xf]
  %v1513 = vld [vmem:[%s1502 + $0x3c] sm:$0xff]
  %v1514 = vld [vmem:[%s1502 + $0x44] sm:$0xf]
  %v1515 = vld [vmem:[%s1502 + $0x48] sm:$0xff]
  %v1516 = vld [vmem:[%s1502 + $0x50] sm:$0xf]
  %v1517 = vld [vmem:[%s1502 + $0x54] sm:$0xff]
  %v1518 = vld [vmem:[%s1502 + $0x5c] sm:$0xf]
  %v1519 = vld [vmem:[%s1502 + $0x60] sm:$0xff]
  %v1520 = vld [vmem:[%s1502 + $0x68] sm:$0xf]
  %v1521 = vld [vmem:[%s1502 + $0x6c] sm:$0xff]
  %v1522 = vld [vmem:[%s1502 + $0x74] sm:$0xf]
  %v1523 = vld [vmem:[%s1502 + $0x78] sm:$0xff]
  %v1524 = vld [vmem:[%s1502 + $0x80] sm:$0xf]
  %v1525 = vld [vmem:[%s1502 + $0x84] sm:$0xff]
  %v1526 = vld [vmem:[%s1502 + $0x8c] sm:$0xf]
  %v1527 = vld [vmem:[%s1502 + $0x90] sm:$0xff]
  %v1528 = vld [vmem:[%s1502 + $0x98] sm:$0xf]
  %v1529 = vld [vmem:[%s1502 + $0x9c] sm:$0xff]
  %v1530 = vld [vmem:[%s1502 + $0xa4] sm:$0xf]
  %v1531 = vld [vmem:[%s1502 + $0xa8] sm:$0xff]
  %v1532 = vld [vmem:[%s1502 + $0xb0] sm:$0xf]
  %v1533 = vld [vmem:[%s1502 + $0xb4] sm:$0xff]
  %v1534 = vld [vmem:[%s1502 + $0xbc] sm:$0xf]
  %v1535 = vld [vmem:[%s1502 + $0xc0] sm:$0xff]
  %v1536 = vld [vmem:[%s1502 + $0xc8] sm:$0xf]
  %v1537 = vld [vmem:[%s1502 + $0xcc] sm:$0xff]
  %v1538 = vld [vmem:[%s1502 + $0xd4] sm:$0xf]
  %v1539 = vld [vmem:[%s1502 + $0xd8] sm:$0xff]
  %v1540 = vld [vmem:[%s1502 + $0xe0] sm:$0xf]
  %v1541 = vld [vmem:[%s1502 + $0xe4] sm:$0xff]
  %v1542 = vld [vmem:[%s1502 + $0xec] sm:$0xf]
  %v1543 = vld [vmem:[%s1502 + $0xf0] sm:$0xff]
  %v1544 = vld [vmem:[%s1502 + $0xf8] sm:$0xf]
  %v1545 = vld [vmem:[%s1502 + $0xfc] sm:$0xff]
  %v1546 = vld [vmem:[%s1502 + $0x104] sm:$0xf]
  %v1547 = vld [vmem:[%s1502 + $0x108] sm:$0xff]
  %v1548 = vld [vmem:[%s1502 + $0x110] sm:$0xf]
  %v1549 = vld [vmem:[%s1502 + $0x114] sm:$0xff]
  %v1550 = vld [vmem:[%s1502 + $0x11c] sm:$0xf]
  %v1599 = vunpack.c.l.b16 %v1503
  %v1600 = vunpack.c.h.b16 %v1503
  %v1601 = vunpack.c.l.b16 %v1504
  %v1602 = vunpack.c.l.b16 %v1505
  %v1603 = vunpack.c.h.b16 %v1505
  %v1604 = vunpack.c.l.b16 %v1506
  %v1605 = vunpack.c.l.b16 %v1507
  %v1606 = vunpack.c.h.b16 %v1507
  %v1607 = vunpack.c.l.b16 %v1508
  %v1608 = vunpack.c.l.b16 %v1509
  %v1609 = vunpack.c.h.b16 %v1509
  %v1610 = vunpack.c.l.b16 %v1510
  %v1611 = vunpack.c.l.b16 %v1511
  %v1612 = vunpack.c.h.b16 %v1511
  %v1613 = vunpack.c.l.b16 %v1512
  %v1614 = vunpack.c.l.b16 %v1513
  %v1615 = vunpack.c.h.b16 %v1513
  %v1616 = vunpack.c.l.b16 %v1514
  %v1617 = vunpack.c.l.b16 %v1515
  %v1618 = vunpack.c.h.b16 %v1515
  %v1619 = vunpack.c.l.b16 %v1516
  %v1620 = vunpack.c.l.b16 %v1517
  %v1621 = vunpack.c.h.b16 %v1517
  %v1622 = vunpack.c.l.b16 %v1518
  %v1623 = vunpack.c.l.b16 %v1519
  %v1624 = vunpack.c.h.b16 %v1519
  %v1625 = vunpack.c.l.b16 %v1520
  %v1626 = vunpack.c.l.b16 %v1521
  %v1627 = vunpack.c.h.b16 %v1521
  %v1628 = vunpack.c.l.b16 %v1522
  %v1629 = vunpack.c.l.b16 %v1523
  %v1630 = vunpack.c.h.b16 %v1523
  %v1631 = vunpack.c.l.b16 %v1524
  %v1632 = vunpack.c.l.b16 %v1525
  %v1633 = vunpack.c.h.b16 %v1525
  %v1634 = vunpack.c.l.b16 %v1526
  %v1635 = vunpack.c.l.b16 %v1527
  %v1636 = vunpack.c.h.b16 %v1527
  %v1637 = vunpack.c.l.b16 %v1528
  %v1638 = vunpack.c.l.b16 %v1529
  %v1639 = vunpack.c.h.b16 %v1529
  %v1640 = vunpack.c.l.b16 %v1530
  %v1641 = vunpack.c.l.b16 %v1531
  %v1642 = vunpack.c.h.b16 %v1531
  %v1643 = vunpack.c.l.b16 %v1532
  %v1644 = vunpack.c.l.b16 %v1533
  %v1645 = vunpack.c.h.b16 %v1533
  %v1646 = vunpack.c.l.b16 %v1534
  %v1647 = vunpack.c.l.b16 %v1535
  %v1648 = vunpack.c.h.b16 %v1535
  %v1649 = vunpack.c.l.b16 %v1536
  %v1650 = vunpack.c.l.b16 %v1537
  %v1651 = vunpack.c.h.b16 %v1537
  %v1652 = vunpack.c.l.b16 %v1538
  %v1653 = vunpack.c.l.b16 %v1539
  %v1654 = vunpack.c.h.b16 %v1539
  %v1655 = vunpack.c.l.b16 %v1540
  %v1656 = vunpack.c.l.b16 %v1541
  %v1657 = vunpack.c.h.b16 %v1541
  %v1658 = vunpack.c.l.b16 %v1542
  %v1659 = vunpack.c.l.b16 %v1543
  %v1660 = vunpack.c.h.b16 %v1543
  %v1661 = vunpack.c.l.b16 %v1544
  %v1662 = vunpack.c.l.b16 %v1545
  %v1663 = vunpack.c.h.b16 %v1545
  %v1664 = vunpack.c.l.b16 %v1546
  %v1665 = vunpack.c.l.b16 %v1547
  %v1666 = vunpack.c.h.b16 %v1547
  %v1667 = vunpack.c.l.b16 %v1548
  %v1668 = vunpack.c.l.b16 %v1549
  %v1669 = vunpack.c.h.b16 %v1549
  %v1670 = vunpack.c.l.b16 %v1550
  %v1671 = vpack.c.b16 %v1602, %v1599
  %v1672 = vpack.c.b16 %v1603, %v1600
  %v1673 = vpack.c.b16 %v1604, %v1601
  %v1674 = vpack.c.b16 %v1608, %v1605
  %v1675 = vpack.c.b16 %v1609, %v1606
  %v1676 = vpack.c.b16 %v1610, %v1607
  %v1677 = vpack.c.b16 %v1614, %v1611
  %v1678 = vpack.c.b16 %v1615, %v1612
  %v1679 = vpack.c.b16 %v1616, %v1613
  %v1680 = vpack.c.b16 %v1620, %v1617
  %v1681 = vpack.c.b16 %v1621, %v1618
  %v1682 = vpack.c.b16 %v1622, %v1619
  %v1683 = vpack.c.b16 %v1626, %v1623
  %v1684 = vpack.c.b16 %v1627, %v1624
  %v1685 = vpack.c.b16 %v1628, %v1625
  %v1686 = vpack.c.b16 %v1632, %v1629
  %v1687 = vpack.c.b16 %v1633, %v1630
  %v1688 = vpack.c.b16 %v1634, %v1631
  %v1689 = vpack.c.b16 %v1638, %v1635
  %v1690 = vpack.c.b16 %v1639, %v1636
  %v1691 = vpack.c.b16 %v1640, %v1637
  %v1692 = vpack.c.b16 %v1644, %v1641
  %v1693 = vpack.c.b16 %v1645, %v1642
  %v1694 = vpack.c.b16 %v1646, %v1643
  %v1695 = vpack.c.b16 %v1650, %v1647
  %v1696 = vpack.c.b16 %v1651, %v1648
  %v1697 = vpack.c.b16 %v1652, %v1649
  %v1698 = vpack.c.b16 %v1656, %v1653
  %v1699 = vpack.c.b16 %v1657, %v1654
  %v1700 = vpack.c.b16 %v1658, %v1655
  %v1701 = vpack.c.b16 %v1662, %v1659
  %v1702 = vpack.c.b16 %v1663, %v1660
  %v1703 = vpack.c.b16 %v1664, %v1661
  %v1704 = vpack.c.b16 %v1668, %v1665
  %v1705 = vpack.c.b16 %v1669, %v1666
  %v1706 = vpack.c.b16 %v1670, %v1667
  %1743 = vmatprep.subr.bf16.mxu0 %v1672
  %1744 = vmatpush1.bf16.msra.mxu0 %v1671
  %1745 = vmatprep.subr.bf16.mxu0 %v1675
  %1746 = vmatpush1.bf16.msra.mxu0 %v1674
  %1747 = vmatprep.subr.bf16.mxu0 %v1678
  %1748 = vmatpush1.bf16.msra.mxu0 %v1677
  %1749 = vmatprep.subr.bf16.mxu0 %v1681
  %1750 = vmatpush1.bf16.msra.mxu0 %v1680
  %1751 = vmatprep.subr.bf16.mxu0 %v1684
  %1752 = vmatpush1.bf16.msra.mxu0 %v1683
  %1753 = vmatprep.subr.bf16.mxu0 %v1687
  %1754 = vmatpush1.bf16.msra.mxu0 %v1686
  %1755 = vmatprep.subr.bf16.mxu0 %v1690
  %1756 = vmatpush1.bf16.msra.mxu0 %v1689
  %1757 = vmatprep.subr.bf16.mxu0 %v1693
  %1758 = vmatpush1.bf16.msra.mxu0 %v1692
  %1759 = vmatprep.subr.bf16.mxu0 %v1696
  %1760 = vmatpush1.bf16.msra.mxu0 %v1695
  %1761 = vmatprep.subr.bf16.mxu0 %v1699
  %1762 = vmatpush1.bf16.msra.mxu0 %v1698
  %1763 = vmatprep.subr.bf16.mxu0 %v1702
  %1764 = vmatpush1.bf16.msra.mxu0 %v1701
  %1765 = vmatprep.subr.bf16.mxu0 %v1705
  %1766 = vmatpush1.bf16.msra.mxu0 %v1704
  %1767 = vmatprep.subr.bf16.mxu0 0
  %1768 = vmatpush1.bf16.msra.mxu0 0
  %1769 = vmatprep.subr.bf16.mxu0 0
  %1770 = vmatpush1.bf16.msra.mxu0 0
  %1771 = vmatprep.subr.bf16.mxu0 0
  %1772 = vmatpush1.bf16.msra.mxu0 0
  %1773 = vmatprep.subr.bf16.mxu0 0
  %1774 = vmatpush1.bf16.msra.mxu0 0
  %1775 = vmatprep.mubr.bf16.mxu0 %v340
  %1776 = vmatmul.mubr.bf16.gmra.mrb[0].mxu0 %v125
  %v1777 = vpop.f32.mrb[0].mxu0
  %v1778 = vadd.f32 0.0, %v1777
  %v1779 = vpop.f32.mrb[0].mxu0
  %v1780 = vadd.f32 0.0, %v1779
  %v1781 = vpop.f32.mrb[0].mxu0
  %v1782 = vadd.f32 0.0, %v1781
  %v1783 = vpop.f32.mrb[0].mxu0
  %v1784 = vadd.f32 0.0, %v1783
  %1785 = vmatprep.mubr.bf16.mxu0 %v343
  %1786 = vmatmul.mubr.bf16.gmra.mrb[0].mxu0 %v127
  %v1787 = vpop.f32.mrb[0].mxu0
  %v1788 = vadd.f32 0.0, %v1787
  %v1789 = vpop.f32.mrb[0].mxu0
  %v1790 = vadd.f32 0.0, %v1789
  %v1791 = vpop.f32.mrb[0].mxu0
  %v1792 = vadd.f32 0.0, %v1791
  %v1793 = vpop.f32.mrb[0].mxu0
  %v1794 = vadd.f32 0.0, %v1793
  %1795 = vmatprep.mubr.bf16.mxu0 %v346
  %1796 = vmatmul.mubr.bf16.gmra.mrb[0].mxu0 %v129
  %v1797 = vpop.f32.mrb[0].mxu0
  %v1798 = vadd.f32 0.0, %v1797
  %v1799 = vpop.f32.mrb[0].mxu0
  %v1800 = vadd.f32 0.0, %v1799
  %v1801 = vpop.f32.mrb[0].mxu0
  %v1802 = vadd.f32 0.0, %v1801
  %v1803 = vpop.f32.mrb[0].mxu0
  %v1804 = vadd.f32 0.0, %v1803
  %1805 = vmatprep.mubr.bf16.mxu0 %v349
  %1806 = vmatmul.mubr.bf16.gmra.mrb[0].mxu0 %v131
  %v1807 = vpop.f32.mrb[0].mxu0
  %v1808 = vadd.f32 0.0, %v1807
  %v1809 = vpop.f32.mrb[0].mxu0
  %v1810 = vadd.f32 0.0, %v1809
  %v1811 = vpop.f32.mrb[0].mxu0
  %v1812 = vadd.f32 0.0, %v1811
  %v1813 = vpop.f32.mrb[0].mxu0
  %v1814 = vadd.f32 0.0, %v1813
  %1815 = vmatprep.mubr.bf16.mxu0 %v352
  %1816 = vmatmul.mubr.bf16.gmra.mrb[0].mxu0 %v133
  %v1817 = vpop.f32.mrb[0].mxu0
  %v1818 = vadd.f32 0.0, %v1817
  %v1819 = vpop.f32.mrb[0].mxu0
  %v1820 = vadd.f32 0.0, %v1819
  %v1821 = vpop.f32.mrb[0].mxu0
  %v1822 = vadd.f32 0.0, %v1821
  %v1823 = vpop.f32.mrb[0].mxu0
  %v1824 = vadd.f32 0.0, %v1823
  %1825 = vmatprep.mubr.bf16.mxu0 %v355
  %1826 = vmatmul.mubr.bf16.gmra.mrb[0].mxu0 %v135
  %v1827 = vpop.f32.mrb[0].mxu0
  %v1828 = vadd.f32 0.0, %v1827
  %v1829 = vpop.f32.mrb[0].mxu0
  %v1830 = vadd.f32 0.0, %v1829
  %v1831 = vpop.f32.mrb[0].mxu0
  %v1832 = vadd.f32 0.0, %v1831
  %v1833 = vpop.f32.mrb[0].mxu0
  %v1834 = vadd.f32 0.0, %v1833
  %1835 = vmatprep.mubr.bf16.mxu0 %v358
  %1836 = vmatmul.mubr.bf16.gmra.mrb[0].mxu0 %v137
  %v1837 = vpop.f32.mrb[0].mxu0
  %v1838 = vadd.f32 0.0, %v1837
  %v1839 = vpop.f32.mrb[0].mxu0
  %v1840 = vadd.f32 0.0, %v1839
  %v1841 = vpop.f32.mrb[0].mxu0
  %v1842 = vadd.f32 0.0, %v1841
  %v1843 = vpop.f32.mrb[0].mxu0
  %v1844 = vadd.f32 0.0, %v1843
  %1845 = vdwg.mxu0
  %1846 = vmatprep.subr.bf16.mxu0 0
  %1847 = vmatpush1.bf16.msra.mxu0 %v1673
  %1848 = vmatprep.subr.bf16.mxu0 0
  %1849 = vmatpush1.bf16.msra.mxu0 %v1676
  %1850 = vmatprep.subr.bf16.mxu0 0
  %1851 = vmatpush1.bf16.msra.mxu0 %v1679
  %1852 = vmatprep.subr.bf16.mxu0 0
  %1853 = vmatpush1.bf16.msra.mxu0 %v1682
  %1854 = vmatprep.subr.bf16.mxu0 0
  %1855 = vmatpush1.bf16.msra.mxu0 %v1685
  %1856 = vmatprep.subr.bf16.mxu0 0
  %1857 = vmatpush1.bf16.msra.mxu0 %v1688
  %1858 = vmatprep.subr.bf16.mxu0 0
  %1859 = vmatpush1.bf16.msra.mxu0 %v1691
  %1860 = vmatprep.subr.bf16.mxu0 0
  %1861 = vmatpush1.bf16.msra.mxu0 %v1694
  %1862 = vmatprep.subr.bf16.mxu0 0
  %1863 = vmatpush1.bf16.msra.mxu0 %v1697
  %1864 = vmatprep.subr.bf16.mxu0 0
  %1865 = vmatpush1.bf16.msra.mxu0 %v1700
  %1866 = vmatprep.subr.bf16.mxu0 0
  %1867 = vmatpush1.bf16.msra.mxu0 %v1703
  %1868 = vmatprep.subr.bf16.mxu0 0
  %1869 = vmatpush1.bf16.msra.mxu0 %v1706
  %1870 = vmatprep.subr.bf16.mxu0 0
  %1871 = vmatpush1.bf16.msra.mxu0 0
  %1872 = vmatprep.subr.bf16.mxu0 0
  %1873 = vmatpush1.bf16.msra.mxu0 0
  %1874 = vmatprep.subr.bf16.mxu0 0
  %1875 = vmatpush1.bf16.msra.mxu0 0
  %1876 = vmatprep.subr.bf16.mxu0 0
  %1877 = vmatpush1.bf16.msra.mxu0 0
  %1878 = vmatprep.mubr.bf16.mxu0 %v340
  %1879 = vmatmul.mubr.bf16.gmra.mrb[0].mxu0 %v125
  %v1880 = vpop.f32.mrb[0].mxu0
  %v1881 = vadd.f32 0.0, %v1880
  %v1882 = vpop.f32.mrb[0].mxu0
  %v1883 = vpop.f32.mrb[0].mxu0
  %v1884 = vadd.f32 0.0, %v1883
  %v1885 = vpop.f32.mrb[0].mxu0
  %1886 = vmatprep.mubr.bf16.mxu0 %v343
  %1887 = vmatmul.mubr.bf16.gmra.mrb[0].mxu0 %v127
  %v1888 = vpop.f32.mrb[0].mxu0
  %v1889 = vadd.f32 0.0, %v1888
  %v1890 = vpop.f32.mrb[0].mxu0
  %v1891 = vpop.f32.mrb[0].mxu0
  %v1892 = vadd.f32 0.0, %v1891
  %v1893 = vpop.f32.mrb[0].mxu0
  %1894 = vmatprep.mubr.bf16.mxu0 %v346
  %1895 = vmatmul.mubr.bf16.gmra.mrb[0].mxu0 %v129
  %v1896 = vpop.f32.mrb[0].mxu0
  %v1897 = vadd.f32 0.0, %v1896
  %v1898 = vpop.f32.mrb[0].mxu0
  %v1899 = vpop.f32.mrb[0].mxu0
  %v1900 = vadd.f32 0.0, %v1899
  %v1901 = vpop.f32.mrb[0].mxu0
  %1902 = vmatprep.mubr.bf16.mxu0 %v349
  %1903 = vmatmul.mubr.bf16.gmra.mrb[0].mxu0 %v131
  %v1904 = vpop.f32.mrb[0].mxu0
  %v1905 = vadd.f32 0.0, %v1904
  %v1906 = vpop.f32.mrb[0].mxu0
  %v1907 = vpop.f32.mrb[0].mxu0
  %v1908 = vadd.f32 0.0, %v1907
  %v1909 = vpop.f32.mrb[0].mxu0
  %1910 = vmatprep.mubr.bf16.mxu0 %v352
  %1911 = vmatmul.mubr.bf16.gmra.mrb[0].mxu0 %v133
  %v1912 = vpop.f32.mrb[0].mxu0
  %v1913 = vadd.f32 0.0, %v1912
  %v1914 = vpop.f32.mrb[0].mxu0
  %v1915 = vpop.f32.mrb[0].mxu0
  %v1916 = vadd.f32 0.0, %v1915
  %v1917 = vpop.f32.mrb[0].mxu0
  %1918 = vmatprep.mubr.bf16.mxu0 %v355
  %1919 = vmatmul.mubr.bf16.gmra.mrb[0].mxu0 %v135
  %v1920 = vpop.f32.mrb[0].mxu0
  %v1921 = vadd.f32 0.0, %v1920
  %v1922 = vpop.f32.mrb[0].mxu0
  %v1923 = vpop.f32.mrb[0].mxu0
  %v1924 = vadd.f32 0.0, %v1923
  %v1925 = vpop.f32.mrb[0].mxu0
  %1926 = vmatprep.mubr.bf16.mxu0 %v358
  %1927 = vmatmul.mubr.bf16.gmra.mrb[0].mxu0 %v137
  %v1928 = vpop.f32.mrb[0].mxu0
  %v1929 = vadd.f32 0.0, %v1928
  %v1930 = vpop.f32.mrb[0].mxu0
  %v1931 = vpop.f32.mrb[0].mxu0
  %v1932 = vadd.f32 0.0, %v1931
  %v1933 = vpop.f32.mrb[0].mxu0
  %1934 = vdwg.mxu0
  %v1935 = vmax.f32 %v1460, %v1778
  %v1936 = vmax.f32 %v1461, %v1780
  %v1937 = vmax.f32 %v1462, %v1881
  %v1938 = vmax.f32 %v1463, %v1782
  %v1939 = vmax.f32 %v1464, %v1784
  %v1940 = vmax.f32 %v1465, %v1884
  %v1941 = vmax.f32 %v1466, %v1788
  %v1942 = vmax.f32 %v1467, %v1790
  %v1943 = vmax.f32 %v1468, %v1889
  %v1944 = vmax.f32 %v1469, %v1792
  %v1945 = vmax.f32 %v1470, %v1794
  %v1946 = vmax.f32 %v1471, %v1892
  %v1947 = vmax.f32 %v1472, %v1798
  %v1948 = vmax.f32 %v1473, %v1800
  %v1949 = vmax.f32 %v1474, %v1897
  %v1950 = vmax.f32 %v1475, %v1802
  %v1951 = vmax.f32 %v1476, %v1804
  %v1952 = vmax.f32 %v1477, %v1900
  %v1953 = vmax.f32 %v1478, %v1808
  %v1954 = vmax.f32 %v1479, %v1810
  %v1955 = vmax.f32 %v1480, %v1905
  %v1956 = vmax.f32 %v1481, %v1812
  %v1957 = vmax.f32 %v1482, %v1814
  %v1958 = vmax.f32 %v1483, %v1908
  %v1959 = vmax.f32 %v1484, %v1818
  %v1960 = vmax.f32 %v1485, %v1820
  %v1961 = vmax.f32 %v1486, %v1913
  %v1962 = vmax.f32 %v1487, %v1822
  %v1963 = vmax.f32 %v1488, %v1824
  %v1964 = vmax.f32 %v1489, %v1916
  %v1965 = vmax.f32 %v1490, %v1828
  %v1966 = vmax.f32 %v1491, %v1830
  %v1967 = vmax.f32 %v1492, %v1921
  %v1968 = vmax.f32 %v1493, %v1832
  %v1969 = vmax.f32 %v1494, %v1834
  %v1970 = vmax.f32 %v1495, %v1924
  %v1971 = vmax.f32 %v1496, %v1838
  %v1972 = vmax.f32 %v1497, %v1840
  %v1973 = vmax.f32 %v1498, %v1929
  %v1974 = vmax.f32 %v1499, %v1842
  %v1975 = vmax.f32 %v1500, %v1844
  %v1976 = vmax.f32 %v1501, %v1932
  %v1977 = vld [vmem:[%s2] sm:$0x7]
  %v1979 = vlaneseq
  %v1980 = vshrl.u32 %v1979, 7
  %v1981 = vsub.s32 0, %v1980
  %v1982 = vrot.slane %v1977, %v1981
  %v1983 = vlaneseq
  %v1984 = vshrl.u32 %v1983, 7
  %v1985 = vsub.s32 1, %v1984
  %v1986 = vrot.slane %v1977, %v1985
  %v1987 = vlaneseq
  %v1988 = vshrl.u32 %v1987, 7
  %v1989 = vsub.s32 2, %v1988
  %v1990 = vrot.slane %v1977, %v1989
  %v1994 = vadd.f32 %v1935, %v1982
  %v1995 = vadd.f32 %v1936, %v1986
  %v1996 = vadd.f32 %v1937, %v1990
  %v1997 = vadd.f32 %v1938, %v1982
  %v1998 = vadd.f32 %v1939, %v1986
  %v1999 = vadd.f32 %v1940, %v1990
  %v2000 = vadd.f32 %v1941, %v1982
  %v2001 = vadd.f32 %v1942, %v1986
  %v2002 = vadd.f32 %v1943, %v1990
  %v2003 = vadd.f32 %v1944, %v1982
  %v2004 = vadd.f32 %v1945, %v1986
  %v2005 = vadd.f32 %v1946, %v1990
  %v2006 = vadd.f32 %v1947, %v1982
  %v2007 = vadd.f32 %v1948, %v1986
  %v2008 = vadd.f32 %v1949, %v1990
  %v2009 = vadd.f32 %v1950, %v1982
  %v2010 = vadd.f32 %v1951, %v1986
  %v2011 = vadd.f32 %v1952, %v1990
  %v2012 = vadd.f32 %v1953, %v1982
  %v2013 = vadd.f32 %v1954, %v1986
  %v2014 = vadd.f32 %v1955, %v1990
  %v2015 = vadd.f32 %v1956, %v1982
  %v2016 = vadd.f32 %v1957, %v1986
  %v2017 = vadd.f32 %v1958, %v1990
  %v2018 = vadd.f32 %v1959, %v1982
  %v2019 = vadd.f32 %v1960, %v1986
  %v2020 = vadd.f32 %v1961, %v1990
  %v2021 = vadd.f32 %v1962, %v1982
  %v2022 = vadd.f32 %v1963, %v1986
  %v2023 = vadd.f32 %v1964, %v1990
  %v2024 = vadd.f32 %v1965, %v1982
  %v2025 = vadd.f32 %v1966, %v1986
  %v2026 = vadd.f32 %v1967, %v1990
  %v2027 = vadd.f32 %v1968, %v1982
  %v2028 = vadd.f32 %v1969, %v1986
  %v2029 = vadd.f32 %v1970, %v1990
  %v2030 = vadd.f32 %v1971, %v1982
  %v2031 = vadd.f32 %v1972, %v1986
  %v2032 = vadd.f32 %v1973, %v1990
  %v2033 = vadd.f32 %v1974, %v1982
  %v2034 = vadd.f32 %v1975, %v1986
  %v2035 = vadd.f32 %v1976, %v1990
  %v2036 = vmax.f32 %v1994, 0.0
  %v2037 = vmax.f32 %v1995, 0.0
  %v2038 = vmax.f32 %v1996, 0.0
  %v2039 = vmax.f32 %v1997, 0.0
  %v2040 = vmax.f32 %v1998, 0.0
  %v2041 = vmax.f32 %v1999, 0.0
  %v2042 = vmax.f32 %v2000, 0.0
  %v2043 = vmax.f32 %v2001, 0.0
  %v2044 = vmax.f32 %v2002, 0.0
  %v2045 = vmax.f32 %v2003, 0.0
  %v2046 = vmax.f32 %v2004, 0.0
  %v2047 = vmax.f32 %v2005, 0.0
  %v2048 = vmax.f32 %v2006, 0.0
  %v2049 = vmax.f32 %v2007, 0.0
  %v2050 = vmax.f32 %v2008, 0.0
  %v2051 = vmax.f32 %v2009, 0.0
  %v2052 = vmax.f32 %v2010, 0.0
  %v2053 = vmax.f32 %v2011, 0.0
  %v2054 = vmax.f32 %v2012, 0.0
  %v2055 = vmax.f32 %v2013, 0.0
  %v2056 = vmax.f32 %v2014, 0.0
  %v2057 = vmax.f32 %v2015, 0.0
  %v2058 = vmax.f32 %v2016, 0.0
  %v2059 = vmax.f32 %v2017, 0.0
  %v2060 = vmax.f32 %v2018, 0.0
  %v2061 = vmax.f32 %v2019, 0.0
  %v2062 = vmax.f32 %v2020, 0.0
  %v2063 = vmax.f32 %v2021, 0.0
  %v2064 = vmax.f32 %v2022, 0.0
  %v2065 = vmax.f32 %v2023, 0.0
  %v2066 = vmax.f32 %v2024, 0.0
  %v2067 = vmax.f32 %v2025, 0.0
  %v2068 = vmax.f32 %v2026, 0.0
  %v2069 = vmax.f32 %v2027, 0.0
  %v2070 = vmax.f32 %v2028, 0.0
  %v2071 = vmax.f32 %v2029, 0.0
  %v2072 = vmax.f32 %v2030, 0.0
  %v2073 = vmax.f32 %v2031, 0.0
  %v2074 = vmax.f32 %v2032, 0.0
  %v2075 = vmax.f32 %v2033, 0.0
  %v2076 = vmax.f32 %v2034, 0.0
  %v2077 = vmax.f32 %v2035, 0.0
  %v2078 = vld [vmem:[%s3] sm:$0xff]
  %v2079 = vld [vmem:[%s3 + $0x8] sm:$0xff]
  %v2080 = vld [vmem:[%s3 + $0x10] sm:$0xff]
  %v2081 = vld [vmem:[%s3 + $0x18] sm:$0xff]
  %v2082 = vld [vmem:[%s3 + $0x20] sm:$0xff]
  %v2083 = vld [vmem:[%s3 + $0x28] sm:$0xff]
  %v2084 = vld [vmem:[%s3 + $0x30] sm:$0xff]
  %v2085 = vld [vmem:[%s3 + $0x38] sm:$0xff]
  %v2086 = vld [vmem:[%s3 + $0x40] sm:$0xff]
  %v2087 = vld [vmem:[%s3 + $0x48] sm:$0xff]
  %v2088 = vld [vmem:[%s3 + $0x50] sm:$0xff]
  %v2089 = vld [vmem:[%s3 + $0x58] sm:$0xff]
  %v2090 = vld [vmem:[%s3 + $0x60] sm:$0xff]
  %v2091 = vld [vmem:[%s3 + $0x68] sm:$0xff]
  %v2092 = vld [vmem:[%s3 + $0x70] sm:$0xff]
  %v2093 = vld [vmem:[%s3 + $0x78] sm:$0xff]
  %v2094 = vld [vmem:[%s3 + $0x80] sm:$0xff]
  %v2095 = vld [vmem:[%s3 + $0x88] sm:$0xff]
  %v2096 = vld [vmem:[%s3 + $0x90] sm:$0xff]
  %v2097 = vld [vmem:[%s3 + $0x98] sm:$0xff]
  %v2098 = vld [vmem:[%s3 + $0xa0] sm:$0xff]
  %v2099 = vld [vmem:[%s3 + $0xa8] sm:$0xff]
  %v2100 = vld [vmem:[%s3 + $0xb0] sm:$0xff]
  %v2101 = vld [vmem:[%s3 + $0xb8] sm:$0xff]
  %v2102 = vld [vmem:[%s3 + $0xc0] sm:$0xff]
  %v2103 = vld [vmem:[%s3 + $0xc8] sm:$0xff]
  %v2104 = vld [vmem:[%s3 + $0xd0] sm:$0xff]
  %v2105 = vld [vmem:[%s3 + $0xd8] sm:$0xff]
  %v2106 = vld [vmem:[%s3 + $0xe0] sm:$0xff]
  %v2107 = vld [vmem:[%s3 + $0xe8] sm:$0xff]
  %v2108 = vld [vmem:[%s3 + $0xf0] sm:$0xff]
  %v2109 = vld [vmem:[%s3 + $0xf8] sm:$0xff]
  %v2110 = vld [vmem:[%s3 + $0x100] sm:$0xff]
  %v2111 = vld [vmem:[%s3 + $0x108] sm:$0xff]
  %v2112 = vld [vmem:[%s3 + $0x110] sm:$0xff]
  %v2113 = vld [vmem:[%s3 + $0x118] sm:$0xff]
  %v2114 = vld [vmem:[%s3 + $0x120] sm:$0xff]
  %v2115 = vld [vmem:[%s3 + $0x128] sm:$0xff]
  %v2116 = vld [vmem:[%s3 + $0x130] sm:$0xff]
  %v2117 = vld [vmem:[%s3 + $0x138] sm:$0xff]
  %v2118 = vld [vmem:[%s3 + $0x140] sm:$0xff]
  %v2119 = vld [vmem:[%s3 + $0x148] sm:$0xff]
  %v2120 = vld [vmem:[%s3 + $0x150] sm:$0xff]
  %v2121 = vld [vmem:[%s3 + $0x158] sm:$0xff]
  %v2122 = vld [vmem:[%s3 + $0x160] sm:$0xff]
  %v2123 = vld [vmem:[%s3 + $0x168] sm:$0xff]
  %v2124 = vld [vmem:[%s3 + $0x170] sm:$0xff]
  %v2125 = vld [vmem:[%s3 + $0x178] sm:$0xff]
  %v2126 = vld [vmem:[%s3 + $0x180] sm:$0xff]
  %v2127 = vld [vmem:[%s3 + $0x188] sm:$0xff]
  %v2128 = vld [vmem:[%s3 + $0x190] sm:$0xff]
  %v2129 = vld [vmem:[%s3 + $0x198] sm:$0xff]
  %v2130 = vld [vmem:[%s3 + $0x1a0] sm:$0xff]
  %v2131 = vld [vmem:[%s3 + $0x1a8] sm:$0xff]
  %v2132 = vld [vmem:[%s3 + $0x1b0] sm:$0xff]
  %v2133 = vld [vmem:[%s3 + $0x1b8] sm:$0xff]
  %v2134 = vld [vmem:[%s3 + $0x1c0] sm:$0xff]
  %v2135 = vld [vmem:[%s3 + $0x1c8] sm:$0xff]
  %v2136 = vld [vmem:[%s3 + $0x1d0] sm:$0xff]
  %v2137 = vld [vmem:[%s3 + $0x1d8] sm:$0xff]
  %v2138 = vld [vmem:[%s3 + $0x1e0] sm:$0xff]
  %v2139 = vld [vmem:[%s3 + $0x1e8] sm:$0xff]
  %v2140 = vld [vmem:[%s3 + $0x1f0] sm:$0xff]
  %v2141 = vld [vmem:[%s3 + $0x1f8] sm:$0xff]
  %v2142 = vld [vmem:[%s3 + $0x200] sm:$0xff]
  %v2143 = vld [vmem:[%s3 + $0x208] sm:$0xff]
  %v2144 = vld [vmem:[%s3 + $0x210] sm:$0xff]
  %v2145 = vld [vmem:[%s3 + $0x218] sm:$0xff]
  %v2146 = vld [vmem:[%s3 + $0x220] sm:$0xff]
  %v2147 = vld [vmem:[%s3 + $0x228] sm:$0xff]
  %v2148 = vld [vmem:[%s3 + $0x230] sm:$0xff]
  %v2149 = vld [vmem:[%s3 + $0x238] sm:$0xff]
  %v2150 = vld [vmem:[%s3 + $0x240] sm:$0xff]
  %v2151 = vld [vmem:[%s3 + $0x248] sm:$0xff]
  %v2152 = vld [vmem:[%s3 + $0x250] sm:$0xff]
  %v2153 = vld [vmem:[%s3 + $0x258] sm:$0xff]
  %v2154 = vld [vmem:[%s3 + $0x260] sm:$0xff]
  %v2155 = vld [vmem:[%s3 + $0x268] sm:$0xff]
  %v2156 = vld [vmem:[%s3 + $0x270] sm:$0xff]
  %v2157 = vld [vmem:[%s3 + $0x278] sm:$0xff]
  %v2158 = vld [vmem:[%s3 + $0x280] sm:$0xff]
  %v2159 = vld [vmem:[%s3 + $0x288] sm:$0xff]
  %v2160 = vld [vmem:[%s3 + $0x290] sm:$0xff]
  %v2161 = vld [vmem:[%s3 + $0x298] sm:$0xff]
  %vm2162 = vcmask 195584
  %v2164 = vsel %vm2162, %v2038, 0
  %v2167 = vsel %vm2162, %v2080, 0
  %v2170 = vsel %vm2162, %v2083, 0
  %2172 = vmatprep.subr.mxu0 %v2079
  %2173 = vmatpush1.xpose.msra.mxu0 %v2078
  %2174 = vmatprep.subr.mxu0 %v2082
  %2175 = vmatpush1.xpose.msra.mxu0 %v2081
  %2176 = vmatprep.subr.mxu0 0.0
  %2177 = vmatpush1.xpose.msra.mxu0 0.0
  %2178 = vmatprep.subr.mxu0 0.0
  %2179 = vmatpush1.xpose.msra.mxu0 0.0
  %2180 = vmatprep.subr.mxu0 0.0
  %2181 = vmatpush1.xpose.msra.mxu0 0.0
  %2182 = vmatprep.subr.mxu0 0.0
  %2183 = vmatpush1.xpose.msra.mxu0 0.0
  %2184 = vmatprep.subr.mxu0 0.0
  %2185 = vmatpush1.xpose.msra.mxu0 0.0
  %2186 = vmatprep.subr.mxu0 0.0
  %2187 = vmatpush1.xpose.msra.mxu0 0.0
  %2188 = vmatprep.subr.mxu0 0.0
  %2189 = vmatpush1.xpose.msra.mxu0 0.0
  %2190 = vmatprep.subr.mxu0 0.0
  %2191 = vmatpush1.xpose.msra.mxu0 0.0
  %2192 = vmatprep.subr.mxu0 0.0
  %2193 = vmatpush1.xpose.msra.mxu0 0.0
  %2194 = vmatprep.subr.mxu0 0.0
  %2195 = vmatpush1.xpose.msra.mxu0 0.0
  %2196 = vmatprep.subr.mxu0 0.0
  %2197 = vmatpush1.xpose.msra.mxu0 0.0
  %2198 = vmatprep.subr.mxu0 0.0
  %2199 = vmatpush1.xpose.msra.mxu0 0.0
  %2200 = vmatprep.subr.mxu0 0.0
  %2201 = vmatpush1.xpose.msra.mxu0 0.0
  %2202 = vmatprep.subr.mxu0 0.0
  %2203 = vmatpush1.xpose.msra.mxu0 0.0
  %2204 = vmatprep.subr.mxu0 0.0
  %2205 = vmatpush1.xpose.msra.mxu0 0.0
  %2206 = vmatprep.subr.mxu0 0.0
  %2207 = vmatpush1.xpose.msra.mxu0 0.0
  %2208 = vmatprep.subr.mxu0 0.0
  %2209 = vmatpush1.xpose.msra.mxu0 0.0
  %2210 = vmatprep.subr.mxu0 0.0
  %2211 = vmatpush1.xpose.msra.mxu0 0.0
  %2212 = vmatprep.subr.mxu0 0.0
  %2213 = vmatpush1.xpose.msra.mxu0 0.0
  %2214 = vmatprep.subr.mxu0 0.0
  %2215 = vmatpush1.xpose.msra.mxu0 0.0
  %2216 = vmatprep.subr.mxu0 0.0
  %2217 = vmatpush1.xpose.msra.mxu0 0.0
  %2218 = vmatprep.subr.mxu0 0.0
  %2219 = vmatpush1.xpose.msra.mxu0 0.0
  %2220 = vmatprep.subr.mxu0 0.0
  %2221 = vmatpush1.xpose.msra.mxu0 0.0
  %2222 = vmatprep.subr.mxu0 0.0
  %2223 = vmatpush1.xpose.msra.mxu0 0.0
  %2224 = vmatprep.subr.mxu0 0.0
  %2225 = vmatpush1.xpose.msra.mxu0 0.0
  %2226 = vmatprep.subr.mxu0 0.0
  %2227 = vmatpush1.xpose.msra.mxu0 0.0
  %2228 = vmatprep.subr.mxu0 0.0
  %2229 = vmatpush1.xpose.msra.mxu0 0.0
  %2230 = vmatprep.subr.mxu0 0.0
  %2231 = vmatpush1.xpose.msra.mxu0 0.0
  %2232 = vmatprep.subr.mxu0 0.0
  %2233 = vmatpush1.xpose.msra.mxu0 0.0
  %2234 = vmatprep.subr.mxu0 0.0
  %2235 = vmatpush1.xpose.msra.mxu0 0.0
  %2236 = vmatprep.mubr.f32.mxu0 %v2037
  %2237 = vmatmul.mubr.f32.gmra.mrb[0].mxu0 %v2036
  %v2238 = vpop.f32.mrb[0].mxu0
  %v2239 = vadd.f32 0.0, %v2238
  %v2240 = vpop.f32.mrb[0].mxu0
  %2241 = vdwg.mxu0
  %2242 = vmatprep.subr.mxu0 0.0
  %2243 = vmatpush1.xpose.msra.mxu0 %v2167
  %2244 = vmatprep.subr.mxu0 0.0
  %2245 = vmatpush1.xpose.msra.mxu0 %v2170
  %2246 = vmatprep.subr.mxu0 0.0
  %2247 = vmatpush1.xpose.msra.mxu0 0.0
  %2248 = vmatprep.subr.mxu0 0.0
  %2249 = vmatpush1.xpose.msra.mxu0 0.0
  %2250 = vmatprep.subr.mxu0 0.0
  %2251 = vmatpush1.xpose.msra.mxu0 0.0
  %2252 = vmatprep.subr.mxu0 0.0
  %2253 = vmatpush1.xpose.msra.mxu0 0.0
  %2254 = vmatprep.subr.mxu0 0.0
  %2255 = vmatpush1.xpose.msra.mxu0 0.0
  %2256 = vmatprep.subr.mxu0 0.0
  %2257 = vmatpush1.xpose.msra.mxu0 0.0
  %2258 = vmatprep.subr.mxu0 0.0
  %2259 = vmatpush1.xpose.msra.mxu0 0.0
  %2260 = vmatprep.subr.mxu0 0.0
  %2261 = vmatpush1.xpose.msra.mxu0 0.0
  %2262 = vmatprep.subr.mxu0 0.0
  %2263 = vmatpush1.xpose.msra.mxu0 0.0
  %2264 = vmatprep.subr.mxu0 0.0
  %2265 = vmatpush1.xpose.msra.mxu0 0.0
  %2266 = vmatprep.subr.mxu0 0.0
  %2267 = vmatpush1.xpose.msra.mxu0 0.0
  %2268 = vmatprep.subr.mxu0 0.0
  %2269 = vmatpush1.xpose.msra.mxu0 0.0
  %2270 = vmatprep.subr.mxu0 0.0
  %2271 = vmatpush1.xpose.msra.mxu0 0.0
  %2272 = vmatprep.subr.mxu0 0.0
  %2273 = vmatpush1.xpose.msra.mxu0 0.0
  %2274 = vmatprep.subr.mxu0 0.0
  %2275 = vmatpush1.xpose.msra.mxu0 0.0
  %2276 = vmatprep.subr.mxu0 0.0
  %2277 = vmatpush1.xpose.msra.mxu0 0.0
  %2278 = vmatprep.subr.mxu0 0.0
  %2279 = vmatpush1.xpose.msra.mxu0 0.0
  %2280 = vmatprep.subr.mxu0 0.0
  %2281 = vmatpush1.xpose.msra.mxu0 0.0
  %2282 = vmatprep.subr.mxu0 0.0
  %2283 = vmatpush1.xpose.msra.mxu0 0.0
  %2284 = vmatprep.subr.mxu0 0.0
  %2285 = vmatpush1.xpose.msra.mxu0 0.0
  %2286 = vmatprep.subr.mxu0 0.0
  %2287 = vmatpush1.xpose.msra.mxu0 0.0
  %2288 = vmatprep.subr.mxu0 0.0
  %2289 = vmatpush1.xpose.msra.mxu0 0.0
  %2290 = vmatprep.subr.mxu0 0.0
  %2291 = vmatpush1.xpose.msra.mxu0 0.0
  %2292 = vmatprep.subr.mxu0 0.0
  %2293 = vmatpush1.xpose.msra.mxu0 0.0
  %2294 = vmatprep.subr.mxu0 0.0
  %2295 = vmatpush1.xpose.msra.mxu0 0.0
  %2296 = vmatprep.subr.mxu0 0.0
  %2297 = vmatpush1.xpose.msra.mxu0 0.0
  %2298 = vmatprep.subr.mxu0 0.0
  %2299 = vmatpush1.xpose.msra.mxu0 0.0
  %2300 = vmatprep.subr.mxu0 0.0
  %2301 = vmatpush1.xpose.msra.mxu0 0.0
  %2302 = vmatprep.subr.mxu0 0.0
  %2303 = vmatpush1.xpose.msra.mxu0 0.0
  %2304 = vmatprep.subr.mxu0 0.0
  %2305 = vmatpush1.xpose.msra.mxu0 0.0
  %2306 = vmatprep.mubr.f32.mxu0 0.0
  %2307 = vmatmul.mubr.f32.gmra.mrb[0].mxu0 %v2164
  %v2308 = vpop.f32.mrb[0].mxu0
  %v2309 = vadd.f32 %v2239, %v2308
  %v2310 = vpop.f32.mrb[0].mxu0
  %2311 = vdwg.mxu0
  %v2313 = vsel %vm2162, %v2041, 0
  %v2316 = vsel %vm2162, %v2086, 0
  %v2319 = vsel %vm2162, %v2089, 0
  %2321 = vmatprep.subr.mxu0 %v2085
  %2322 = vmatpush1.xpose.msra.mxu0 %v2084
  %2323 = vmatprep.subr.mxu0 %v2088
  %2324 = vmatpush1.xpose.msra.mxu0 %v2087
  %2325 = vmatprep.subr.mxu0 0.0
  %2326 = vmatpush1.xpose.msra.mxu0 0.0
  %2327 = vmatprep.subr.mxu0 0.0
  %2328 = vmatpush1.xpose.msra.mxu0 0.0
  %2329 = vmatprep.subr.mxu0 0.0
  %2330 = vmatpush1.xpose.msra.mxu0 0.0
  %2331 = vmatprep.subr.mxu0 0.0
  %2332 = vmatpush1.xpose.msra.mxu0 0.0
  %2333 = vmatprep.subr.mxu0 0.0
  %2334 = vmatpush1.xpose.msra.mxu0 0.0
  %2335 = vmatprep.subr.mxu0 0.0
  %2336 = vmatpush1.xpose.msra.mxu0 0.0
  %2337 = vmatprep.subr.mxu0 0.0
  %2338 = vmatpush1.xpose.msra.mxu0 0.0
  %2339 = vmatprep.subr.mxu0 0.0
  %2340 = vmatpush1.xpose.msra.mxu0 0.0
  %2341 = vmatprep.subr.mxu0 0.0
  %2342 = vmatpush1.xpose.msra.mxu0 0.0
  %2343 = vmatprep.subr.mxu0 0.0
  %2344 = vmatpush1.xpose.msra.mxu0 0.0
  %2345 = vmatprep.subr.mxu0 0.0
  %2346 = vmatpush1.xpose.msra.mxu0 0.0
  %2347 = vmatprep.subr.mxu0 0.0
  %2348 = vmatpush1.xpose.msra.mxu0 0.0
  %2349 = vmatprep.subr.mxu0 0.0
  %2350 = vmatpush1.xpose.msra.mxu0 0.0
  %2351 = vmatprep.subr.mxu0 0.0
  %2352 = vmatpush1.xpose.msra.mxu0 0.0
  %2353 = vmatprep.subr.mxu0 0.0
  %2354 = vmatpush1.xpose.msra.mxu0 0.0
  %2355 = vmatprep.subr.mxu0 0.0
  %2356 = vmatpush1.xpose.msra.mxu0 0.0
  %2357 = vmatprep.subr.mxu0 0.0
  %2358 = vmatpush1.xpose.msra.mxu0 0.0
  %2359 = vmatprep.subr.mxu0 0.0
  %2360 = vmatpush1.xpose.msra.mxu0 0.0
  %2361 = vmatprep.subr.mxu0 0.0
  %2362 = vmatpush1.xpose.msra.mxu0 0.0
  %2363 = vmatprep.subr.mxu0 0.0
  %2364 = vmatpush1.xpose.msra.mxu0 0.0
  %2365 = vmatprep.subr.mxu0 0.0
  %2366 = vmatpush1.xpose.msra.mxu0 0.0
  %2367 = vmatprep.subr.mxu0 0.0
  %2368 = vmatpush1.xpose.msra.mxu0 0.0
  %2369 = vmatprep.subr.mxu0 0.0
  %2370 = vmatpush1.xpose.msra.mxu0 0.0
  %2371 = vmatprep.subr.mxu0 0.0
  %2372 = vmatpush1.xpose.msra.mxu0 0.0
  %2373 = vmatprep.subr.mxu0 0.0
  %2374 = vmatpush1.xpose.msra.mxu0 0.0
  %2375 = vmatprep.subr.mxu0 0.0
  %2376 = vmatpush1.xpose.msra.mxu0 0.0
  %2377 = vmatprep.subr.mxu0 0.0
  %2378 = vmatpush1.xpose.msra.mxu0 0.0
  %2379 = vmatprep.subr.mxu0 0.0
  %2380 = vmatpush1.xpose.msra.mxu0 0.0
  %2381 = vmatprep.subr.mxu0 0.0
  %2382 = vmatpush1.xpose.msra.mxu0 0.0
  %2383 = vmatprep.subr.mxu0 0.0
  %2384 = vmatpush1.xpose.msra.mxu0 0.0
  %2385 = vmatprep.mubr.f32.mxu0 %v2040
  %2386 = vmatmul.mubr.f32.gmra.mrb[0].mxu0 %v2039
  %v2387 = vpop.f32.mrb[0].mxu0
  %v2388 = vadd.f32 0.0, %v2387
  %v2389 = vpop.f32.mrb[0].mxu0
  %2390 = vdwg.mxu0
  %2391 = vmatprep.subr.mxu0 0.0
  %2392 = vmatpush1.xpose.msra.mxu0 %v2316
  %2393 = vmatprep.subr.mxu0 0.0
  %2394 = vmatpush1.xpose.msra.mxu0 %v2319
  %2395 = vmatprep.subr.mxu0 0.0
  %2396 = vmatpush1.xpose.msra.mxu0 0.0
  %2397 = vmatprep.subr.mxu0 0.0
  %2398 = vmatpush1.xpose.msra.mxu0 0.0
  %2399 = vmatprep.subr.mxu0 0.0
  %2400 = vmatpush1.xpose.msra.mxu0 0.0
  %2401 = vmatprep.subr.mxu0 0.0
  %2402 = vmatpush1.xpose.msra.mxu0 0.0
  %2403 = vmatprep.subr.mxu0 0.0
  %2404 = vmatpush1.xpose.msra.mxu0 0.0
  %2405 = vmatprep.subr.mxu0 0.0
  %2406 = vmatpush1.xpose.msra.mxu0 0.0
  %2407 = vmatprep.subr.mxu0 0.0
  %2408 = vmatpush1.xpose.msra.mxu0 0.0
  %2409 = vmatprep.subr.mxu0 0.0
  %2410 = vmatpush1.xpose.msra.mxu0 0.0
  %2411 = vmatprep.subr.mxu0 0.0
  %2412 = vmatpush1.xpose.msra.mxu0 0.0
  %2413 = vmatprep.subr.mxu0 0.0
  %2414 = vmatpush1.xpose.msra.mxu0 0.0
  %2415 = vmatprep.subr.mxu0 0.0
  %2416 = vmatpush1.xpose.msra.mxu0 0.0
  %2417 = vmatprep.subr.mxu0 0.0
  %2418 = vmatpush1.xpose.msra.mxu0 0.0
  %2419 = vmatprep.subr.mxu0 0.0
  %2420 = vmatpush1.xpose.msra.mxu0 0.0
  %2421 = vmatprep.subr.mxu0 0.0
  %2422 = vmatpush1.xpose.msra.mxu0 0.0
  %2423 = vmatprep.subr.mxu0 0.0
  %2424 = vmatpush1.xpose.msra.mxu0 0.0
  %2425 = vmatprep.subr.mxu0 0.0
  %2426 = vmatpush1.xpose.msra.mxu0 0.0
  %2427 = vmatprep.subr.mxu0 0.0
  %2428 = vmatpush1.xpose.msra.mxu0 0.0
  %2429 = vmatprep.subr.mxu0 0.0
  %2430 = vmatpush1.xpose.msra.mxu0 0.0
  %2431 = vmatprep.subr.mxu0 0.0
  %2432 = vmatpush1.xpose.msra.mxu0 0.0
  %2433 = vmatprep.subr.mxu0 0.0
  %2434 = vmatpush1.xpose.msra.mxu0 0.0
  %2435 = vmatprep.subr.mxu0 0.0
  %2436 = vmatpush1.xpose.msra.mxu0 0.0
  %2437 = vmatprep.subr.mxu0 0.0
  %2438 = vmatpush1.xpose.msra.mxu0 0.0
  %2439 = vmatprep.subr.mxu0 0.0
  %2440 = vmatpush1.xpose.msra.mxu0 0.0
  %2441 = vmatprep.subr.mxu0 0.0
  %2442 = vmatpush1.xpose.msra.mxu0 0.0
  %2443 = vmatprep.subr.mxu0 0.0
  %2444 = vmatpush1.xpose.msra.mxu0 0.0
  %2445 = vmatprep.subr.mxu0 0.0
  %2446 = vmatpush1.xpose.msra.mxu0 0.0
  %2447 = vmatprep.subr.mxu0 0.0
  %2448 = vmatpush1.xpose.msra.mxu0 0.0
  %2449 = vmatprep.subr.mxu0 0.0
  %2450 = vmatpush1.xpose.msra.mxu0 0.0
  %2451 = vmatprep.subr.mxu0 0.0
  %2452 = vmatpush1.xpose.msra.mxu0 0.0
  %2453 = vmatprep.subr.mxu0 0.0
  %2454 = vmatpush1.xpose.msra.mxu0 0.0
  %2455 = vmatprep.mubr.f32.mxu0 0.0
  %2456 = vmatmul.mubr.f32.gmra.mrb[0].mxu0 %v2313
  %v2457 = vpop.f32.mrb[0].mxu0
  %v2458 = vadd.f32 %v2388, %v2457
  %v2459 = vpop.f32.mrb[0].mxu0
  %2460 = vdwg.mxu0
  %v2462 = vsel %vm2162, %v2044, 0
  %v2465 = vsel %vm2162, %v2092, 0
  %v2468 = vsel %vm2162, %v2095, 0
  %2470 = vmatprep.subr.mxu0 %v2091
  %2471 = vmatpush1.xpose.msra.mxu0 %v2090
  %2472 = vmatprep.subr.mxu0 %v2094
  %2473 = vmatpush1.xpose.msra.mxu0 %v2093
  %2474 = vmatprep.subr.mxu0 0.0
  %2475 = vmatpush1.xpose.msra.mxu0 0.0
  %2476 = vmatprep.subr.mxu0 0.0
  %2477 = vmatpush1.xpose.msra.mxu0 0.0
  %2478 = vmatprep.subr.mxu0 0.0
  %2479 = vmatpush1.xpose.msra.mxu0 0.0
  %2480 = vmatprep.subr.mxu0 0.0
  %2481 = vmatpush1.xpose.msra.mxu0 0.0
  %2482 = vmatprep.subr.mxu0 0.0
  %2483 = vmatpush1.xpose.msra.mxu0 0.0
  %2484 = vmatprep.subr.mxu0 0.0
  %2485 = vmatpush1.xpose.msra.mxu0 0.0
  %2486 = vmatprep.subr.mxu0 0.0
  %2487 = vmatpush1.xpose.msra.mxu0 0.0
  %2488 = vmatprep.subr.mxu0 0.0
  %2489 = vmatpush1.xpose.msra.mxu0 0.0
  %2490 = vmatprep.subr.mxu0 0.0
  %2491 = vmatpush1.xpose.msra.mxu0 0.0
  %2492 = vmatprep.subr.mxu0 0.0
  %2493 = vmatpush1.xpose.msra.mxu0 0.0
  %2494 = vmatprep.subr.mxu0 0.0
  %2495 = vmatpush1.xpose.msra.mxu0 0.0
  %2496 = vmatprep.subr.mxu0 0.0
  %2497 = vmatpush1.xpose.msra.mxu0 0.0
  %2498 = vmatprep.subr.mxu0 0.0
  %2499 = vmatpush1.xpose.msra.mxu0 0.0
  %2500 = vmatprep.subr.mxu0 0.0
  %2501 = vmatpush1.xpose.msra.mxu0 0.0
  %2502 = vmatprep.subr.mxu0 0.0
  %2503 = vmatpush1.xpose.msra.mxu0 0.0
  %2504 = vmatprep.subr.mxu0 0.0
  %2505 = vmatpush1.xpose.msra.mxu0 0.0
  %2506 = vmatprep.subr.mxu0 0.0
  %2507 = vmatpush1.xpose.msra.mxu0 0.0
  %2508 = vmatprep.subr.mxu0 0.0
  %2509 = vmatpush1.xpose.msra.mxu0 0.0
  %2510 = vmatprep.subr.mxu0 0.0
  %2511 = vmatpush1.xpose.msra.mxu0 0.0
  %2512 = vmatprep.subr.mxu0 0.0
  %2513 = vmatpush1.xpose.msra.mxu0 0.0
  %2514 = vmatprep.subr.mxu0 0.0
  %2515 = vmatpush1.xpose.msra.mxu0 0.0
  %2516 = vmatprep.subr.mxu0 0.0
  %2517 = vmatpush1.xpose.msra.mxu0 0.0
  %2518 = vmatprep.subr.mxu0 0.0
  %2519 = vmatpush1.xpose.msra.mxu0 0.0
  %2520 = vmatprep.subr.mxu0 0.0
  %2521 = vmatpush1.xpose.msra.mxu0 0.0
  %2522 = vmatprep.subr.mxu0 0.0
  %2523 = vmatpush1.xpose.msra.mxu0 0.0
  %2524 = vmatprep.subr.mxu0 0.0
  %2525 = vmatpush1.xpose.msra.mxu0 0.0
  %2526 = vmatprep.subr.mxu0 0.0
  %2527 = vmatpush1.xpose.msra.mxu0 0.0
  %2528 = vmatprep.subr.mxu0 0.0
  %2529 = vmatpush1.xpose.msra.mxu0 0.0
  %2530 = vmatprep.subr.mxu0 0.0
  %2531 = vmatpush1.xpose.msra.mxu0 0.0
  %2532 = vmatprep.subr.mxu0 0.0
  %2533 = vmatpush1.xpose.msra.mxu0 0.0
  %2534 = vmatprep.mubr.f32.mxu0 %v2043
  %2535 = vmatmul.mubr.f32.gmra.mrb[0].mxu0 %v2042
  %v2536 = vpop.f32.mrb[0].mxu0
  %v2537 = vadd.f32 0.0, %v2536
  %v2538 = vpop.f32.mrb[0].mxu0
  %2539 = vdwg.mxu0
  %2540 = vmatprep.subr.mxu0 0.0
  %2541 = vmatpush1.xpose.msra.mxu0 %v2465
  %2542 = vmatprep.subr.mxu0 0.0
  %2543 = vmatpush1.xpose.msra.mxu0 %v2468
  %2544 = vmatprep.subr.mxu0 0.0
  %2545 = vmatpush1.xpose.msra.mxu0 0.0
  %2546 = vmatprep.subr.mxu0 0.0
  %2547 = vmatpush1.xpose.msra.mxu0 0.0
  %2548 = vmatprep.subr.mxu0 0.0
  %2549 = vmatpush1.xpose.msra.mxu0 0.0
  %2550 = vmatprep.subr.mxu0 0.0
  %2551 = vmatpush1.xpose.msra.mxu0 0.0
  %2552 = vmatprep.subr.mxu0 0.0
  %2553 = vmatpush1.xpose.msra.mxu0 0.0
  %2554 = vmatprep.subr.mxu0 0.0
  %2555 = vmatpush1.xpose.msra.mxu0 0.0
  %2556 = vmatprep.subr.mxu0 0.0
  %2557 = vmatpush1.xpose.msra.mxu0 0.0
  %2558 = vmatprep.subr.mxu0 0.0
  %2559 = vmatpush1.xpose.msra.mxu0 0.0
  %2560 = vmatprep.subr.mxu0 0.0
  %2561 = vmatpush1.xpose.msra.mxu0 0.0
  %2562 = vmatprep.subr.mxu0 0.0
  %2563 = vmatpush1.xpose.msra.mxu0 0.0
  %2564 = vmatprep.subr.mxu0 0.0
  %2565 = vmatpush1.xpose.msra.mxu0 0.0
  %2566 = vmatprep.subr.mxu0 0.0
  %2567 = vmatpush1.xpose.msra.mxu0 0.0
  %2568 = vmatprep.subr.mxu0 0.0
  %2569 = vmatpush1.xpose.msra.mxu0 0.0
  %2570 = vmatprep.subr.mxu0 0.0
  %2571 = vmatpush1.xpose.msra.mxu0 0.0
  %2572 = vmatprep.subr.mxu0 0.0
  %2573 = vmatpush1.xpose.msra.mxu0 0.0
  %2574 = vmatprep.subr.mxu0 0.0
  %2575 = vmatpush1.xpose.msra.mxu0 0.0
  %2576 = vmatprep.subr.mxu0 0.0
  %2577 = vmatpush1.xpose.msra.mxu0 0.0
  %2578 = vmatprep.subr.mxu0 0.0
  %2579 = vmatpush1.xpose.msra.mxu0 0.0
  %2580 = vmatprep.subr.mxu0 0.0
  %2581 = vmatpush1.xpose.msra.mxu0 0.0
  %2582 = vmatprep.subr.mxu0 0.0
  %2583 = vmatpush1.xpose.msra.mxu0 0.0
  %2584 = vmatprep.subr.mxu0 0.0
  %2585 = vmatpush1.xpose.msra.mxu0 0.0
  %2586 = vmatprep.subr.mxu0 0.0
  %2587 = vmatpush1.xpose.msra.mxu0 0.0
  %2588 = vmatprep.subr.mxu0 0.0
  %2589 = vmatpush1.xpose.msra.mxu0 0.0
  %2590 = vmatprep.subr.mxu0 0.0
  %2591 = vmatpush1.xpose.msra.mxu0 0.0
  %2592 = vmatprep.subr.mxu0 0.0
  %2593 = vmatpush1.xpose.msra.mxu0 0.0
  %2594 = vmatprep.subr.mxu0 0.0
  %2595 = vmatpush1.xpose.msra.mxu0 0.0
  %2596 = vmatprep.subr.mxu0 0.0
  %2597 = vmatpush1.xpose.msra.mxu0 0.0
  %2598 = vmatprep.subr.mxu0 0.0
  %2599 = vmatpush1.xpose.msra.mxu0 0.0
  %2600 = vmatprep.subr.mxu0 0.0
  %2601 = vmatpush1.xpose.msra.mxu0 0.0
  %2602 = vmatprep.subr.mxu0 0.0
  %2603 = vmatpush1.xpose.msra.mxu0 0.0
  %2604 = vmatprep.mubr.f32.mxu0 0.0
  %2605 = vmatmul.mubr.f32.gmra.mrb[0].mxu0 %v2462
  %v2606 = vpop.f32.mrb[0].mxu0
  %v2607 = vadd.f32 %v2537, %v2606
  %v2608 = vpop.f32.mrb[0].mxu0
  %2609 = vdwg.mxu0
  %v2611 = vsel %vm2162, %v2047, 0
  %v2614 = vsel %vm2162, %v2098, 0
  %v2617 = vsel %vm2162, %v2101, 0
  %2619 = vmatprep.subr.mxu0 %v2097
  %2620 = vmatpush1.xpose.msra.mxu0 %v2096
  %2621 = vmatprep.subr.mxu0 %v2100
  %2622 = vmatpush1.xpose.msra.mxu0 %v2099
  %2623 = vmatprep.subr.mxu0 0.0
  %2624 = vmatpush1.xpose.msra.mxu0 0.0
  %2625 = vmatprep.subr.mxu0 0.0
  %2626 = vmatpush1.xpose.msra.mxu0 0.0
  %2627 = vmatprep.subr.mxu0 0.0
  %2628 = vmatpush1.xpose.msra.mxu0 0.0
  %2629 = vmatprep.subr.mxu0 0.0
  %2630 = vmatpush1.xpose.msra.mxu0 0.0
  %2631 = vmatprep.subr.mxu0 0.0
  %2632 = vmatpush1.xpose.msra.mxu0 0.0
  %2633 = vmatprep.subr.mxu0 0.0
  %2634 = vmatpush1.xpose.msra.mxu0 0.0
  %2635 = vmatprep.subr.mxu0 0.0
  %2636 = vmatpush1.xpose.msra.mxu0 0.0
  %2637 = vmatprep.subr.mxu0 0.0
  %2638 = vmatpush1.xpose.msra.mxu0 0.0
  %2639 = vmatprep.subr.mxu0 0.0
  %2640 = vmatpush1.xpose.msra.mxu0 0.0
  %2641 = vmatprep.subr.mxu0 0.0
  %2642 = vmatpush1.xpose.msra.mxu0 0.0
  %2643 = vmatprep.subr.mxu0 0.0
  %2644 = vmatpush1.xpose.msra.mxu0 0.0
  %2645 = vmatprep.subr.mxu0 0.0
  %2646 = vmatpush1.xpose.msra.mxu0 0.0
  %2647 = vmatprep.subr.mxu0 0.0
  %2648 = vmatpush1.xpose.msra.mxu0 0.0
  %2649 = vmatprep.subr.mxu0 0.0
  %2650 = vmatpush1.xpose.msra.mxu0 0.0
  %2651 = vmatprep.subr.mxu0 0.0
  %2652 = vmatpush1.xpose.msra.mxu0 0.0
  %2653 = vmatprep.subr.mxu0 0.0
  %2654 = vmatpush1.xpose.msra.mxu0 0.0
  %2655 = vmatprep.subr.mxu0 0.0
  %2656 = vmatpush1.xpose.msra.mxu0 0.0
  %2657 = vmatprep.subr.mxu0 0.0
  %2658 = vmatpush1.xpose.msra.mxu0 0.0
  %2659 = vmatprep.subr.mxu0 0.0
  %2660 = vmatpush1.xpose.msra.mxu0 0.0
  %2661 = vmatprep.subr.mxu0 0.0
  %2662 = vmatpush1.xpose.msra.mxu0 0.0
  %2663 = vmatprep.subr.mxu0 0.0
  %2664 = vmatpush1.xpose.msra.mxu0 0.0
  %2665 = vmatprep.subr.mxu0 0.0
  %2666 = vmatpush1.xpose.msra.mxu0 0.0
  %2667 = vmatprep.subr.mxu0 0.0
  %2668 = vmatpush1.xpose.msra.mxu0 0.0
  %2669 = vmatprep.subr.mxu0 0.0
  %2670 = vmatpush1.xpose.msra.mxu0 0.0
  %2671 = vmatprep.subr.mxu0 0.0
  %2672 = vmatpush1.xpose.msra.mxu0 0.0
  %2673 = vmatprep.subr.mxu0 0.0
  %2674 = vmatpush1.xpose.msra.mxu0 0.0
  %2675 = vmatprep.subr.mxu0 0.0
  %2676 = vmatpush1.xpose.msra.mxu0 0.0
  %2677 = vmatprep.subr.mxu0 0.0
  %2678 = vmatpush1.xpose.msra.mxu0 0.0
  %2679 = vmatprep.subr.mxu0 0.0
  %2680 = vmatpush1.xpose.msra.mxu0 0.0
  %2681 = vmatprep.subr.mxu0 0.0
  %2682 = vmatpush1.xpose.msra.mxu0 0.0
  %2683 = vmatprep.mubr.f32.mxu0 %v2046
  %2684 = vmatmul.mubr.f32.gmra.mrb[0].mxu0 %v2045
  %v2685 = vpop.f32.mrb[0].mxu0
  %v2686 = vadd.f32 0.0, %v2685
  %v2687 = vpop.f32.mrb[0].mxu0
  %2688 = vdwg.mxu0
  %2689 = vmatprep.subr.mxu0 0.0
  %2690 = vmatpush1.xpose.msra.mxu0 %v2614
  %2691 = vmatprep.subr.mxu0 0.0
  %2692 = vmatpush1.xpose.msra.mxu0 %v2617
  %2693 = vmatprep.subr.mxu0 0.0
  %2694 = vmatpush1.xpose.msra.mxu0 0.0
  %2695 = vmatprep.subr.mxu0 0.0
  %2696 = vmatpush1.xpose.msra.mxu0 0.0
  %2697 = vmatprep.subr.mxu0 0.0
  %2698 = vmatpush1.xpose.msra.mxu0 0.0
  %2699 = vmatprep.subr.mxu0 0.0
  %2700 = vmatpush1.xpose.msra.mxu0 0.0
  %2701 = vmatprep.subr.mxu0 0.0
  %2702 = vmatpush1.xpose.msra.mxu0 0.0
  %2703 = vmatprep.subr.mxu0 0.0
  %2704 = vmatpush1.xpose.msra.mxu0 0.0
  %2705 = vmatprep.subr.mxu0 0.0
  %2706 = vmatpush1.xpose.msra.mxu0 0.0
  %2707 = vmatprep.subr.mxu0 0.0
  %2708 = vmatpush1.xpose.msra.mxu0 0.0
  %2709 = vmatprep.subr.mxu0 0.0
  %2710 = vmatpush1.xpose.msra.mxu0 0.0
  %2711 = vmatprep.subr.mxu0 0.0
  %2712 = vmatpush1.xpose.msra.mxu0 0.0
  %2713 = vmatprep.subr.mxu0 0.0
  %2714 = vmatpush1.xpose.msra.mxu0 0.0
  %2715 = vmatprep.subr.mxu0 0.0
  %2716 = vmatpush1.xpose.msra.mxu0 0.0
  %2717 = vmatprep.subr.mxu0 0.0
  %2718 = vmatpush1.xpose.msra.mxu0 0.0
  %2719 = vmatprep.subr.mxu0 0.0
  %2720 = vmatpush1.xpose.msra.mxu0 0.0
  %2721 = vmatprep.subr.mxu0 0.0
  %2722 = vmatpush1.xpose.msra.mxu0 0.0
  %2723 = vmatprep.subr.mxu0 0.0
  %2724 = vmatpush1.xpose.msra.mxu0 0.0
  %2725 = vmatprep.subr.mxu0 0.0
  %2726 = vmatpush1.xpose.msra.mxu0 0.0
  %2727 = vmatprep.subr.mxu0 0.0
  %2728 = vmatpush1.xpose.msra.mxu0 0.0
  %2729 = vmatprep.subr.mxu0 0.0
  %2730 = vmatpush1.xpose.msra.mxu0 0.0
  %2731 = vmatprep.subr.mxu0 0.0
  %2732 = vmatpush1.xpose.msra.mxu0 0.0
  %2733 = vmatprep.subr.mxu0 0.0
  %2734 = vmatpush1.xpose.msra.mxu0 0.0
  %2735 = vmatprep.subr.mxu0 0.0
  %2736 = vmatpush1.xpose.msra.mxu0 0.0
  %2737 = vmatprep.subr.mxu0 0.0
  %2738 = vmatpush1.xpose.msra.mxu0 0.0
  %2739 = vmatprep.subr.mxu0 0.0
  %2740 = vmatpush1.xpose.msra.mxu0 0.0
  %2741 = vmatprep.subr.mxu0 0.0
  %2742 = vmatpush1.xpose.msra.mxu0 0.0
  %2743 = vmatprep.subr.mxu0 0.0
  %2744 = vmatpush1.xpose.msra.mxu0 0.0
  %2745 = vmatprep.subr.mxu0 0.0
  %2746 = vmatpush1.xpose.msra.mxu0 0.0
  %2747 = vmatprep.subr.mxu0 0.0
  %2748 = vmatpush1.xpose.msra.mxu0 0.0
  %2749 = vmatprep.subr.mxu0 0.0
  %2750 = vmatpush1.xpose.msra.mxu0 0.0
  %2751 = vmatprep.subr.mxu0 0.0
  %2752 = vmatpush1.xpose.msra.mxu0 0.0
  %2753 = vmatprep.mubr.f32.mxu0 0.0
  %2754 = vmatmul.mubr.f32.gmra.mrb[0].mxu0 %v2611
  %v2755 = vpop.f32.mrb[0].mxu0
  %v2756 = vadd.f32 %v2686, %v2755
  %v2757 = vpop.f32.mrb[0].mxu0
  %2758 = vdwg.mxu0
  %v2760 = vsel %vm2162, %v2050, 0
  %v2763 = vsel %vm2162, %v2104, 0
  %v2766 = vsel %vm2162, %v2107, 0
  %2768 = vmatprep.subr.mxu0 %v2103
  %2769 = vmatpush1.xpose.msra.mxu0 %v2102
  %2770 = vmatprep.subr.mxu0 %v2106
  %2771 = vmatpush1.xpose.msra.mxu0 %v2105
  %2772 = vmatprep.subr.mxu0 0.0
  %2773 = vmatpush1.xpose.msra.mxu0 0.0
  %2774 = vmatprep.subr.mxu0 0.0
  %2775 = vmatpush1.xpose.msra.mxu0 0.0
  %2776 = vmatprep.subr.mxu0 0.0
  %2777 = vmatpush1.xpose.msra.mxu0 0.0
  %2778 = vmatprep.subr.mxu0 0.0
  %2779 = vmatpush1.xpose.msra.mxu0 0.0
  %2780 = vmatprep.subr.mxu0 0.0
  %2781 = vmatpush1.xpose.msra.mxu0 0.0
  %2782 = vmatprep.subr.mxu0 0.0
  %2783 = vmatpush1.xpose.msra.mxu0 0.0
  %2784 = vmatprep.subr.mxu0 0.0
  %2785 = vmatpush1.xpose.msra.mxu0 0.0
  %2786 = vmatprep.subr.mxu0 0.0
  %2787 = vmatpush1.xpose.msra.mxu0 0.0
  %2788 = vmatprep.subr.mxu0 0.0
  %2789 = vmatpush1.xpose.msra.mxu0 0.0
  %2790 = vmatprep.subr.mxu0 0.0
  %2791 = vmatpush1.xpose.msra.mxu0 0.0
  %2792 = vmatprep.subr.mxu0 0.0
  %2793 = vmatpush1.xpose.msra.mxu0 0.0
  %2794 = vmatprep.subr.mxu0 0.0
  %2795 = vmatpush1.xpose.msra.mxu0 0.0
  %2796 = vmatprep.subr.mxu0 0.0
  %2797 = vmatpush1.xpose.msra.mxu0 0.0
  %2798 = vmatprep.subr.mxu0 0.0
  %2799 = vmatpush1.xpose.msra.mxu0 0.0
  %2800 = vmatprep.subr.mxu0 0.0
  %2801 = vmatpush1.xpose.msra.mxu0 0.0
  %2802 = vmatprep.subr.mxu0 0.0
  %2803 = vmatpush1.xpose.msra.mxu0 0.0
  %2804 = vmatprep.subr.mxu0 0.0
  %2805 = vmatpush1.xpose.msra.mxu0 0.0
  %2806 = vmatprep.subr.mxu0 0.0
  %2807 = vmatpush1.xpose.msra.mxu0 0.0
  %2808 = vmatprep.subr.mxu0 0.0
  %2809 = vmatpush1.xpose.msra.mxu0 0.0
  %2810 = vmatprep.subr.mxu0 0.0
  %2811 = vmatpush1.xpose.msra.mxu0 0.0
  %2812 = vmatprep.subr.mxu0 0.0
  %2813 = vmatpush1.xpose.msra.mxu0 0.0
  %2814 = vmatprep.subr.mxu0 0.0
  %2815 = vmatpush1.xpose.msra.mxu0 0.0
  %2816 = vmatprep.subr.mxu0 0.0
  %2817 = vmatpush1.xpose.msra.mxu0 0.0
  %2818 = vmatprep.subr.mxu0 0.0
  %2819 = vmatpush1.xpose.msra.mxu0 0.0
  %2820 = vmatprep.subr.mxu0 0.0
  %2821 = vmatpush1.xpose.msra.mxu0 0.0
  %2822 = vmatprep.subr.mxu0 0.0
  %2823 = vmatpush1.xpose.msra.mxu0 0.0
  %2824 = vmatprep.subr.mxu0 0.0
  %2825 = vmatpush1.xpose.msra.mxu0 0.0
  %2826 = vmatprep.subr.mxu0 0.0
  %2827 = vmatpush1.xpose.msra.mxu0 0.0
  %2828 = vmatprep.subr.mxu0 0.0
  %2829 = vmatpush1.xpose.msra.mxu0 0.0
  %2830 = vmatprep.subr.mxu0 0.0
  %2831 = vmatpush1.xpose.msra.mxu0 0.0
  %2832 = vmatprep.mubr.f32.mxu0 %v2049
  %2833 = vmatmul.mubr.f32.gmra.mrb[0].mxu0 %v2048
  %v2834 = vpop.f32.mrb[0].mxu0
  %v2835 = vadd.f32 0.0, %v2834
  %v2836 = vpop.f32.mrb[0].mxu0
  %2837 = vdwg.mxu0
  %2838 = vmatprep.subr.mxu0 0.0
  %2839 = vmatpush1.xpose.msra.mxu0 %v2763
  %2840 = vmatprep.subr.mxu0 0.0
  %2841 = vmatpush1.xpose.msra.mxu0 %v2766
  %2842 = vmatprep.subr.mxu0 0.0
  %2843 = vmatpush1.xpose.msra.mxu0 0.0
  %2844 = vmatprep.subr.mxu0 0.0
  %2845 = vmatpush1.xpose.msra.mxu0 0.0
  %2846 = vmatprep.subr.mxu0 0.0
  %2847 = vmatpush1.xpose.msra.mxu0 0.0
  %2848 = vmatprep.subr.mxu0 0.0
  %2849 = vmatpush1.xpose.msra.mxu0 0.0
  %2850 = vmatprep.subr.mxu0 0.0
  %2851 = vmatpush1.xpose.msra.mxu0 0.0
  %2852 = vmatprep.subr.mxu0 0.0
  %2853 = vmatpush1.xpose.msra.mxu0 0.0
  %2854 = vmatprep.subr.mxu0 0.0
  %2855 = vmatpush1.xpose.msra.mxu0 0.0
  %2856 = vmatprep.subr.mxu0 0.0
  %2857 = vmatpush1.xpose.msra.mxu0 0.0
  %2858 = vmatprep.subr.mxu0 0.0
  %2859 = vmatpush1.xpose.msra.mxu0 0.0
  %2860 = vmatprep.subr.mxu0 0.0
  %2861 = vmatpush1.xpose.msra.mxu0 0.0
  %2862 = vmatprep.subr.mxu0 0.0
  %2863 = vmatpush1.xpose.msra.mxu0 0.0
  %2864 = vmatprep.subr.mxu0 0.0
  %2865 = vmatpush1.xpose.msra.mxu0 0.0
  %2866 = vmatprep.subr.mxu0 0.0
  %2867 = vmatpush1.xpose.msra.mxu0 0.0
  %2868 = vmatprep.subr.mxu0 0.0
  %2869 = vmatpush1.xpose.msra.mxu0 0.0
  %2870 = vmatprep.subr.mxu0 0.0
  %2871 = vmatpush1.xpose.msra.mxu0 0.0
  %2872 = vmatprep.subr.mxu0 0.0
  %2873 = vmatpush1.xpose.msra.mxu0 0.0
  %2874 = vmatprep.subr.mxu0 0.0
  %2875 = vmatpush1.xpose.msra.mxu0 0.0
  %2876 = vmatprep.subr.mxu0 0.0
  %2877 = vmatpush1.xpose.msra.mxu0 0.0
  %2878 = vmatprep.subr.mxu0 0.0
  %2879 = vmatpush1.xpose.msra.mxu0 0.0
  %2880 = vmatprep.subr.mxu0 0.0
  %2881 = vmatpush1.xpose.msra.mxu0 0.0
  %2882 = vmatprep.subr.mxu0 0.0
  %2883 = vmatpush1.xpose.msra.mxu0 0.0
  %2884 = vmatprep.subr.mxu0 0.0
  %2885 = vmatpush1.xpose.msra.mxu0 0.0
  %2886 = vmatprep.subr.mxu0 0.0
  %2887 = vmatpush1.xpose.msra.mxu0 0.0
  %2888 = vmatprep.subr.mxu0 0.0
  %2889 = vmatpush1.xpose.msra.mxu0 0.0
  %2890 = vmatprep.subr.mxu0 0.0
  %2891 = vmatpush1.xpose.msra.mxu0 0.0
  %2892 = vmatprep.subr.mxu0 0.0
  %2893 = vmatpush1.xpose.msra.mxu0 0.0
  %2894 = vmatprep.subr.mxu0 0.0
  %2895 = vmatpush1.xpose.msra.mxu0 0.0
  %2896 = vmatprep.subr.mxu0 0.0
  %2897 = vmatpush1.xpose.msra.mxu0 0.0
  %2898 = vmatprep.subr.mxu0 0.0
  %2899 = vmatpush1.xpose.msra.mxu0 0.0
  %2900 = vmatprep.subr.mxu0 0.0
  %2901 = vmatpush1.xpose.msra.mxu0 0.0
  %2902 = vmatprep.mubr.f32.mxu0 0.0
  %2903 = vmatmul.mubr.f32.gmra.mrb[0].mxu0 %v2760
  %v2904 = vpop.f32.mrb[0].mxu0
  %v2905 = vadd.f32 %v2835, %v2904
  %v2906 = vpop.f32.mrb[0].mxu0
  %2907 = vdwg.mxu0
  %v2909 = vsel %vm2162, %v2053, 0
  %v2912 = vsel %vm2162, %v2110, 0
  %v2915 = vsel %vm2162, %v2113, 0
  %2917 = vmatprep.subr.mxu0 %v2109
  %2918 = vmatpush1.xpose.msra.mxu0 %v2108
  %2919 = vmatprep.subr.mxu0 %v2112
  %2920 = vmatpush1.xpose.msra.mxu0 %v2111
  %2921 = vmatprep.subr.mxu0 0.0
  %2922 = vmatpush1.xpose.msra.mxu0 0.0
  %2923 = vmatprep.subr.mxu0 0.0
  %2924 = vmatpush1.xpose.msra.mxu0 0.0
  %2925 = vmatprep.subr.mxu0 0.0
  %2926 = vmatpush1.xpose.msra.mxu0 0.0
  %2927 = vmatprep.subr.mxu0 0.0
  %2928 = vmatpush1.xpose.msra.mxu0 0.0
  %2929 = vmatprep.subr.mxu0 0.0
  %2930 = vmatpush1.xpose.msra.mxu0 0.0
  %2931 = vmatprep.subr.mxu0 0.0
  %2932 = vmatpush1.xpose.msra.mxu0 0.0
  %2933 = vmatprep.subr.mxu0 0.0
  %2934 = vmatpush1.xpose.msra.mxu0 0.0
  %2935 = vmatprep.subr.mxu0 0.0
  %2936 = vmatpush1.xpose.msra.mxu0 0.0
  %2937 = vmatprep.subr.mxu0 0.0
  %2938 = vmatpush1.xpose.msra.mxu0 0.0
  %2939 = vmatprep.subr.mxu0 0.0
  %2940 = vmatpush1.xpose.msra.mxu0 0.0
  %2941 = vmatprep.subr.mxu0 0.0
  %2942 = vmatpush1.xpose.msra.mxu0 0.0
  %2943 = vmatprep.subr.mxu0 0.0
  %2944 = vmatpush1.xpose.msra.mxu0 0.0
  %2945 = vmatprep.subr.mxu0 0.0
  %2946 = vmatpush1.xpose.msra.mxu0 0.0
  %2947 = vmatprep.subr.mxu0 0.0
  %2948 = vmatpush1.xpose.msra.mxu0 0.0
  %2949 = vmatprep.subr.mxu0 0.0
  %2950 = vmatpush1.xpose.msra.mxu0 0.0
  %2951 = vmatprep.subr.mxu0 0.0
  %2952 = vmatpush1.xpose.msra.mxu0 0.0
  %2953 = vmatprep.subr.mxu0 0.0
  %2954 = vmatpush1.xpose.msra.mxu0 0.0
  %2955 = vmatprep.subr.mxu0 0.0
  %2956 = vmatpush1.xpose.msra.mxu0 0.0
  %2957 = vmatprep.subr.mxu0 0.0
  %2958 = vmatpush1.xpose.msra.mxu0 0.0
  %2959 = vmatprep.subr.mxu0 0.0
  %2960 = vmatpush1.xpose.msra.mxu0 0.0
  %2961 = vmatprep.subr.mxu0 0.0
  %2962 = vmatpush1.xpose.msra.mxu0 0.0
  %2963 = vmatprep.subr.mxu0 0.0
  %2964 = vmatpush1.xpose.msra.mxu0 0.0
  %2965 = vmatprep.subr.mxu0 0.0
  %2966 = vmatpush1.xpose.msra.mxu0 0.0
  %2967 = vmatprep.subr.mxu0 0.0
  %2968 = vmatpush1.xpose.msra.mxu0 0.0
  %2969 = vmatprep.subr.mxu0 0.0
  %2970 = vmatpush1.xpose.msra.mxu0 0.0
  %2971 = vmatprep.subr.mxu0 0.0
  %2972 = vmatpush1.xpose.msra.mxu0 0.0
  %2973 = vmatprep.subr.mxu0 0.0
  %2974 = vmatpush1.xpose.msra.mxu0 0.0
  %2975 = vmatprep.subr.mxu0 0.0
  %2976 = vmatpush1.xpose.msra.mxu0 0.0
  %2977 = vmatprep.subr.mxu0 0.0
  %2978 = vmatpush1.xpose.msra.mxu0 0.0
  %2979 = vmatprep.subr.mxu0 0.0
  %2980 = vmatpush1.xpose.msra.mxu0 0.0
  %2981 = vmatprep.mubr.f32.mxu0 %v2052
  %2982 = vmatmul.mubr.f32.gmra.mrb[0].mxu0 %v2051
  %v2983 = vpop.f32.mrb[0].mxu0
  %v2984 = vadd.f32 0.0, %v2983
  %v2985 = vpop.f32.mrb[0].mxu0
  %2986 = vdwg.mxu0
  %2987 = vmatprep.subr.mxu0 0.0
  %2988 = vmatpush1.xpose.msra.mxu0 %v2912
  %2989 = vmatprep.subr.mxu0 0.0
  %2990 = vmatpush1.xpose.msra.mxu0 %v2915
  %2991 = vmatprep.subr.mxu0 0.0
  %2992 = vmatpush1.xpose.msra.mxu0 0.0
  %2993 = vmatprep.subr.mxu0 0.0
  %2994 = vmatpush1.xpose.msra.mxu0 0.0
  %2995 = vmatprep.subr.mxu0 0.0
  %2996 = vmatpush1.xpose.msra.mxu0 0.0
  %2997 = vmatprep.subr.mxu0 0.0
  %2998 = vmatpush1.xpose.msra.mxu0 0.0
  %2999 = vmatprep.subr.mxu0 0.0
  %3000 = vmatpush1.xpose.msra.mxu0 0.0
  %3001 = vmatprep.subr.mxu0 0.0
  %3002 = vmatpush1.xpose.msra.mxu0 0.0
  %3003 = vmatprep.subr.mxu0 0.0
  %3004 = vmatpush1.xpose.msra.mxu0 0.0
  %3005 = vmatprep.subr.mxu0 0.0
  %3006 = vmatpush1.xpose.msra.mxu0 0.0
  %3007 = vmatprep.subr.mxu0 0.0
  %3008 = vmatpush1.xpose.msra.mxu0 0.0
  %3009 = vmatprep.subr.mxu0 0.0
  %3010 = vmatpush1.xpose.msra.mxu0 0.0
  %3011 = vmatprep.subr.mxu0 0.0
  %3012 = vmatpush1.xpose.msra.mxu0 0.0
  %3013 = vmatprep.subr.mxu0 0.0
  %3014 = vmatpush1.xpose.msra.mxu0 0.0
  %3015 = vmatprep.subr.mxu0 0.0
  %3016 = vmatpush1.xpose.msra.mxu0 0.0
  %3017 = vmatprep.subr.mxu0 0.0
  %3018 = vmatpush1.xpose.msra.mxu0 0.0
  %3019 = vmatprep.subr.mxu0 0.0
  %3020 = vmatpush1.xpose.msra.mxu0 0.0
  %3021 = vmatprep.subr.mxu0 0.0
  %3022 = vmatpush1.xpose.msra.mxu0 0.0
  %3023 = vmatprep.subr.mxu0 0.0
  %3024 = vmatpush1.xpose.msra.mxu0 0.0
  %3025 = vmatprep.subr.mxu0 0.0
  %3026 = vmatpush1.xpose.msra.mxu0 0.0
  %3027 = vmatprep.subr.mxu0 0.0
  %3028 = vmatpush1.xpose.msra.mxu0 0.0
  %3029 = vmatprep.subr.mxu0 0.0
  %3030 = vmatpush1.xpose.msra.mxu0 0.0
  %3031 = vmatprep.subr.mxu0 0.0
  %3032 = vmatpush1.xpose.msra.mxu0 0.0
  %3033 = vmatprep.subr.mxu0 0.0
  %3034 = vmatpush1.xpose.msra.mxu0 0.0
  %3035 = vmatprep.subr.mxu0 0.0
  %3036 = vmatpush1.xpose.msra.mxu0 0.0
  %3037 = vmatprep.subr.mxu0 0.0
  %3038 = vmatpush1.xpose.msra.mxu0 0.0
  %3039 = vmatprep.subr.mxu0 0.0
  %3040 = vmatpush1.xpose.msra.mxu0 0.0
  %3041 = vmatprep.subr.mxu0 0.0
  %3042 = vmatpush1.xpose.msra.mxu0 0.0
  %3043 = vmatprep.subr.mxu0 0.0
  %3044 = vmatpush1.xpose.msra.mxu0 0.0
  %3045 = vmatprep.subr.mxu0 0.0
  %3046 = vmatpush1.xpose.msra.mxu0 0.0
  %3047 = vmatprep.subr.mxu0 0.0
  %3048 = vmatpush1.xpose.msra.mxu0 0.0
  %3049 = vmatprep.subr.mxu0 0.0
  %3050 = vmatpush1.xpose.msra.mxu0 0.0
  %3051 = vmatprep.mubr.f32.mxu0 0.0
  %3052 = vmatmul.mubr.f32.gmra.mrb[0].mxu0 %v2909
  %v3053 = vpop.f32.mrb[0].mxu0
  %v3054 = vadd.f32 %v2984, %v3053
  %v3055 = vpop.f32.mrb[0].mxu0
  %3056 = vdwg.mxu0
  %v3058 = vsel %vm2162, %v2056, 0
  %v3061 = vsel %vm2162, %v2116, 0
  %v3064 = vsel %vm2162, %v2119, 0
  %3066 = vmatprep.subr.mxu0 %v2115
  %3067 = vmatpush1.xpose.msra.mxu0 %v2114
  %3068 = vmatprep.subr.mxu0 %v2118
  %3069 = vmatpush1.xpose.msra.mxu0 %v2117
  %3070 = vmatprep.subr.mxu0 0.0
  %3071 = vmatpush1.xpose.msra.mxu0 0.0
  %3072 = vmatprep.subr.mxu0 0.0
  %3073 = vmatpush1.xpose.msra.mxu0 0.0
  %3074 = vmatprep.subr.mxu0 0.0
  %3075 = vmatpush1.xpose.msra.mxu0 0.0
  %3076 = vmatprep.subr.mxu0 0.0
  %3077 = vmatpush1.xpose.msra.mxu0 0.0
  %3078 = vmatprep.subr.mxu0 0.0
  %3079 = vmatpush1.xpose.msra.mxu0 0.0
  %3080 = vmatprep.subr.mxu0 0.0
  %3081 = vmatpush1.xpose.msra.mxu0 0.0
  %3082 = vmatprep.subr.mxu0 0.0
  %3083 = vmatpush1.xpose.msra.mxu0 0.0
  %3084 = vmatprep.subr.mxu0 0.0
  %3085 = vmatpush1.xpose.msra.mxu0 0.0
  %3086 = vmatprep.subr.mxu0 0.0
  %3087 = vmatpush1.xpose.msra.mxu0 0.0
  %3088 = vmatprep.subr.mxu0 0.0
  %3089 = vmatpush1.xpose.msra.mxu0 0.0
  %3090 = vmatprep.subr.mxu0 0.0
  %3091 = vmatpush1.xpose.msra.mxu0 0.0
  %3092 = vmatprep.subr.mxu0 0.0
  %3093 = vmatpush1.xpose.msra.mxu0 0.0
  %3094 = vmatprep.subr.mxu0 0.0
  %3095 = vmatpush1.xpose.msra.mxu0 0.0
  %3096 = vmatprep.subr.mxu0 0.0
  %3097 = vmatpush1.xpose.msra.mxu0 0.0
  %3098 = vmatprep.subr.mxu0 0.0
  %3099 = vmatpush1.xpose.msra.mxu0 0.0
  %3100 = vmatprep.subr.mxu0 0.0
  %3101 = vmatpush1.xpose.msra.mxu0 0.0
  %3102 = vmatprep.subr.mxu0 0.0
  %3103 = vmatpush1.xpose.msra.mxu0 0.0
  %3104 = vmatprep.subr.mxu0 0.0
  %3105 = vmatpush1.xpose.msra.mxu0 0.0
  %3106 = vmatprep.subr.mxu0 0.0
  %3107 = vmatpush1.xpose.msra.mxu0 0.0
  %3108 = vmatprep.subr.mxu0 0.0
  %3109 = vmatpush1.xpose.msra.mxu0 0.0
  %3110 = vmatprep.subr.mxu0 0.0
  %3111 = vmatpush1.xpose.msra.mxu0 0.0
  %3112 = vmatprep.subr.mxu0 0.0
  %3113 = vmatpush1.xpose.msra.mxu0 0.0
  %3114 = vmatprep.subr.mxu0 0.0
  %3115 = vmatpush1.xpose.msra.mxu0 0.0
  %3116 = vmatprep.subr.mxu0 0.0
  %3117 = vmatpush1.xpose.msra.mxu0 0.0
  %3118 = vmatprep.subr.mxu0 0.0
  %3119 = vmatpush1.xpose.msra.mxu0 0.0
  %3120 = vmatprep.subr.mxu0 0.0
  %3121 = vmatpush1.xpose.msra.mxu0 0.0
  %3122 = vmatprep.subr.mxu0 0.0
  %3123 = vmatpush1.xpose.msra.mxu0 0.0
  %3124 = vmatprep.subr.mxu0 0.0
  %3125 = vmatpush1.xpose.msra.mxu0 0.0
  %3126 = vmatprep.subr.mxu0 0.0
  %3127 = vmatpush1.xpose.msra.mxu0 0.0
  %3128 = vmatprep.subr.mxu0 0.0
  %3129 = vmatpush1.xpose.msra.mxu0 0.0
  %3130 = vmatprep.mubr.f32.mxu0 %v2055
  %3131 = vmatmul.mubr.f32.gmra.mrb[0].mxu0 %v2054
  %v3132 = vpop.f32.mrb[0].mxu0
  %v3133 = vadd.f32 0.0, %v3132
  %v3134 = vpop.f32.mrb[0].mxu0
  %3135 = vdwg.mxu0
  %3136 = vmatprep.subr.mxu0 0.0
  %3137 = vmatpush1.xpose.msra.mxu0 %v3061
  %3138 = vmatprep.subr.mxu0 0.0
  %3139 = vmatpush1.xpose.msra.mxu0 %v3064
  %3140 = vmatprep.subr.mxu0 0.0
  %3141 = vmatpush1.xpose.msra.mxu0 0.0
  %3142 = vmatprep.subr.mxu0 0.0
  %3143 = vmatpush1.xpose.msra.mxu0 0.0
  %3144 = vmatprep.subr.mxu0 0.0
  %3145 = vmatpush1.xpose.msra.mxu0 0.0
  %3146 = vmatprep.subr.mxu0 0.0
  %3147 = vmatpush1.xpose.msra.mxu0 0.0
  %3148 = vmatprep.subr.mxu0 0.0
  %3149 = vmatpush1.xpose.msra.mxu0 0.0
  %3150 = vmatprep.subr.mxu0 0.0
  %3151 = vmatpush1.xpose.msra.mxu0 0.0
  %3152 = vmatprep.subr.mxu0 0.0
  %3153 = vmatpush1.xpose.msra.mxu0 0.0
  %3154 = vmatprep.subr.mxu0 0.0
  %3155 = vmatpush1.xpose.msra.mxu0 0.0
  %3156 = vmatprep.subr.mxu0 0.0
  %3157 = vmatpush1.xpose.msra.mxu0 0.0
  %3158 = vmatprep.subr.mxu0 0.0
  %3159 = vmatpush1.xpose.msra.mxu0 0.0
  %3160 = vmatprep.subr.mxu0 0.0
  %3161 = vmatpush1.xpose.msra.mxu0 0.0
  %3162 = vmatprep.subr.mxu0 0.0
  %3163 = vmatpush1.xpose.msra.mxu0 0.0
  %3164 = vmatprep.subr.mxu0 0.0
  %3165 = vmatpush1.xpose.msra.mxu0 0.0
  %3166 = vmatprep.subr.mxu0 0.0
  %3167 = vmatpush1.xpose.msra.mxu0 0.0
  %3168 = vmatprep.subr.mxu0 0.0
  %3169 = vmatpush1.xpose.msra.mxu0 0.0
  %3170 = vmatprep.subr.mxu0 0.0
  %3171 = vmatpush1.xpose.msra.mxu0 0.0
  %3172 = vmatprep.subr.mxu0 0.0
  %3173 = vmatpush1.xpose.msra.mxu0 0.0
  %3174 = vmatprep.subr.mxu0 0.0
  %3175 = vmatpush1.xpose.msra.mxu0 0.0
  %3176 = vmatprep.subr.mxu0 0.0
  %3177 = vmatpush1.xpose.msra.mxu0 0.0
  %3178 = vmatprep.subr.mxu0 0.0
  %3179 = vmatpush1.xpose.msra.mxu0 0.0
  %3180 = vmatprep.subr.mxu0 0.0
  %3181 = vmatpush1.xpose.msra.mxu0 0.0
  %3182 = vmatprep.subr.mxu0 0.0
  %3183 = vmatpush1.xpose.msra.mxu0 0.0
  %3184 = vmatprep.subr.mxu0 0.0
  %3185 = vmatpush1.xpose.msra.mxu0 0.0
  %3186 = vmatprep.subr.mxu0 0.0
  %3187 = vmatpush1.xpose.msra.mxu0 0.0
  %3188 = vmatprep.subr.mxu0 0.0
  %3189 = vmatpush1.xpose.msra.mxu0 0.0
  %3190 = vmatprep.subr.mxu0 0.0
  %3191 = vmatpush1.xpose.msra.mxu0 0.0
  %3192 = vmatprep.subr.mxu0 0.0
  %3193 = vmatpush1.xpose.msra.mxu0 0.0
  %3194 = vmatprep.subr.mxu0 0.0
  %3195 = vmatpush1.xpose.msra.mxu0 0.0
  %3196 = vmatprep.subr.mxu0 0.0
  %3197 = vmatpush1.xpose.msra.mxu0 0.0
  %3198 = vmatprep.subr.mxu0 0.0
  %3199 = vmatpush1.xpose.msra.mxu0 0.0
  %3200 = vmatprep.mubr.f32.mxu0 0.0
  %3201 = vmatmul.mubr.f32.gmra.mrb[0].mxu0 %v3058
  %v3202 = vpop.f32.mrb[0].mxu0
  %v3203 = vadd.f32 %v3133, %v3202
  %v3204 = vpop.f32.mrb[0].mxu0
  %3205 = vdwg.mxu0
  %v3207 = vsel %vm2162, %v2059, 0
  %v3210 = vsel %vm2162, %v2122, 0
  %v3213 = vsel %vm2162, %v2125, 0
  %3215 = vmatprep.subr.mxu0 %v2121
  %3216 = vmatpush1.xpose.msra.mxu0 %v2120
  %3217 = vmatprep.subr.mxu0 %v2124
  %3218 = vmatpush1.xpose.msra.mxu0 %v2123
  %3219 = vmatprep.subr.mxu0 0.0
  %3220 = vmatpush1.xpose.msra.mxu0 0.0
  %3221 = vmatprep.subr.mxu0 0.0
  %3222 = vmatpush1.xpose.msra.mxu0 0.0
  %3223 = vmatprep.subr.mxu0 0.0
  %3224 = vmatpush1.xpose.msra.mxu0 0.0
  %3225 = vmatprep.subr.mxu0 0.0
  %3226 = vmatpush1.xpose.msra.mxu0 0.0
  %3227 = vmatprep.subr.mxu0 0.0
  %3228 = vmatpush1.xpose.msra.mxu0 0.0
  %3229 = vmatprep.subr.mxu0 0.0
  %3230 = vmatpush1.xpose.msra.mxu0 0.0
  %3231 = vmatprep.subr.mxu0 0.0
  %3232 = vmatpush1.xpose.msra.mxu0 0.0
  %3233 = vmatprep.subr.mxu0 0.0
  %3234 = vmatpush1.xpose.msra.mxu0 0.0
  %3235 = vmatprep.subr.mxu0 0.0
  %3236 = vmatpush1.xpose.msra.mxu0 0.0
  %3237 = vmatprep.subr.mxu0 0.0
  %3238 = vmatpush1.xpose.msra.mxu0 0.0
  %3239 = vmatprep.subr.mxu0 0.0
  %3240 = vmatpush1.xpose.msra.mxu0 0.0
  %3241 = vmatprep.subr.mxu0 0.0
  %3242 = vmatpush1.xpose.msra.mxu0 0.0
  %3243 = vmatprep.subr.mxu0 0.0
  %3244 = vmatpush1.xpose.msra.mxu0 0.0
  %3245 = vmatprep.subr.mxu0 0.0
  %3246 = vmatpush1.xpose.msra.mxu0 0.0
  %3247 = vmatprep.subr.mxu0 0.0
  %3248 = vmatpush1.xpose.msra.mxu0 0.0
  %3249 = vmatprep.subr.mxu0 0.0
  %3250 = vmatpush1.xpose.msra.mxu0 0.0
  %3251 = vmatprep.subr.mxu0 0.0
  %3252 = vmatpush1.xpose.msra.mxu0 0.0
  %3253 = vmatprep.subr.mxu0 0.0
  %3254 = vmatpush1.xpose.msra.mxu0 0.0
  %3255 = vmatprep.subr.mxu0 0.0
  %3256 = vmatpush1.xpose.msra.mxu0 0.0
  %3257 = vmatprep.subr.mxu0 0.0
  %3258 = vmatpush1.xpose.msra.mxu0 0.0
  %3259 = vmatprep.subr.mxu0 0.0
  %3260 = vmatpush1.xpose.msra.mxu0 0.0
  %3261 = vmatprep.subr.mxu0 0.0
  %3262 = vmatpush1.xpose.msra.mxu0 0.0
  %3263 = vmatprep.subr.mxu0 0.0
  %3264 = vmatpush1.xpose.msra.mxu0 0.0
  %3265 = vmatprep.subr.mxu0 0.0
  %3266 = vmatpush1.xpose.msra.mxu0 0.0
  %3267 = vmatprep.subr.mxu0 0.0
  %3268 = vmatpush1.xpose.msra.mxu0 0.0
  %3269 = vmatprep.subr.mxu0 0.0
  %3270 = vmatpush1.xpose.msra.mxu0 0.0
  %3271 = vmatprep.subr.mxu0 0.0
  %3272 = vmatpush1.xpose.msra.mxu0 0.0
  %3273 = vmatprep.subr.mxu0 0.0
  %3274 = vmatpush1.xpose.msra.mxu0 0.0
  %3275 = vmatprep.subr.mxu0 0.0
  %3276 = vmatpush1.xpose.msra.mxu0 0.0
  %3277 = vmatprep.subr.mxu0 0.0
  %3278 = vmatpush1.xpose.msra.mxu0 0.0
  %3279 = vmatprep.mubr.f32.mxu0 %v2058
  %3280 = vmatmul.mubr.f32.gmra.mrb[0].mxu0 %v2057
  %v3281 = vpop.f32.mrb[0].mxu0
  %v3282 = vadd.f32 0.0, %v3281
  %v3283 = vpop.f32.mrb[0].mxu0
  %3284 = vdwg.mxu0
  %3285 = vmatprep.subr.mxu0 0.0
  %3286 = vmatpush1.xpose.msra.mxu0 %v3210
  %3287 = vmatprep.subr.mxu0 0.0
  %3288 = vmatpush1.xpose.msra.mxu0 %v3213
  %3289 = vmatprep.subr.mxu0 0.0
  %3290 = vmatpush1.xpose.msra.mxu0 0.0
  %3291 = vmatprep.subr.mxu0 0.0
  %3292 = vmatpush1.xpose.msra.mxu0 0.0
  %3293 = vmatprep.subr.mxu0 0.0
  %3294 = vmatpush1.xpose.msra.mxu0 0.0
  %3295 = vmatprep.subr.mxu0 0.0
  %3296 = vmatpush1.xpose.msra.mxu0 0.0
  %3297 = vmatprep.subr.mxu0 0.0
  %3298 = vmatpush1.xpose.msra.mxu0 0.0
  %3299 = vmatprep.subr.mxu0 0.0
  %3300 = vmatpush1.xpose.msra.mxu0 0.0
  %3301 = vmatprep.subr.mxu0 0.0
  %3302 = vmatpush1.xpose.msra.mxu0 0.0
  %3303 = vmatprep.subr.mxu0 0.0
  %3304 = vmatpush1.xpose.msra.mxu0 0.0
  %3305 = vmatprep.subr.mxu0 0.0
  %3306 = vmatpush1.xpose.msra.mxu0 0.0
  %3307 = vmatprep.subr.mxu0 0.0
  %3308 = vmatpush1.xpose.msra.mxu0 0.0
  %3309 = vmatprep.subr.mxu0 0.0
  %3310 = vmatpush1.xpose.msra.mxu0 0.0
  %3311 = vmatprep.subr.mxu0 0.0
  %3312 = vmatpush1.xpose.msra.mxu0 0.0
  %3313 = vmatprep.subr.mxu0 0.0
  %3314 = vmatpush1.xpose.msra.mxu0 0.0
  %3315 = vmatprep.subr.mxu0 0.0
  %3316 = vmatpush1.xpose.msra.mxu0 0.0
  %3317 = vmatprep.subr.mxu0 0.0
  %3318 = vmatpush1.xpose.msra.mxu0 0.0
  %3319 = vmatprep.subr.mxu0 0.0
  %3320 = vmatpush1.xpose.msra.mxu0 0.0
  %3321 = vmatprep.subr.mxu0 0.0
  %3322 = vmatpush1.xpose.msra.mxu0 0.0
  %3323 = vmatprep.subr.mxu0 0.0
  %3324 = vmatpush1.xpose.msra.mxu0 0.0
  %3325 = vmatprep.subr.mxu0 0.0
  %3326 = vmatpush1.xpose.msra.mxu0 0.0
  %3327 = vmatprep.subr.mxu0 0.0
  %3328 = vmatpush1.xpose.msra.mxu0 0.0
  %3329 = vmatprep.subr.mxu0 0.0
  %3330 = vmatpush1.xpose.msra.mxu0 0.0
  %3331 = vmatprep.subr.mxu0 0.0
  %3332 = vmatpush1.xpose.msra.mxu0 0.0
  %3333 = vmatprep.subr.mxu0 0.0
  %3334 = vmatpush1.xpose.msra.mxu0 0.0
  %3335 = vmatprep.subr.mxu0 0.0
  %3336 = vmatpush1.xpose.msra.mxu0 0.0
  %3337 = vmatprep.subr.mxu0 0.0
  %3338 = vmatpush1.xpose.msra.mxu0 0.0
  %3339 = vmatprep.subr.mxu0 0.0
  %3340 = vmatpush1.xpose.msra.mxu0 0.0
  %3341 = vmatprep.subr.mxu0 0.0
  %3342 = vmatpush1.xpose.msra.mxu0 0.0
  %3343 = vmatprep.subr.mxu0 0.0
  %3344 = vmatpush1.xpose.msra.mxu0 0.0
  %3345 = vmatprep.subr.mxu0 0.0
  %3346 = vmatpush1.xpose.msra.mxu0 0.0
  %3347 = vmatprep.subr.mxu0 0.0
  %3348 = vmatpush1.xpose.msra.mxu0 0.0
  %3349 = vmatprep.mubr.f32.mxu0 0.0
  %3350 = vmatmul.mubr.f32.gmra.mrb[0].mxu0 %v3207
  %v3351 = vpop.f32.mrb[0].mxu0
  %v3352 = vadd.f32 %v3282, %v3351
  %v3353 = vpop.f32.mrb[0].mxu0
  %3354 = vdwg.mxu0
  %v3356 = vsel %vm2162, %v2062, 0
  %v3359 = vsel %vm2162, %v2128, 0
  %v3362 = vsel %vm2162, %v2131, 0
  %3364 = vmatprep.subr.mxu0 %v2127
  %3365 = vmatpush1.xpose.msra.mxu0 %v2126
  %3366 = vmatprep.subr.mxu0 %v2130
  %3367 = vmatpush1.xpose.msra.mxu0 %v2129
  %3368 = vmatprep.subr.mxu0 0.0
  %3369 = vmatpush1.xpose.msra.mxu0 0.0
  %3370 = vmatprep.subr.mxu0 0.0
  %3371 = vmatpush1.xpose.msra.mxu0 0.0
  %3372 = vmatprep.subr.mxu0 0.0
  %3373 = vmatpush1.xpose.msra.mxu0 0.0
  %3374 = vmatprep.subr.mxu0 0.0
  %3375 = vmatpush1.xpose.msra.mxu0 0.0
  %3376 = vmatprep.subr.mxu0 0.0
  %3377 = vmatpush1.xpose.msra.mxu0 0.0
  %3378 = vmatprep.subr.mxu0 0.0
  %3379 = vmatpush1.xpose.msra.mxu0 0.0
  %3380 = vmatprep.subr.mxu0 0.0
  %3381 = vmatpush1.xpose.msra.mxu0 0.0
  %3382 = vmatprep.subr.mxu0 0.0
  %3383 = vmatpush1.xpose.msra.mxu0 0.0
  %3384 = vmatprep.subr.mxu0 0.0
  %3385 = vmatpush1.xpose.msra.mxu0 0.0
  %3386 = vmatprep.subr.mxu0 0.0
  %3387 = vmatpush1.xpose.msra.mxu0 0.0
  %3388 = vmatprep.subr.mxu0 0.0
  %3389 = vmatpush1.xpose.msra.mxu0 0.0
  %3390 = vmatprep.subr.mxu0 0.0
  %3391 = vmatpush1.xpose.msra.mxu0 0.0
  %3392 = vmatprep.subr.mxu0 0.0
  %3393 = vmatpush1.xpose.msra.mxu0 0.0
  %3394 = vmatprep.subr.mxu0 0.0
  %3395 = vmatpush1.xpose.msra.mxu0 0.0
  %3396 = vmatprep.subr.mxu0 0.0
  %3397 = vmatpush1.xpose.msra.mxu0 0.0
  %3398 = vmatprep.subr.mxu0 0.0
  %3399 = vmatpush1.xpose.msra.mxu0 0.0
  %3400 = vmatprep.subr.mxu0 0.0
  %3401 = vmatpush1.xpose.msra.mxu0 0.0
  %3402 = vmatprep.subr.mxu0 0.0
  %3403 = vmatpush1.xpose.msra.mxu0 0.0
  %3404 = vmatprep.subr.mxu0 0.0
  %3405 = vmatpush1.xpose.msra.mxu0 0.0
  %3406 = vmatprep.subr.mxu0 0.0
  %3407 = vmatpush1.xpose.msra.mxu0 0.0
  %3408 = vmatprep.subr.mxu0 0.0
  %3409 = vmatpush1.xpose.msra.mxu0 0.0
  %3410 = vmatprep.subr.mxu0 0.0
  %3411 = vmatpush1.xpose.msra.mxu0 0.0
  %3412 = vmatprep.subr.mxu0 0.0
  %3413 = vmatpush1.xpose.msra.mxu0 0.0
  %3414 = vmatprep.subr.mxu0 0.0
  %3415 = vmatpush1.xpose.msra.mxu0 0.0
  %3416 = vmatprep.subr.mxu0 0.0
  %3417 = vmatpush1.xpose.msra.mxu0 0.0
  %3418 = vmatprep.subr.mxu0 0.0
  %3419 = vmatpush1.xpose.msra.mxu0 0.0
  %3420 = vmatprep.subr.mxu0 0.0
  %3421 = vmatpush1.xpose.msra.mxu0 0.0
  %3422 = vmatprep.subr.mxu0 0.0
  %3423 = vmatpush1.xpose.msra.mxu0 0.0
  %3424 = vmatprep.subr.mxu0 0.0
  %3425 = vmatpush1.xpose.msra.mxu0 0.0
  %3426 = vmatprep.subr.mxu0 0.0
  %3427 = vmatpush1.xpose.msra.mxu0 0.0
  %3428 = vmatprep.mubr.f32.mxu0 %v2061
  %3429 = vmatmul.mubr.f32.gmra.mrb[0].mxu0 %v2060
  %v3430 = vpop.f32.mrb[0].mxu0
  %v3431 = vadd.f32 0.0, %v3430
  %v3432 = vpop.f32.mrb[0].mxu0
  %3433 = vdwg.mxu0
  %3434 = vmatprep.subr.mxu0 0.0
  %3435 = vmatpush1.xpose.msra.mxu0 %v3359
  %3436 = vmatprep.subr.mxu0 0.0
  %3437 = vmatpush1.xpose.msra.mxu0 %v3362
  %3438 = vmatprep.subr.mxu0 0.0
  %3439 = vmatpush1.xpose.msra.mxu0 0.0
  %3440 = vmatprep.subr.mxu0 0.0
  %3441 = vmatpush1.xpose.msra.mxu0 0.0
  %3442 = vmatprep.subr.mxu0 0.0
  %3443 = vmatpush1.xpose.msra.mxu0 0.0
  %3444 = vmatprep.subr.mxu0 0.0
  %3445 = vmatpush1.xpose.msra.mxu0 0.0
  %3446 = vmatprep.subr.mxu0 0.0
  %3447 = vmatpush1.xpose.msra.mxu0 0.0
  %3448 = vmatprep.subr.mxu0 0.0
  %3449 = vmatpush1.xpose.msra.mxu0 0.0
  %3450 = vmatprep.subr.mxu0 0.0
  %3451 = vmatpush1.xpose.msra.mxu0 0.0
  %3452 = vmatprep.subr.mxu0 0.0
  %3453 = vmatpush1.xpose.msra.mxu0 0.0
  %3454 = vmatprep.subr.mxu0 0.0
  %3455 = vmatpush1.xpose.msra.mxu0 0.0
  %3456 = vmatprep.subr.mxu0 0.0
  %3457 = vmatpush1.xpose.msra.mxu0 0.0
  %3458 = vmatprep.subr.mxu0 0.0
  %3459 = vmatpush1.xpose.msra.mxu0 0.0
  %3460 = vmatprep.subr.mxu0 0.0
  %3461 = vmatpush1.xpose.msra.mxu0 0.0
  %3462 = vmatprep.subr.mxu0 0.0
  %3463 = vmatpush1.xpose.msra.mxu0 0.0
  %3464 = vmatprep.subr.mxu0 0.0
  %3465 = vmatpush1.xpose.msra.mxu0 0.0
  %3466 = vmatprep.subr.mxu0 0.0
  %3467 = vmatpush1.xpose.msra.mxu0 0.0
  %3468 = vmatprep.subr.mxu0 0.0
  %3469 = vmatpush1.xpose.msra.mxu0 0.0
  %3470 = vmatprep.subr.mxu0 0.0
  %3471 = vmatpush1.xpose.msra.mxu0 0.0
  %3472 = vmatprep.subr.mxu0 0.0
  %3473 = vmatpush1.xpose.msra.mxu0 0.0
  %3474 = vmatprep.subr.mxu0 0.0
  %3475 = vmatpush1.xpose.msra.mxu0 0.0
  %3476 = vmatprep.subr.mxu0 0.0
  %3477 = vmatpush1.xpose.msra.mxu0 0.0
  %3478 = vmatprep.subr.mxu0 0.0
  %3479 = vmatpush1.xpose.msra.mxu0 0.0
  %3480 = vmatprep.subr.mxu0 0.0
  %3481 = vmatpush1.xpose.msra.mxu0 0.0
  %3482 = vmatprep.subr.mxu0 0.0
  %3483 = vmatpush1.xpose.msra.mxu0 0.0
  %3484 = vmatprep.subr.mxu0 0.0
  %3485 = vmatpush1.xpose.msra.mxu0 0.0
  %3486 = vmatprep.subr.mxu0 0.0
  %3487 = vmatpush1.xpose.msra.mxu0 0.0
  %3488 = vmatprep.subr.mxu0 0.0
  %3489 = vmatpush1.xpose.msra.mxu0 0.0
  %3490 = vmatprep.subr.mxu0 0.0
  %3491 = vmatpush1.xpose.msra.mxu0 0.0
  %3492 = vmatprep.subr.mxu0 0.0
  %3493 = vmatpush1.xpose.msra.mxu0 0.0
  %3494 = vmatprep.subr.mxu0 0.0
  %3495 = vmatpush1.xpose.msra.mxu0 0.0
  %3496 = vmatprep.subr.mxu0 0.0
  %3497 = vmatpush1.xpose.msra.mxu0 0.0
  %3498 = vmatprep.mubr.f32.mxu0 0.0
  %3499 = vmatmul.mubr.f32.gmra.mrb[0].mxu0 %v3356
  %v3500 = vpop.f32.mrb[0].mxu0
  %v3501 = vadd.f32 %v3431, %v3500
  %v3502 = vpop.f32.mrb[0].mxu0
  %3503 = vdwg.mxu0
  %v3505 = vsel %vm2162, %v2065, 0
  %v3508 = vsel %vm2162, %v2134, 0
  %v3511 = vsel %vm2162, %v2137, 0
  %3513 = vmatprep.subr.mxu0 %v2133
  %3514 = vmatpush1.xpose.msra.mxu0 %v2132
  %3515 = vmatprep.subr.mxu0 %v2136
  %3516 = vmatpush1.xpose.msra.mxu0 %v2135
  %3517 = vmatprep.subr.mxu0 0.0
  %3518 = vmatpush1.xpose.msra.mxu0 0.0
  %3519 = vmatprep.subr.mxu0 0.0
  %3520 = vmatpush1.xpose.msra.mxu0 0.0
  %3521 = vmatprep.subr.mxu0 0.0
  %3522 = vmatpush1.xpose.msra.mxu0 0.0
  %3523 = vmatprep.subr.mxu0 0.0
  %3524 = vmatpush1.xpose.msra.mxu0 0.0
  %3525 = vmatprep.subr.mxu0 0.0
  %3526 = vmatpush1.xpose.msra.mxu0 0.0
  %3527 = vmatprep.subr.mxu0 0.0
  %3528 = vmatpush1.xpose.msra.mxu0 0.0
  %3529 = vmatprep.subr.mxu0 0.0
  %3530 = vmatpush1.xpose.msra.mxu0 0.0
  %3531 = vmatprep.subr.mxu0 0.0
  %3532 = vmatpush1.xpose.msra.mxu0 0.0
  %3533 = vmatprep.subr.mxu0 0.0
  %3534 = vmatpush1.xpose.msra.mxu0 0.0
  %3535 = vmatprep.subr.mxu0 0.0
  %3536 = vmatpush1.xpose.msra.mxu0 0.0
  %3537 = vmatprep.subr.mxu0 0.0
  %3538 = vmatpush1.xpose.msra.mxu0 0.0
  %3539 = vmatprep.subr.mxu0 0.0
  %3540 = vmatpush1.xpose.msra.mxu0 0.0
  %3541 = vmatprep.subr.mxu0 0.0
  %3542 = vmatpush1.xpose.msra.mxu0 0.0
  %3543 = vmatprep.subr.mxu0 0.0
  %3544 = vmatpush1.xpose.msra.mxu0 0.0
  %3545 = vmatprep.subr.mxu0 0.0
  %3546 = vmatpush1.xpose.msra.mxu0 0.0
  %3547 = vmatprep.subr.mxu0 0.0
  %3548 = vmatpush1.xpose.msra.mxu0 0.0
  %3549 = vmatprep.subr.mxu0 0.0
  %3550 = vmatpush1.xpose.msra.mxu0 0.0
  %3551 = vmatprep.subr.mxu0 0.0
  %3552 = vmatpush1.xpose.msra.mxu0 0.0
  %3553 = vmatprep.subr.mxu0 0.0
  %3554 = vmatpush1.xpose.msra.mxu0 0.0
  %3555 = vmatprep.subr.mxu0 0.0
  %3556 = vmatpush1.xpose.msra.mxu0 0.0
  %3557 = vmatprep.subr.mxu0 0.0
  %3558 = vmatpush1.xpose.msra.mxu0 0.0
  %3559 = vmatprep.subr.mxu0 0.0
  %3560 = vmatpush1.xpose.msra.mxu0 0.0
  %3561 = vmatprep.subr.mxu0 0.0
  %3562 = vmatpush1.xpose.msra.mxu0 0.0
  %3563 = vmatprep.subr.mxu0 0.0
  %3564 = vmatpush1.xpose.msra.mxu0 0.0
  %3565 = vmatprep.subr.mxu0 0.0
  %3566 = vmatpush1.xpose.msra.mxu0 0.0
  %3567 = vmatprep.subr.mxu0 0.0
  %3568 = vmatpush1.xpose.msra.mxu0 0.0
  %3569 = vmatprep.subr.mxu0 0.0
  %3570 = vmatpush1.xpose.msra.mxu0 0.0
  %3571 = vmatprep.subr.mxu0 0.0
  %3572 = vmatpush1.xpose.msra.mxu0 0.0
  %3573 = vmatprep.subr.mxu0 0.0
  %3574 = vmatpush1.xpose.msra.mxu0 0.0
  %3575 = vmatprep.subr.mxu0 0.0
  %3576 = vmatpush1.xpose.msra.mxu0 0.0
  %3577 = vmatprep.mubr.f32.mxu0 %v2064
  %3578 = vmatmul.mubr.f32.gmra.mrb[0].mxu0 %v2063
  %v3579 = vpop.f32.mrb[0].mxu0
  %v3580 = vadd.f32 0.0, %v3579
  %v3581 = vpop.f32.mrb[0].mxu0
  %3582 = vdwg.mxu0
  %3583 = vmatprep.subr.mxu0 0.0
  %3584 = vmatpush1.xpose.msra.mxu0 %v3508
  %3585 = vmatprep.subr.mxu0 0.0
  %3586 = vmatpush1.xpose.msra.mxu0 %v3511
  %3587 = vmatprep.subr.mxu0 0.0
  %3588 = vmatpush1.xpose.msra.mxu0 0.0
  %3589 = vmatprep.subr.mxu0 0.0
  %3590 = vmatpush1.xpose.msra.mxu0 0.0
  %3591 = vmatprep.subr.mxu0 0.0
  %3592 = vmatpush1.xpose.msra.mxu0 0.0
  %3593 = vmatprep.subr.mxu0 0.0
  %3594 = vmatpush1.xpose.msra.mxu0 0.0
  %3595 = vmatprep.subr.mxu0 0.0
  %3596 = vmatpush1.xpose.msra.mxu0 0.0
  %3597 = vmatprep.subr.mxu0 0.0
  %3598 = vmatpush1.xpose.msra.mxu0 0.0
  %3599 = vmatprep.subr.mxu0 0.0
  %3600 = vmatpush1.xpose.msra.mxu0 0.0
  %3601 = vmatprep.subr.mxu0 0.0
  %3602 = vmatpush1.xpose.msra.mxu0 0.0
  %3603 = vmatprep.subr.mxu0 0.0
  %3604 = vmatpush1.xpose.msra.mxu0 0.0
  %3605 = vmatprep.subr.mxu0 0.0
  %3606 = vmatpush1.xpose.msra.mxu0 0.0
  %3607 = vmatprep.subr.mxu0 0.0
  %3608 = vmatpush1.xpose.msra.mxu0 0.0
  %3609 = vmatprep.subr.mxu0 0.0
  %3610 = vmatpush1.xpose.msra.mxu0 0.0
  %3611 = vmatprep.subr.mxu0 0.0
  %3612 = vmatpush1.xpose.msra.mxu0 0.0
  %3613 = vmatprep.subr.mxu0 0.0
  %3614 = vmatpush1.xpose.msra.mxu0 0.0
  %3615 = vmatprep.subr.mxu0 0.0
  %3616 = vmatpush1.xpose.msra.mxu0 0.0
  %3617 = vmatprep.subr.mxu0 0.0
  %3618 = vmatpush1.xpose.msra.mxu0 0.0
  %3619 = vmatprep.subr.mxu0 0.0
  %3620 = vmatpush1.xpose.msra.mxu0 0.0
  %3621 = vmatprep.subr.mxu0 0.0
  %3622 = vmatpush1.xpose.msra.mxu0 0.0
  %3623 = vmatprep.subr.mxu0 0.0
  %3624 = vmatpush1.xpose.msra.mxu0 0.0
  %3625 = vmatprep.subr.mxu0 0.0
  %3626 = vmatpush1.xpose.msra.mxu0 0.0
  %3627 = vmatprep.subr.mxu0 0.0
  %3628 = vmatpush1.xpose.msra.mxu0 0.0
  %3629 = vmatprep.subr.mxu0 0.0
  %3630 = vmatpush1.xpose.msra.mxu0 0.0
  %3631 = vmatprep.subr.mxu0 0.0
  %3632 = vmatpush1.xpose.msra.mxu0 0.0
  %3633 = vmatprep.subr.mxu0 0.0
  %3634 = vmatpush1.xpose.msra.mxu0 0.0
  %3635 = vmatprep.subr.mxu0 0.0
  %3636 = vmatpush1.xpose.msra.mxu0 0.0
  %3637 = vmatprep.subr.mxu0 0.0
  %3638 = vmatpush1.xpose.msra.mxu0 0.0
  %3639 = vmatprep.subr.mxu0 0.0
  %3640 = vmatpush1.xpose.msra.mxu0 0.0
  %3641 = vmatprep.subr.mxu0 0.0
  %3642 = vmatpush1.xpose.msra.mxu0 0.0
  %3643 = vmatprep.subr.mxu0 0.0
  %3644 = vmatpush1.xpose.msra.mxu0 0.0
  %3645 = vmatprep.subr.mxu0 0.0
  %3646 = vmatpush1.xpose.msra.mxu0 0.0
  %3647 = vmatprep.mubr.f32.mxu0 0.0
  %3648 = vmatmul.mubr.f32.gmra.mrb[0].mxu0 %v3505
  %v3649 = vpop.f32.mrb[0].mxu0
  %v3650 = vadd.f32 %v3580, %v3649
  %v3651 = vpop.f32.mrb[0].mxu0
  %3652 = vdwg.mxu0
  %v3654 = vsel %vm2162, %v2068, 0
  %v3657 = vsel %vm2162, %v2140, 0
  %v3660 = vsel %vm2162, %v2143, 0
  %3662 = vmatprep.subr.mxu0 %v2139
  %3663 = vmatpush1.xpose.msra.mxu0 %v2138
  %3664 = vmatprep.subr.mxu0 %v2142
  %3665 = vmatpush1.xpose.msra.mxu0 %v2141
  %3666 = vmatprep.subr.mxu0 0.0
  %3667 = vmatpush1.xpose.msra.mxu0 0.0
  %3668 = vmatprep.subr.mxu0 0.0
  %3669 = vmatpush1.xpose.msra.mxu0 0.0
  %3670 = vmatprep.subr.mxu0 0.0
  %3671 = vmatpush1.xpose.msra.mxu0 0.0
  %3672 = vmatprep.subr.mxu0 0.0
  %3673 = vmatpush1.xpose.msra.mxu0 0.0
  %3674 = vmatprep.subr.mxu0 0.0
  %3675 = vmatpush1.xpose.msra.mxu0 0.0
  %3676 = vmatprep.subr.mxu0 0.0
  %3677 = vmatpush1.xpose.msra.mxu0 0.0
  %3678 = vmatprep.subr.mxu0 0.0
  %3679 = vmatpush1.xpose.msra.mxu0 0.0
  %3680 = vmatprep.subr.mxu0 0.0
  %3681 = vmatpush1.xpose.msra.mxu0 0.0
  %3682 = vmatprep.subr.mxu0 0.0
  %3683 = vmatpush1.xpose.msra.mxu0 0.0
  %3684 = vmatprep.subr.mxu0 0.0
  %3685 = vmatpush1.xpose.msra.mxu0 0.0
  %3686 = vmatprep.subr.mxu0 0.0
  %3687 = vmatpush1.xpose.msra.mxu0 0.0
  %3688 = vmatprep.subr.mxu0 0.0
  %3689 = vmatpush1.xpose.msra.mxu0 0.0
  %3690 = vmatprep.subr.mxu0 0.0
  %3691 = vmatpush1.xpose.msra.mxu0 0.0
  %3692 = vmatprep.subr.mxu0 0.0
  %3693 = vmatpush1.xpose.msra.mxu0 0.0
  %3694 = vmatprep.subr.mxu0 0.0
  %3695 = vmatpush1.xpose.msra.mxu0 0.0
  %3696 = vmatprep.subr.mxu0 0.0
  %3697 = vmatpush1.xpose.msra.mxu0 0.0
  %3698 = vmatprep.subr.mxu0 0.0
  %3699 = vmatpush1.xpose.msra.mxu0 0.0
  %3700 = vmatprep.subr.mxu0 0.0
  %3701 = vmatpush1.xpose.msra.mxu0 0.0
  %3702 = vmatprep.subr.mxu0 0.0
  %3703 = vmatpush1.xpose.msra.mxu0 0.0
  %3704 = vmatprep.subr.mxu0 0.0
  %3705 = vmatpush1.xpose.msra.mxu0 0.0
  %3706 = vmatprep.subr.mxu0 0.0
  %3707 = vmatpush1.xpose.msra.mxu0 0.0
  %3708 = vmatprep.subr.mxu0 0.0
  %3709 = vmatpush1.xpose.msra.mxu0 0.0
  %3710 = vmatprep.subr.mxu0 0.0
  %3711 = vmatpush1.xpose.msra.mxu0 0.0
  %3712 = vmatprep.subr.mxu0 0.0
  %3713 = vmatpush1.xpose.msra.mxu0 0.0
  %3714 = vmatprep.subr.mxu0 0.0
  %3715 = vmatpush1.xpose.msra.mxu0 0.0
  %3716 = vmatprep.subr.mxu0 0.0
  %3717 = vmatpush1.xpose.msra.mxu0 0.0
  %3718 = vmatprep.subr.mxu0 0.0
  %3719 = vmatpush1.xpose.msra.mxu0 0.0
  %3720 = vmatprep.subr.mxu0 0.0
  %3721 = vmatpush1.xpose.msra.mxu0 0.0
  %3722 = vmatprep.subr.mxu0 0.0
  %3723 = vmatpush1.xpose.msra.mxu0 0.0
  %3724 = vmatprep.subr.mxu0 0.0
  %3725 = vmatpush1.xpose.msra.mxu0 0.0
  %3726 = vmatprep.mubr.f32.mxu0 %v2067
  %3727 = vmatmul.mubr.f32.gmra.mrb[0].mxu0 %v2066
  %v3728 = vpop.f32.mrb[0].mxu0
  %v3729 = vadd.f32 0.0, %v3728
  %v3730 = vpop.f32.mrb[0].mxu0
  %3731 = vdwg.mxu0
  %3732 = vmatprep.subr.mxu0 0.0
  %3733 = vmatpush1.xpose.msra.mxu0 %v3657
  %3734 = vmatprep.subr.mxu0 0.0
  %3735 = vmatpush1.xpose.msra.mxu0 %v3660
  %3736 = vmatprep.subr.mxu0 0.0
  %3737 = vmatpush1.xpose.msra.mxu0 0.0
  %3738 = vmatprep.subr.mxu0 0.0
  %3739 = vmatpush1.xpose.msra.mxu0 0.0
  %3740 = vmatprep.subr.mxu0 0.0
  %3741 = vmatpush1.xpose.msra.mxu0 0.0
  %3742 = vmatprep.subr.mxu0 0.0
  %3743 = vmatpush1.xpose.msra.mxu0 0.0
  %3744 = vmatprep.subr.mxu0 0.0
  %3745 = vmatpush1.xpose.msra.mxu0 0.0
  %3746 = vmatprep.subr.mxu0 0.0
  %3747 = vmatpush1.xpose.msra.mxu0 0.0
  %3748 = vmatprep.subr.mxu0 0.0
  %3749 = vmatpush1.xpose.msra.mxu0 0.0
  %3750 = vmatprep.subr.mxu0 0.0
  %3751 = vmatpush1.xpose.msra.mxu0 0.0
  %3752 = vmatprep.subr.mxu0 0.0
  %3753 = vmatpush1.xpose.msra.mxu0 0.0
  %3754 = vmatprep.subr.mxu0 0.0
  %3755 = vmatpush1.xpose.msra.mxu0 0.0
  %3756 = vmatprep.subr.mxu0 0.0
  %3757 = vmatpush1.xpose.msra.mxu0 0.0
  %3758 = vmatprep.subr.mxu0 0.0
  %3759 = vmatpush1.xpose.msra.mxu0 0.0
  %3760 = vmatprep.subr.mxu0 0.0
  %3761 = vmatpush1.xpose.msra.mxu0 0.0
  %3762 = vmatprep.subr.mxu0 0.0
  %3763 = vmatpush1.xpose.msra.mxu0 0.0
  %3764 = vmatprep.subr.mxu0 0.0
  %3765 = vmatpush1.xpose.msra.mxu0 0.0
  %3766 = vmatprep.subr.mxu0 0.0
  %3767 = vmatpush1.xpose.msra.mxu0 0.0
  %3768 = vmatprep.subr.mxu0 0.0
  %3769 = vmatpush1.xpose.msra.mxu0 0.0
  %3770 = vmatprep.subr.mxu0 0.0
  %3771 = vmatpush1.xpose.msra.mxu0 0.0
  %3772 = vmatprep.subr.mxu0 0.0
  %3773 = vmatpush1.xpose.msra.mxu0 0.0
  %3774 = vmatprep.subr.mxu0 0.0
  %3775 = vmatpush1.xpose.msra.mxu0 0.0
  %3776 = vmatprep.subr.mxu0 0.0
  %3777 = vmatpush1.xpose.msra.mxu0 0.0
  %3778 = vmatprep.subr.mxu0 0.0
  %3779 = vmatpush1.xpose.msra.mxu0 0.0
  %3780 = vmatprep.subr.mxu0 0.0
  %3781 = vmatpush1.xpose.msra.mxu0 0.0
  %3782 = vmatprep.subr.mxu0 0.0
  %3783 = vmatpush1.xpose.msra.mxu0 0.0
  %3784 = vmatprep.subr.mxu0 0.0
  %3785 = vmatpush1.xpose.msra.mxu0 0.0
  %3786 = vmatprep.subr.mxu0 0.0
  %3787 = vmatpush1.xpose.msra.mxu0 0.0
  %3788 = vmatprep.subr.mxu0 0.0
  %3789 = vmatpush1.xpose.msra.mxu0 0.0
  %3790 = vmatprep.subr.mxu0 0.0
  %3791 = vmatpush1.xpose.msra.mxu0 0.0
  %3792 = vmatprep.subr.mxu0 0.0
  %3793 = vmatpush1.xpose.msra.mxu0 0.0
  %3794 = vmatprep.subr.mxu0 0.0
  %3795 = vmatpush1.xpose.msra.mxu0 0.0
  %3796 = vmatprep.mubr.f32.mxu0 0.0
  %3797 = vmatmul.mubr.f32.gmra.mrb[0].mxu0 %v3654
  %v3798 = vpop.f32.mrb[0].mxu0
  %v3799 = vadd.f32 %v3729, %v3798
  %v3800 = vpop.f32.mrb[0].mxu0
  %3801 = vdwg.mxu0
  %v3803 = vsel %vm2162, %v2071, 0
  %v3806 = vsel %vm2162, %v2146, 0
  %v3809 = vsel %vm2162, %v2149, 0
  %3811 = vmatprep.subr.mxu0 %v2145
  %3812 = vmatpush1.xpose.msra.mxu0 %v2144
  %3813 = vmatprep.subr.mxu0 %v2148
  %3814 = vmatpush1.xpose.msra.mxu0 %v2147
  %3815 = vmatprep.subr.mxu0 0.0
  %3816 = vmatpush1.xpose.msra.mxu0 0.0
  %3817 = vmatprep.subr.mxu0 0.0
  %3818 = vmatpush1.xpose.msra.mxu0 0.0
  %3819 = vmatprep.subr.mxu0 0.0
  %3820 = vmatpush1.xpose.msra.mxu0 0.0
  %3821 = vmatprep.subr.mxu0 0.0
  %3822 = vmatpush1.xpose.msra.mxu0 0.0
  %3823 = vmatprep.subr.mxu0 0.0
  %3824 = vmatpush1.xpose.msra.mxu0 0.0
  %3825 = vmatprep.subr.mxu0 0.0
  %3826 = vmatpush1.xpose.msra.mxu0 0.0
  %3827 = vmatprep.subr.mxu0 0.0
  %3828 = vmatpush1.xpose.msra.mxu0 0.0
  %3829 = vmatprep.subr.mxu0 0.0
  %3830 = vmatpush1.xpose.msra.mxu0 0.0
  %3831 = vmatprep.subr.mxu0 0.0
  %3832 = vmatpush1.xpose.msra.mxu0 0.0
  %3833 = vmatprep.subr.mxu0 0.0
  %3834 = vmatpush1.xpose.msra.mxu0 0.0
  %3835 = vmatprep.subr.mxu0 0.0
  %3836 = vmatpush1.xpose.msra.mxu0 0.0
  %3837 = vmatprep.subr.mxu0 0.0
  %3838 = vmatpush1.xpose.msra.mxu0 0.0
  %3839 = vmatprep.subr.mxu0 0.0
  %3840 = vmatpush1.xpose.msra.mxu0 0.0
  %3841 = vmatprep.subr.mxu0 0.0
  %3842 = vmatpush1.xpose.msra.mxu0 0.0
  %3843 = vmatprep.subr.mxu0 0.0
  %3844 = vmatpush1.xpose.msra.mxu0 0.0
  %3845 = vmatprep.subr.mxu0 0.0
  %3846 = vmatpush1.xpose.msra.mxu0 0.0
  %3847 = vmatprep.subr.mxu0 0.0
  %3848 = vmatpush1.xpose.msra.mxu0 0.0
  %3849 = vmatprep.subr.mxu0 0.0
  %3850 = vmatpush1.xpose.msra.mxu0 0.0
  %3851 = vmatprep.subr.mxu0 0.0
  %3852 = vmatpush1.xpose.msra.mxu0 0.0
  %3853 = vmatprep.subr.mxu0 0.0
  %3854 = vmatpush1.xpose.msra.mxu0 0.0
  %3855 = vmatprep.subr.mxu0 0.0
  %3856 = vmatpush1.xpose.msra.mxu0 0.0
  %3857 = vmatprep.subr.mxu0 0.0
  %3858 = vmatpush1.xpose.msra.mxu0 0.0
  %3859 = vmatprep.subr.mxu0 0.0
  %3860 = vmatpush1.xpose.msra.mxu0 0.0
  %3861 = vmatprep.subr.mxu0 0.0
  %3862 = vmatpush1.xpose.msra.mxu0 0.0
  %3863 = vmatprep.subr.mxu0 0.0
  %3864 = vmatpush1.xpose.msra.mxu0 0.0
  %3865 = vmatprep.subr.mxu0 0.0
  %3866 = vmatpush1.xpose.msra.mxu0 0.0
  %3867 = vmatprep.subr.mxu0 0.0
  %3868 = vmatpush1.xpose.msra.mxu0 0.0
  %3869 = vmatprep.subr.mxu0 0.0
  %3870 = vmatpush1.xpose.msra.mxu0 0.0
  %3871 = vmatprep.subr.mxu0 0.0
  %3872 = vmatpush1.xpose.msra.mxu0 0.0
  %3873 = vmatprep.subr.mxu0 0.0
  %3874 = vmatpush1.xpose.msra.mxu0 0.0
  %3875 = vmatprep.mubr.f32.mxu0 %v2070
  %3876 = vmatmul.mubr.f32.gmra.mrb[0].mxu0 %v2069
  %v3877 = vpop.f32.mrb[0].mxu0
  %v3878 = vadd.f32 0.0, %v3877
  %v3879 = vpop.f32.mrb[0].mxu0
  %3880 = vdwg.mxu0
  %3881 = vmatprep.subr.mxu0 0.0
  %3882 = vmatpush1.xpose.msra.mxu0 %v3806
  %3883 = vmatprep.subr.mxu0 0.0
  %3884 = vmatpush1.xpose.msra.mxu0 %v3809
  %3885 = vmatprep.subr.mxu0 0.0
  %3886 = vmatpush1.xpose.msra.mxu0 0.0
  %3887 = vmatprep.subr.mxu0 0.0
  %3888 = vmatpush1.xpose.msra.mxu0 0.0
  %3889 = vmatprep.subr.mxu0 0.0
  %3890 = vmatpush1.xpose.msra.mxu0 0.0
  %3891 = vmatprep.subr.mxu0 0.0
  %3892 = vmatpush1.xpose.msra.mxu0 0.0
  %3893 = vmatprep.subr.mxu0 0.0
  %3894 = vmatpush1.xpose.msra.mxu0 0.0
  %3895 = vmatprep.subr.mxu0 0.0
  %3896 = vmatpush1.xpose.msra.mxu0 0.0
  %3897 = vmatprep.subr.mxu0 0.0
  %3898 = vmatpush1.xpose.msra.mxu0 0.0
  %3899 = vmatprep.subr.mxu0 0.0
  %3900 = vmatpush1.xpose.msra.mxu0 0.0
  %3901 = vmatprep.subr.mxu0 0.0
  %3902 = vmatpush1.xpose.msra.mxu0 0.0
  %3903 = vmatprep.subr.mxu0 0.0
  %3904 = vmatpush1.xpose.msra.mxu0 0.0
  %3905 = vmatprep.subr.mxu0 0.0
  %3906 = vmatpush1.xpose.msra.mxu0 0.0
  %3907 = vmatprep.subr.mxu0 0.0
  %3908 = vmatpush1.xpose.msra.mxu0 0.0
  %3909 = vmatprep.subr.mxu0 0.0
  %3910 = vmatpush1.xpose.msra.mxu0 0.0
  %3911 = vmatprep.subr.mxu0 0.0
  %3912 = vmatpush1.xpose.msra.mxu0 0.0
  %3913 = vmatprep.subr.mxu0 0.0
  %3914 = vmatpush1.xpose.msra.mxu0 0.0
  %3915 = vmatprep.subr.mxu0 0.0
  %3916 = vmatpush1.xpose.msra.mxu0 0.0
  %3917 = vmatprep.subr.mxu0 0.0
  %3918 = vmatpush1.xpose.msra.mxu0 0.0
  %3919 = vmatprep.subr.mxu0 0.0
  %3920 = vmatpush1.xpose.msra.mxu0 0.0
  %3921 = vmatprep.subr.mxu0 0.0
  %3922 = vmatpush1.xpose.msra.mxu0 0.0
  %3923 = vmatprep.subr.mxu0 0.0
  %3924 = vmatpush1.xpose.msra.mxu0 0.0
  %3925 = vmatprep.subr.mxu0 0.0
  %3926 = vmatpush1.xpose.msra.mxu0 0.0
  %3927 = vmatprep.subr.mxu0 0.0
  %3928 = vmatpush1.xpose.msra.mxu0 0.0
  %3929 = vmatprep.subr.mxu0 0.0
  %3930 = vmatpush1.xpose.msra.mxu0 0.0
  %3931 = vmatprep.subr.mxu0 0.0
  %3932 = vmatpush1.xpose.msra.mxu0 0.0
  %3933 = vmatprep.subr.mxu0 0.0
  %3934 = vmatpush1.xpose.msra.mxu0 0.0
  %3935 = vmatprep.subr.mxu0 0.0
  %3936 = vmatpush1.xpose.msra.mxu0 0.0
  %3937 = vmatprep.subr.mxu0 0.0
  %3938 = vmatpush1.xpose.msra.mxu0 0.0
  %3939 = vmatprep.subr.mxu0 0.0
  %3940 = vmatpush1.xpose.msra.mxu0 0.0
  %3941 = vmatprep.subr.mxu0 0.0
  %3942 = vmatpush1.xpose.msra.mxu0 0.0
  %3943 = vmatprep.subr.mxu0 0.0
  %3944 = vmatpush1.xpose.msra.mxu0 0.0
  %3945 = vmatprep.mubr.f32.mxu0 0.0
  %3946 = vmatmul.mubr.f32.gmra.mrb[0].mxu0 %v3803
  %v3947 = vpop.f32.mrb[0].mxu0
  %v3948 = vadd.f32 %v3878, %v3947
  %v3949 = vpop.f32.mrb[0].mxu0
  %3950 = vdwg.mxu0
  %v3952 = vsel %vm2162, %v2074, 0
  %v3955 = vsel %vm2162, %v2152, 0
  %v3958 = vsel %vm2162, %v2155, 0
  %3960 = vmatprep.subr.mxu0 %v2151
  %3961 = vmatpush1.xpose.msra.mxu0 %v2150
  %3962 = vmatprep.subr.mxu0 %v2154
  %3963 = vmatpush1.xpose.msra.mxu0 %v2153
  %3964 = vmatprep.subr.mxu0 0.0
  %3965 = vmatpush1.xpose.msra.mxu0 0.0
  %3966 = vmatprep.subr.mxu0 0.0
  %3967 = vmatpush1.xpose.msra.mxu0 0.0
  %3968 = vmatprep.subr.mxu0 0.0
  %3969 = vmatpush1.xpose.msra.mxu0 0.0
  %3970 = vmatprep.subr.mxu0 0.0
  %3971 = vmatpush1.xpose.msra.mxu0 0.0
  %3972 = vmatprep.subr.mxu0 0.0
  %3973 = vmatpush1.xpose.msra.mxu0 0.0
  %3974 = vmatprep.subr.mxu0 0.0
  %3975 = vmatpush1.xpose.msra.mxu0 0.0
  %3976 = vmatprep.subr.mxu0 0.0
  %3977 = vmatpush1.xpose.msra.mxu0 0.0
  %3978 = vmatprep.subr.mxu0 0.0
  %3979 = vmatpush1.xpose.msra.mxu0 0.0
  %3980 = vmatprep.subr.mxu0 0.0
  %3981 = vmatpush1.xpose.msra.mxu0 0.0
  %3982 = vmatprep.subr.mxu0 0.0
  %3983 = vmatpush1.xpose.msra.mxu0 0.0
  %3984 = vmatprep.subr.mxu0 0.0
  %3985 = vmatpush1.xpose.msra.mxu0 0.0
  %3986 = vmatprep.subr.mxu0 0.0
  %3987 = vmatpush1.xpose.msra.mxu0 0.0
  %3988 = vmatprep.subr.mxu0 0.0
  %3989 = vmatpush1.xpose.msra.mxu0 0.0
  %3990 = vmatprep.subr.mxu0 0.0
  %3991 = vmatpush1.xpose.msra.mxu0 0.0
  %3992 = vmatprep.subr.mxu0 0.0
  %3993 = vmatpush1.xpose.msra.mxu0 0.0
  %3994 = vmatprep.subr.mxu0 0.0
  %3995 = vmatpush1.xpose.msra.mxu0 0.0
  %3996 = vmatprep.subr.mxu0 0.0
  %3997 = vmatpush1.xpose.msra.mxu0 0.0
  %3998 = vmatprep.subr.mxu0 0.0
  %3999 = vmatpush1.xpose.msra.mxu0 0.0
  %4000 = vmatprep.subr.mxu0 0.0
  %4001 = vmatpush1.xpose.msra.mxu0 0.0
  %4002 = vmatprep.subr.mxu0 0.0
  %4003 = vmatpush1.xpose.msra.mxu0 0.0
  %4004 = vmatprep.subr.mxu0 0.0
  %4005 = vmatpush1.xpose.msra.mxu0 0.0
  %4006 = vmatprep.subr.mxu0 0.0
  %4007 = vmatpush1.xpose.msra.mxu0 0.0
  %4008 = vmatprep.subr.mxu0 0.0
  %4009 = vmatpush1.xpose.msra.mxu0 0.0
  %4010 = vmatprep.subr.mxu0 0.0
  %4011 = vmatpush1.xpose.msra.mxu0 0.0
  %4012 = vmatprep.subr.mxu0 0.0
  %4013 = vmatpush1.xpose.msra.mxu0 0.0
  %4014 = vmatprep.subr.mxu0 0.0
  %4015 = vmatpush1.xpose.msra.mxu0 0.0
  %4016 = vmatprep.subr.mxu0 0.0
  %4017 = vmatpush1.xpose.msra.mxu0 0.0
  %4018 = vmatprep.subr.mxu0 0.0
  %4019 = vmatpush1.xpose.msra.mxu0 0.0
  %4020 = vmatprep.subr.mxu0 0.0
  %4021 = vmatpush1.xpose.msra.mxu0 0.0
  %4022 = vmatprep.subr.mxu0 0.0
  %4023 = vmatpush1.xpose.msra.mxu0 0.0
  %4024 = vmatprep.mubr.f32.mxu0 %v2073
  %4025 = vmatmul.mubr.f32.gmra.mrb[0].mxu0 %v2072
  %v4026 = vpop.f32.mrb[0].mxu0
  %v4027 = vadd.f32 0.0, %v4026
  %v4028 = vpop.f32.mrb[0].mxu0
  %4029 = vdwg.mxu0
  %4030 = vmatprep.subr.mxu0 0.0
  %4031 = vmatpush1.xpose.msra.mxu0 %v3955
  %4032 = vmatprep.subr.mxu0 0.0
  %4033 = vmatpush1.xpose.msra.mxu0 %v3958
  %4034 = vmatprep.subr.mxu0 0.0
  %4035 = vmatpush1.xpose.msra.mxu0 0.0
  %4036 = vmatprep.subr.mxu0 0.0
  %4037 = vmatpush1.xpose.msra.mxu0 0.0
  %4038 = vmatprep.subr.mxu0 0.0
  %4039 = vmatpush1.xpose.msra.mxu0 0.0
  %4040 = vmatprep.subr.mxu0 0.0
  %4041 = vmatpush1.xpose.msra.mxu0 0.0
  %4042 = vmatprep.subr.mxu0 0.0
  %4043 = vmatpush1.xpose.msra.mxu0 0.0
  %4044 = vmatprep.subr.mxu0 0.0
  %4045 = vmatpush1.xpose.msra.mxu0 0.0
  %4046 = vmatprep.subr.mxu0 0.0
  %4047 = vmatpush1.xpose.msra.mxu0 0.0
  %4048 = vmatprep.subr.mxu0 0.0
  %4049 = vmatpush1.xpose.msra.mxu0 0.0
  %4050 = vmatprep.subr.mxu0 0.0
  %4051 = vmatpush1.xpose.msra.mxu0 0.0
  %4052 = vmatprep.subr.mxu0 0.0
  %4053 = vmatpush1.xpose.msra.mxu0 0.0
  %4054 = vmatprep.subr.mxu0 0.0
  %4055 = vmatpush1.xpose.msra.mxu0 0.0
  %4056 = vmatprep.subr.mxu0 0.0
  %4057 = vmatpush1.xpose.msra.mxu0 0.0
  %4058 = vmatprep.subr.mxu0 0.0
  %4059 = vmatpush1.xpose.msra.mxu0 0.0
  %4060 = vmatprep.subr.mxu0 0.0
  %4061 = vmatpush1.xpose.msra.mxu0 0.0
  %4062 = vmatprep.subr.mxu0 0.0
  %4063 = vmatpush1.xpose.msra.mxu0 0.0
  %4064 = vmatprep.subr.mxu0 0.0
  %4065 = vmatpush1.xpose.msra.mxu0 0.0
  %4066 = vmatprep.subr.mxu0 0.0
  %4067 = vmatpush1.xpose.msra.mxu0 0.0
  %4068 = vmatprep.subr.mxu0 0.0
  %4069 = vmatpush1.xpose.msra.mxu0 0.0
  %4070 = vmatprep.subr.mxu0 0.0
  %4071 = vmatpush1.xpose.msra.mxu0 0.0
  %4072 = vmatprep.subr.mxu0 0.0
  %4073 = vmatpush1.xpose.msra.mxu0 0.0
  %4074 = vmatprep.subr.mxu0 0.0
  %4075 = vmatpush1.xpose.msra.mxu0 0.0
  %4076 = vmatprep.subr.mxu0 0.0
  %4077 = vmatpush1.xpose.msra.mxu0 0.0
  %4078 = vmatprep.subr.mxu0 0.0
  %4079 = vmatpush1.xpose.msra.mxu0 0.0
  %4080 = vmatprep.subr.mxu0 0.0
  %4081 = vmatpush1.xpose.msra.mxu0 0.0
  %4082 = vmatprep.subr.mxu0 0.0
  %4083 = vmatpush1.xpose.msra.mxu0 0.0
  %4084 = vmatprep.subr.mxu0 0.0
  %4085 = vmatpush1.xpose.msra.mxu0 0.0
  %4086 = vmatprep.subr.mxu0 0.0
  %4087 = vmatpush1.xpose.msra.mxu0 0.0
  %4088 = vmatprep.subr.mxu0 0.0
  %4089 = vmatpush1.xpose.msra.mxu0 0.0
  %4090 = vmatprep.subr.mxu0 0.0
  %4091 = vmatpush1.xpose.msra.mxu0 0.0
  %4092 = vmatprep.subr.mxu0 0.0
  %4093 = vmatpush1.xpose.msra.mxu0 0.0
  %4094 = vmatprep.mubr.f32.mxu0 0.0
  %4095 = vmatmul.mubr.f32.gmra.mrb[0].mxu0 %v3952
  %v4096 = vpop.f32.mrb[0].mxu0
  %v4097 = vadd.f32 %v4027, %v4096
  %v4098 = vpop.f32.mrb[0].mxu0
  %4099 = vdwg.mxu0
  %v4101 = vsel %vm2162, %v2077, 0
  %v4104 = vsel %vm2162, %v2158, 0
  %v4107 = vsel %vm2162, %v2161, 0
  %4109 = vmatprep.subr.mxu0 %v2157
  %4110 = vmatpush1.xpose.msra.mxu0 %v2156
  %4111 = vmatprep.subr.mxu0 %v2160
  %4112 = vmatpush1.xpose.msra.mxu0 %v2159
  %4113 = vmatprep.subr.mxu0 0.0
  %4114 = vmatpush1.xpose.msra.mxu0 0.0
  %4115 = vmatprep.subr.mxu0 0.0
  %4116 = vmatpush1.xpose.msra.mxu0 0.0
  %4117 = vmatprep.subr.mxu0 0.0
  %4118 = vmatpush1.xpose.msra.mxu0 0.0
  %4119 = vmatprep.subr.mxu0 0.0
  %4120 = vmatpush1.xpose.msra.mxu0 0.0
  %4121 = vmatprep.subr.mxu0 0.0
  %4122 = vmatpush1.xpose.msra.mxu0 0.0
  %4123 = vmatprep.subr.mxu0 0.0
  %4124 = vmatpush1.xpose.msra.mxu0 0.0
  %4125 = vmatprep.subr.mxu0 0.0
  %4126 = vmatpush1.xpose.msra.mxu0 0.0
  %4127 = vmatprep.subr.mxu0 0.0
  %4128 = vmatpush1.xpose.msra.mxu0 0.0
  %4129 = vmatprep.subr.mxu0 0.0
  %4130 = vmatpush1.xpose.msra.mxu0 0.0
  %4131 = vmatprep.subr.mxu0 0.0
  %4132 = vmatpush1.xpose.msra.mxu0 0.0
  %4133 = vmatprep.subr.mxu0 0.0
  %4134 = vmatpush1.xpose.msra.mxu0 0.0
  %4135 = vmatprep.subr.mxu0 0.0
  %4136 = vmatpush1.xpose.msra.mxu0 0.0
  %4137 = vmatprep.subr.mxu0 0.0
  %4138 = vmatpush1.xpose.msra.mxu0 0.0
  %4139 = vmatprep.subr.mxu0 0.0
  %4140 = vmatpush1.xpose.msra.mxu0 0.0
  %4141 = vmatprep.subr.mxu0 0.0
  %4142 = vmatpush1.xpose.msra.mxu0 0.0
  %4143 = vmatprep.subr.mxu0 0.0
  %4144 = vmatpush1.xpose.msra.mxu0 0.0
  %4145 = vmatprep.subr.mxu0 0.0
  %4146 = vmatpush1.xpose.msra.mxu0 0.0
  %4147 = vmatprep.subr.mxu0 0.0
  %4148 = vmatpush1.xpose.msra.mxu0 0.0
  %4149 = vmatprep.subr.mxu0 0.0
  %4150 = vmatpush1.xpose.msra.mxu0 0.0
  %4151 = vmatprep.subr.mxu0 0.0
  %4152 = vmatpush1.xpose.msra.mxu0 0.0
  %4153 = vmatprep.subr.mxu0 0.0
  %4154 = vmatpush1.xpose.msra.mxu0 0.0
  %4155 = vmatprep.subr.mxu0 0.0
  %4156 = vmatpush1.xpose.msra.mxu0 0.0
  %4157 = vmatprep.subr.mxu0 0.0
  %4158 = vmatpush1.xpose.msra.mxu0 0.0
  %4159 = vmatprep.subr.mxu0 0.0
  %4160 = vmatpush1.xpose.msra.mxu0 0.0
  %4161 = vmatprep.subr.mxu0 0.0
  %4162 = vmatpush1.xpose.msra.mxu0 0.0
  %4163 = vmatprep.subr.mxu0 0.0
  %4164 = vmatpush1.xpose.msra.mxu0 0.0
  %4165 = vmatprep.subr.mxu0 0.0
  %4166 = vmatpush1.xpose.msra.mxu0 0.0
  %4167 = vmatprep.subr.mxu0 0.0
  %4168 = vmatpush1.xpose.msra.mxu0 0.0
  %4169 = vmatprep.subr.mxu0 0.0
  %4170 = vmatpush1.xpose.msra.mxu0 0.0
  %4171 = vmatprep.subr.mxu0 0.0
  %4172 = vmatpush1.xpose.msra.mxu0 0.0
  %4173 = vmatprep.mubr.f32.mxu0 %v2076
  %4174 = vmatmul.mubr.f32.gmra.mrb[0].mxu0 %v2075
  %v4175 = vpop.f32.mrb[0].mxu0
  %v4176 = vadd.f32 0.0, %v4175
  %v4177 = vpop.f32.mrb[0].mxu0
  %4178 = vdwg.mxu0
  %4179 = vmatprep.subr.mxu0 0.0
  %4180 = vmatpush1.xpose.msra.mxu0 %v4104
  %4181 = vmatprep.subr.mxu0 0.0
  %4182 = vmatpush1.xpose.msra.mxu0 %v4107
  %4183 = vmatprep.subr.mxu0 0.0
  %4184 = vmatpush1.xpose.msra.mxu0 0.0
  %4185 = vmatprep.subr.mxu0 0.0
  %4186 = vmatpush1.xpose.msra.mxu0 0.0
  %4187 = vmatprep.subr.mxu0 0.0
  %4188 = vmatpush1.xpose.msra.mxu0 0.0
  %4189 = vmatprep.subr.mxu0 0.0
  %4190 = vmatpush1.xpose.msra.mxu0 0.0
  %4191 = vmatprep.subr.mxu0 0.0
  %4192 = vmatpush1.xpose.msra.mxu0 0.0
  %4193 = vmatprep.subr.mxu0 0.0
  %4194 = vmatpush1.xpose.msra.mxu0 0.0
  %4195 = vmatprep.subr.mxu0 0.0
  %4196 = vmatpush1.xpose.msra.mxu0 0.0
  %4197 = vmatprep.subr.mxu0 0.0
  %4198 = vmatpush1.xpose.msra.mxu0 0.0
  %4199 = vmatprep.subr.mxu0 0.0
  %4200 = vmatpush1.xpose.msra.mxu0 0.0
  %4201 = vmatprep.subr.mxu0 0.0
  %4202 = vmatpush1.xpose.msra.mxu0 0.0
  %4203 = vmatprep.subr.mxu0 0.0
  %4204 = vmatpush1.xpose.msra.mxu0 0.0
  %4205 = vmatprep.subr.mxu0 0.0
  %4206 = vmatpush1.xpose.msra.mxu0 0.0
  %4207 = vmatprep.subr.mxu0 0.0
  %4208 = vmatpush1.xpose.msra.mxu0 0.0
  %4209 = vmatprep.subr.mxu0 0.0
  %4210 = vmatpush1.xpose.msra.mxu0 0.0
  %4211 = vmatprep.subr.mxu0 0.0
  %4212 = vmatpush1.xpose.msra.mxu0 0.0
  %4213 = vmatprep.subr.mxu0 0.0
  %4214 = vmatpush1.xpose.msra.mxu0 0.0
  %4215 = vmatprep.subr.mxu0 0.0
  %4216 = vmatpush1.xpose.msra.mxu0 0.0
  %4217 = vmatprep.subr.mxu0 0.0
  %4218 = vmatpush1.xpose.msra.mxu0 0.0
  %4219 = vmatprep.subr.mxu0 0.0
  %4220 = vmatpush1.xpose.msra.mxu0 0.0
  %4221 = vmatprep.subr.mxu0 0.0
  %4222 = vmatpush1.xpose.msra.mxu0 0.0
  %4223 = vmatprep.subr.mxu0 0.0
  %4224 = vmatpush1.xpose.msra.mxu0 0.0
  %4225 = vmatprep.subr.mxu0 0.0
  %4226 = vmatpush1.xpose.msra.mxu0 0.0
  %4227 = vmatprep.subr.mxu0 0.0
  %4228 = vmatpush1.xpose.msra.mxu0 0.0
  %4229 = vmatprep.subr.mxu0 0.0
  %4230 = vmatpush1.xpose.msra.mxu0 0.0
  %4231 = vmatprep.subr.mxu0 0.0
  %4232 = vmatpush1.xpose.msra.mxu0 0.0
  %4233 = vmatprep.subr.mxu0 0.0
  %4234 = vmatpush1.xpose.msra.mxu0 0.0
  %4235 = vmatprep.subr.mxu0 0.0
  %4236 = vmatpush1.xpose.msra.mxu0 0.0
  %4237 = vmatprep.subr.mxu0 0.0
  %4238 = vmatpush1.xpose.msra.mxu0 0.0
  %4239 = vmatprep.subr.mxu0 0.0
  %4240 = vmatpush1.xpose.msra.mxu0 0.0
  %4241 = vmatprep.subr.mxu0 0.0
  %4242 = vmatpush1.xpose.msra.mxu0 0.0
  %4243 = vmatprep.mubr.f32.mxu0 0.0
  %4244 = vmatmul.mubr.f32.gmra.mrb[0].mxu0 %v4101
  %v4245 = vpop.f32.mrb[0].mxu0
  %v4246 = vadd.f32 %v4176, %v4245
  %v4247 = vpop.f32.mrb[0].mxu0
  %4248 = vdwg.mxu0
  %vm4249 = vcmask 130048
  %v4250 = vsel %vm4249, %v2309, 0.0
  %v4251 = vsel %vm4249, %v2458, 0.0
  %v4252 = vadd.f32 %v4250, %v4251
  %v4253 = vsel %vm4249, %v2607, 0.0
  %v4254 = vadd.f32 %v4252, %v4253
  %v4255 = vsel %vm4249, %v2756, 0.0
  %v4256 = vadd.f32 %v4254, %v4255
  %v4257 = vsel %vm4249, %v2905, 0.0
  %v4258 = vadd.f32 %v4256, %v4257
  %v4259 = vsel %vm4249, %v3054, 0.0
  %v4260 = vadd.f32 %v4258, %v4259
  %v4261 = vsel %vm4249, %v3203, 0.0
  %v4262 = vadd.f32 %v4260, %v4261
  %v4263 = vsel %vm4249, %v3352, 0.0
  %v4264 = vadd.f32 %v4262, %v4263
  %v4265 = vsel %vm4249, %v3501, 0.0
  %v4266 = vadd.f32 %v4264, %v4265
  %v4267 = vsel %vm4249, %v3650, 0.0
  %v4268 = vadd.f32 %v4266, %v4267
  %v4269 = vsel %vm4249, %v3799, 0.0
  %v4270 = vadd.f32 %v4268, %v4269
  %v4271 = vsel %vm4249, %v3948, 0.0
  %v4272 = vadd.f32 %v4270, %v4271
  %v4273 = vsel %vm4249, %v4097, 0.0
  %v4274 = vadd.f32 %v4272, %v4273
  %v4275 = vsel %vm4249, %v4246, 0.0
  %v4276 = vadd.f32 %v4274, %v4275
  %v4277 = vld [vmem:[%s4] sm:$0x1]
  %v4279 = vlaneseq
  %v4280 = vshrl.u32 %v4279, 7
  %v4281 = vsub.s32 0, %v4280
  %v4282 = vrot.slane %v4277, %v4281
  %v4284 = vadd.f32 %v4276, %v4282
  %vm4285 = vcmask 80896
  %v4286 = vsel %vm4285, %v4284, -inf
  %4287 = vmax.xlane.f32.xlu0 %v4286
  %v4288 = vpop.xlane.xlu0 %4287
  %v4289 = vsub.f32 %v4284, %v4288
  %v4290 = vmul.f32 %v4289, 1.442695
  %v4291 = vpow.pop %v4290
  %v4292 = vsel %vm4285, %v4291, 0.0
  %4293 = vadd.xlane.f32.xlu0 %v4292
  %v4294 = vpop.xlane.xlu0 %4293
  %v4295 = vlog2.pop %v4294
  %v4296 = vmul.f32 %v4295, 0.6931472
  %v4297 = vsub.f32 %v4289, %v4296
  %4298 = vst.msk [vmem:[%s5] sm:$0xff] %vm4285, %v4297
  // Predicated region
  $region22: #{one_conv_downsample.1} parent=0 // pred_check
    _
  $region23: #{one_conv_downsample.1} parent=0 // pred_check_branch
    %4300 = sbr.rel (0) target = $region25
  $region24: #{one_conv_downsample.1} parent=0 // pred_region
    _
  $region25: #{one_conv_downsample.1} parent=0 // pred_fallthru
    _
  // Predicated region
  $region26: #{one_conv_downsample.1} parent=0 // pred_check
    _
  $region27: #{one_conv_downsample.1} parent=0 // pred_check_branch
    %4302 = sbr.rel (0) target = $region29
  $region28: #{one_conv_downsample.1} parent=0 // pred_region
    _
  $region29: #{one_conv_downsample.1} parent=0 // pred_fallthru
    _

</llo_original>
